<compile_context>
chip_gen: v6e
topology: v6e:2x2x1
jax: 0.10.0
libtpu: 0.0.40
codegen_flags: <defaults>
</compile_context>

<pallas_src>
import jax
import jax.numpy as jnp
from jax.experimental import pallas as pl
from jax.experimental.pallas import tpu as pltpu

# Problem constants (PyTorch module defaults with a 16x16 RGB input).
N = 2                       # batch
H = W = 16                  # input spatial size
CIN = 3                     # in_channel
HID = 32                    # hidden_channel
OUT = 2                     # out_channel
BN_EPS = 1e-5
POOL = 5                    # pooled spatial extent ((16 - 2 - 2 - 2) // 2)
FLAT = HID * POOL * POOL    # 800 Linear input features

# Lane-dense activation layout:
#   row  r = n*(H*WB) + h*WB + (w // GRP)
#   lane l = (w % GRP)*C + c          (C = CIN for the input, HID afterwards)
GRP = 4                     # w-positions folded onto the lane axis
WB = W // GRP               # 4 row-blocks per image row
LANES = GRP * HID           # 128 lanes -> full vreg occupancy
ROW_IMG = H * WB            # 64 rows per image
ROWS = N * ROW_IMG          # 128 rows computed per layer
TAIL = 16                   # zero tail: shifted reads stay in-bounds & finite
ROWS_PAD = ROWS + TAIL      # 144
LIN_ROWS = 40               # pooled rows read per image by the Linear
WM_LANES = LANES - HID      # 96: lanes carrying w-pair maxima

# Static guards for the "garbage rows never reach a valid output" argument
# (review correctness note: tie the padding proof to the constants).
assert GRP * HID == 128 and W % GRP == 0
assert TAIL >= 2 * WB + 1                                   # max conv row shift
assert LIN_ROWS > 2 * WB * (POOL - 1) + (2 * (POOL - 1)) // GRP
assert ROW_IMG * (N - 1) + LIN_ROWS <= ROWS
assert 2 * POOL <= H - 6                                    # pool inside conv3 valid region


# ------------------------------ fused kernel -------------------------------

def _fused_forward_kernel(x_ref, w1_ref, s1_ref, w2_ref, s2_ref, w3_ref, s3_ref,
                          gl_ref, bl_ref, o_ref, act_in, act_a, act_b):
    # Stage the input into the padded bf16 scratch; zero ONLY the tail rows
    # (rows 0..ROWS-1 of act_a / act_b are fully overwritten by every layer).
    act_in[pl.ds(0, ROWS), :] = x_ref[...].astype(jnp.bfloat16)
    act_in[pl.ds(ROWS, TAIL), :] = jnp.zeros((TAIL, GRP * CIN), jnp.bfloat16)
    act_a[pl.ds(ROWS, TAIL), :] = jnp.zeros((TAIL, LANES), jnp.bfloat16)
    act_b[pl.ds(ROWS, TAIL), :] = jnp.zeros((TAIL, LANES), jnp.bfloat16)

    def conv_bn_relu(in_ref, w_ref, s_ref, out_ref):
        # 3x3 valid conv = 6 row-shifted GEMMs against block-diagonal folded
        # weights (dx lives in the 128-wide weight, dy + w-group carry in the
        # row shift).  bf16 operands, f32 accumulation, tree-summed partials.
        def tap(i):
            dy, carry = divmod(i, 2)
            a = in_ref[pl.ds(dy * WB + carry, ROWS), :]
            return jnp.dot(a, w_ref[i], preferred_element_type=jnp.float32)

        acc = (tap(0) + tap(1)) + ((tap(2) + tap(3)) + (tap(4) + tap(5)))
        # Folded conv-bias + BatchNorm shift, ReLU, single cast to bf16.
        out_ref[pl.ds(0, ROWS), :] = jnp.maximum(
            acc + s_ref[...], 0.0).astype(jnp.bfloat16)

    conv_bn_relu(act_in, w1_ref, s1_ref, act_a)   # conv1 + BN + ReLU
    conv_bn_relu(act_a, w2_ref, s2_ref, act_b)    # conv2 + BN + ReLU
    conv_bn_relu(act_b, w3_ref, s3_ref, act_a)    # conv3 + BN + ReLU

    # MaxPool2d(2, 2): h-pairs are WB rows apart, w-pairs are HID lanes apart.
    # The ReLU after the pool is a no-op (inputs are already non-negative).
    hm = jnp.maximum(act_a[pl.ds(0, ROWS), :], act_a[pl.ds(WB, ROWS), :])
    wm = jnp.maximum(hm[:, :WM_LANES], hm[:, HID:]).astype(jnp.float32)

    # Linear + sigmoid.  gl holds the Linear weight pre-scattered onto the
    # pooled activations' (row, lane) positions, so each logit is one masked
    # multiply-reduce; the per-image results stay as tiny (1, 2) vectors.
    g0 = gl_ref[0]
    g1 = gl_ref[1]

    def img_logits(n):
        p = wm[n * ROW_IMG:n * ROW_IMG + LIN_ROWS, :]

        def red(g):
            t = jnp.sum(p * g, axis=1, keepdims=True)        # (LIN_ROWS, 1)
            return jnp.sum(t, axis=0, keepdims=True)         # (1, 1)

        return jnp.concatenate([red(g0), red(g1)], axis=1)   # (1, OUT)

    logits = jnp.concatenate([img_logits(0), img_logits(1)], axis=0) + bl_ref[...]
    o_ref[...] = 1.0 / (1.0 + jnp.exp(-logits))               # exact sigmoid


_VMEM = pl.BlockSpec(memory_space=pltpu.MemorySpace.VMEM)


def cancer_model_forward(x_nchw, kp):
    # Boundary glue kept to two tiny XLA ops (NCHW -> NHWC -> flat rows); row
    # padding and the f32->bf16 staging are done inside the kernel.
    # TODO(synk): the NCHW->NHWC transpose itself has no cheap in-kernel
    # equivalent (it would need an XLU relayout of a 16-lane array).
    x_rows = jnp.transpose(x_nchw, (0, 2, 3, 1)).reshape(ROWS, GRP * CIN)
    return pl.pallas_call(
        _fused_forward_kernel,
        out_shape=jax.ShapeDtypeStruct((N, OUT), jnp.float32),
        in_specs=[_VMEM] * 9,
        out_specs=_VMEM,
        scratch_shapes=[pltpu.VMEM((ROWS_PAD, GRP * CIN), jnp.bfloat16),
                        pltpu.VMEM((ROWS_PAD, LANES), jnp.bfloat16),
                        pltpu.VMEM((ROWS_PAD, LANES), jnp.bfloat16)],
        # NOTE: a grid=(N,) batch split (dimension_semantics=("parallel",))
        # could use both v7x TensorCores, but this kernel is dominated by
        # launch + weight-DMA latency, so it is left single-step.
    )(x_rows, kp["w1"], kp["s1"], kp["w2"], kp["s2"], kp["w3"], kp["s3"],
      kp["gl"], kp["bl"])


# ------------------------------ parameters ---------------------------------

def init_params(key):
    ks = jax.random.split(key, 12)
    p = {}
    p["w1"] = 0.1 * jax.random.normal(ks[0], (HID, CIN, 3, 3), jnp.float32)
    p["b1"] = 0.1 * jax.random.normal(ks[1], (HID,), jnp.float32)
    p["w2"] = 0.05 * jax.random.normal(ks[2], (HID, HID, 3, 3), jnp.float32)
    p["b2"] = 0.1 * jax.random.normal(ks[3], (HID,), jnp.float32)
    p["w3"] = 0.05 * jax.random.normal(ks[4], (HID, HID, 3, 3), jnp.float32)
    p["b3"] = 0.1 * jax.random.normal(ks[5], (HID,), jnp.float32)
    # TODO(synk): BatchNorm2d is reproduced in inference mode (running stats
    # folded into scale/shift); training-mode batch statistics are not computed.
    gamma = 1.0 + 0.1 * jax.random.normal(ks[6], (HID,), jnp.float32)
    beta = 0.1 * jax.random.normal(ks[7], (HID,), jnp.float32)
    running_mean = 0.1 * jax.random.normal(ks[8], (HID,), jnp.float32)
    running_var = 1.0 + 0.5 * jnp.abs(jax.random.normal(ks[9], (HID,), jnp.float32))
    p["bn_scale"] = gamma / jnp.sqrt(running_var + BN_EPS)
    p["bn_shift"] = beta - running_mean * p["bn_scale"]
    # TODO(synk): the PyTorch forward builds a *fresh random* nn.Linear every
    # call; here it is initialized deterministically once.
    p["wl"] = 0.05 * jax.random.normal(ks[10], (OUT, FLAT), jnp.float32)
    p["bl"] = 0.1 * jax.random.normal(ks[11], (OUT,), jnp.float32)
    return p


def fold_params(p):
    """Pre-fold conv bias + inference BatchNorm into the weights, expand each
    conv into 6 block-diagonal (GRP*Cin, 128) bf16 GEMM weights (dx folded into
    the lane axis, dy / w-group carry into a row shift), and scatter the Linear
    weight onto the pooled activations' (row, lane) positions."""
    scale, shift = p["bn_scale"], p["bn_shift"]

    def fold_conv(w, b):
        cin = w.shape[1]
        wf = w * scale[:, None, None, None]                  # BN scale into W
        mats = []
        for dy in range(3):
            a = jnp.zeros((GRP * cin, LANES), jnp.float32)   # same-row blocks
            bm = jnp.zeros((GRP * cin, LANES), jnp.float32)  # carry-row blocks
            for g in range(GRP):                             # output w-group
                for dx in range(3):
                    g2 = g + dx                              # input w-group
                    blk = jnp.transpose(wf[:, :, dy, dx])    # (cin, cout)
                    if g2 < GRP:
                        a = a.at[g2 * cin:(g2 + 1) * cin,
                                 g * HID:(g + 1) * HID].set(blk)
                    else:
                        bm = bm.at[(g2 - GRP) * cin:(g2 - GRP + 1) * cin,
                                   g * HID:(g + 1) * HID].set(blk)
            mats += [a, bm]
        wstack = jnp.stack(mats).astype(jnp.bfloat16)        # (6, GRP*cin, 128)
        s = jnp.tile(b * scale + shift, GRP).reshape(1, LANES).astype(jnp.float32)
        return wstack, s

    kp = {}
    kp["w1"], kp["s1"] = fold_conv(p["w1"], p["b1"])
    kp["w2"], kp["s2"] = fold_conv(p["w2"], p["b2"])
    kp["w3"], kp["s3"] = fold_conv(p["w3"], p["b3"])

    # Linear: PyTorch flattens NCHW (flat = c*25 + ph*5 + pw).  Pooled value
    # (n, ph, pw, c) lives at row 2*WB*ph + (2*pw)//GRP (within the image) and
    # lane ((2*pw) % GRP)*HID + c of the in-kernel pooled array.
    wl = p["wl"].reshape(OUT, HID, POOL, POOL)               # (o, c, ph, pw)
    gl = jnp.zeros((OUT, LIN_ROWS, WM_LANES), jnp.float32)
    for ph in range(POOL):
        for pw in range(POOL):
            row = 2 * WB * ph + (2 * pw) // GRP
            g = (2 * pw) % GRP
            gl = gl.at[:, row, g * HID:(g + 1) * HID].set(wl[:, :, ph, pw])
    kp["gl"] = gl
    kp["bl"] = p["bl"].reshape(1, OUT).astype(jnp.float32)
    return kp


if __name__ == "__main__":
    key = jax.random.PRNGKey(0)
    kx, kparam = jax.random.split(key)
    # Input matches the PyTorch module's NCHW convention: (N=2, C=3, H=16, W=16)
    x = jax.random.normal(kx, (N, CIN, H, W), jnp.float32)
    params = init_params(kparam)
    kparams = fold_params(params)

    fwd = jax.jit(cancer_model_forward)
    out = jax.block_until_ready(fwd(x, kparams))

    assert out.shape == (N, OUT)
    assert bool(jnp.all(jnp.isfinite(out)))
    assert bool(jnp.all((out >= 0.0) & (out <= 1.0)))
    print("KERNEL_OK")
</pallas_src>

<mosaic_0001>
module attributes {stable_mosaic.version = 11 : i64} {
  func.func @_fused_forward_kernel(%arg0: memref<128x12xf32, #tpu.memory_space<vmem>>, %arg1: memref<6x12x128xbf16, #tpu.memory_space<vmem>>, %arg2: memref<1x128xf32, #tpu.memory_space<vmem>>, %arg3: memref<6x128x128xbf16, #tpu.memory_space<vmem>>, %arg4: memref<1x128xf32, #tpu.memory_space<vmem>>, %arg5: memref<6x128x128xbf16, #tpu.memory_space<vmem>>, %arg6: memref<1x128xf32, #tpu.memory_space<vmem>>, %arg7: memref<2x40x96xf32, #tpu.memory_space<vmem>>, %arg8: memref<1x2xf32, #tpu.memory_space<vmem>>, %arg9: memref<2x2xf32, #tpu.memory_space<vmem>>, %arg10: memref<144x12xbf16, #tpu.memory_space<vmem>>, %arg11: memref<144x128xbf16, #tpu.memory_space<vmem>>, %arg12: memref<144x128xbf16, #tpu.memory_space<vmem>>) attributes {dimension_semantics = [], scalar_prefetch = 0 : i64, scratch_operands = 3 : i64, tpu.core_type = #tpu.core_type<tc>} {
    %c0 = arith.constant 0 : index
    %c0_0 = arith.constant 0 : index
    %0 = vector.load %arg0[%c0, %c0_0] : memref<128x12xf32, #tpu.memory_space<vmem>>, vector<128x12xf32>
    %1 = arith.truncf %0 : vector<128x12xf32> to vector<128x12xbf16>
    %c0_1 = arith.constant 0 : index
    %c0_2 = arith.constant 0 : index
    %2 = vector.load %arg10[%c0_1, %c0_2] : memref<144x12xbf16, #tpu.memory_space<vmem>>, vector<128x12xbf16>
    tpu.vector_store %arg10[%c0_1, %c0_2], %1 {strides = array<i32>} : memref<144x12xbf16, #tpu.memory_space<vmem>>, vector<128x12xbf16>,
    %cst = arith.constant 0.000000e+00 : bf16
    %3 = vector.broadcast %cst : bf16 to vector<16x12xbf16>
    %c128 = arith.constant 128 : index
    %c0_3 = arith.constant 0 : index
    %4 = vector.load %arg10[%c128, %c0_3] : memref<144x12xbf16, #tpu.memory_space<vmem>>, vector<16x12xbf16>
    tpu.vector_store %arg10[%c128, %c0_3], %3 {strides = array<i32>} : memref<144x12xbf16, #tpu.memory_space<vmem>>, vector<16x12xbf16>,
    %cst_4 = arith.constant 0.000000e+00 : bf16
    %5 = vector.broadcast %cst_4 : bf16 to vector<16x128xbf16>
    %c128_5 = arith.constant 128 : index
    %c0_6 = arith.constant 0 : index
    %6 = vector.load %arg11[%c128_5, %c0_6] : memref<144x128xbf16, #tpu.memory_space<vmem>>, vector<16x128xbf16>
    tpu.vector_store %arg11[%c128_5, %c0_6], %5 {strides = array<i32>} : memref<144x128xbf16, #tpu.memory_space<vmem>>, vector<16x128xbf16>,
    %cst_7 = arith.constant 0.000000e+00 : bf16
    %7 = vector.broadcast %cst_7 : bf16 to vector<16x128xbf16>
    %c128_8 = arith.constant 128 : index
    %c0_9 = arith.constant 0 : index
    %8 = vector.load %arg12[%c128_8, %c0_9] : memref<144x128xbf16, #tpu.memory_space<vmem>>, vector<16x128xbf16>
    tpu.vector_store %arg12[%c128_8, %c0_9], %7 {strides = array<i32>} : memref<144x128xbf16, #tpu.memory_space<vmem>>, vector<16x128xbf16>,
    %c0_10 = arith.constant 0 : index
    %c0_11 = arith.constant 0 : index
    %9 = vector.load %arg10[%c0_10, %c0_11] : memref<144x12xbf16, #tpu.memory_space<vmem>>, vector<128x12xbf16>
    %c0_12 = arith.constant 0 : index
    %c0_13 = arith.constant 0 : index
    %c0_14 = arith.constant 0 : index
    %10 = vector.load %arg1[%c0_12, %c0_13, %c0_14] : memref<6x12x128xbf16, #tpu.memory_space<vmem>>, vector<1x12x128xbf16>
    %11 = vector.shape_cast %10 : vector<1x12x128xbf16> to vector<12x128xbf16>
    %cst_15 = arith.constant dense<0.000000e+00> : vector<128x128xf32>
    %12 = tpu.matmul %9, %11, %cst_15 {dimension_numbers = #tpu.dot_dimension_numbers<[1], [0], [0], [1], [0, 0, 1, 1], [], []>} : vector<128x12xbf16>, vector<12x128xbf16>, vector<128x128xf32> -> vector<128x128xf32>
    %c1 = arith.constant 1 : index
    %c0_16 = arith.constant 0 : index
    %13 = vector.load %arg10[%c1, %c0_16] : memref<144x12xbf16, #tpu.memory_space<vmem>>, vector<128x12xbf16>
    %c1_17 = arith.constant 1 : index
    %c0_18 = arith.constant 0 : index
    %c0_19 = arith.constant 0 : index
    %14 = vector.load %arg1[%c1_17, %c0_18, %c0_19] : memref<6x12x128xbf16, #tpu.memory_space<vmem>>, vector<1x12x128xbf16>
    %15 = vector.shape_cast %14 : vector<1x12x128xbf16> to vector<12x128xbf16>
    %cst_20 = arith.constant dense<0.000000e+00> : vector<128x128xf32>
    %16 = tpu.matmul %13, %15, %cst_20 {dimension_numbers = #tpu.dot_dimension_numbers<[1], [0], [0], [1], [0, 0, 1, 1], [], []>} : vector<128x12xbf16>, vector<12x128xbf16>, vector<128x128xf32> -> vector<128x128xf32>
    %17 = arith.addf %12, %16 : vector<128x128xf32>
    %c4 = arith.constant 4 : index
    %c0_21 = arith.constant 0 : index
    %18 = vector.load %arg10[%c4, %c0_21] : memref<144x12xbf16, #tpu.memory_space<vmem>>, vector<128x12xbf16>
    %c2 = arith.constant 2 : index
    %c0_22 = arith.constant 0 : index
    %c0_23 = arith.constant 0 : index
    %19 = vector.load %arg1[%c2, %c0_22, %c0_23] : memref<6x12x128xbf16, #tpu.memory_space<vmem>>, vector<1x12x128xbf16>
    %20 = vector.shape_cast %19 : vector<1x12x128xbf16> to vector<12x128xbf16>
    %cst_24 = arith.constant dense<0.000000e+00> : vector<128x128xf32>
    %21 = tpu.matmul %18, %20, %cst_24 {dimension_numbers = #tpu.dot_dimension_numbers<[1], [0], [0], [1], [0, 0, 1, 1], [], []>} : vector<128x12xbf16>, vector<12x128xbf16>, vector<128x128xf32> -> vector<128x128xf32>
    %c5 = arith.constant 5 : index
    %c0_25 = arith.constant 0 : index
    %22 = vector.load %arg10[%c5, %c0_25] : memref<144x12xbf16, #tpu.memory_space<vmem>>, vector<128x12xbf16>
    %c3 = arith.constant 3 : index
    %c0_26 = arith.constant 0 : index
    %c0_27 = arith.constant 0 : index
    %23 = vector.load %arg1[%c3, %c0_26, %c0_27] : memref<6x12x128xbf16, #tpu.memory_space<vmem>>, vector<1x12x128xbf16>
    %24 = vector.shape_cast %23 : vector<1x12x128xbf16> to vector<12x128xbf16>
    %cst_28 = arith.constant dense<0.000000e+00> : vector<128x128xf32>
    %25 = tpu.matmul %22, %24, %cst_28 {dimension_numbers = #tpu.dot_dimension_numbers<[1], [0], [0], [1], [0, 0, 1, 1], [], []>} : vector<128x12xbf16>, vector<12x128xbf16>, vector<128x128xf32> -> vector<128x128xf32>
    %26 = arith.addf %21, %25 : vector<128x128xf32>
    %c8 = arith.constant 8 : index
    %c0_29 = arith.constant 0 : index
    %27 = vector.load %arg10[%c8, %c0_29] : memref<144x12xbf16, #tpu.memory_space<vmem>>, vector<128x12xbf16>
    %c4_30 = arith.constant 4 : index
    %c0_31 = arith.constant 0 : index
    %c0_32 = arith.constant 0 : index
    %28 = vector.load %arg1[%c4_30, %c0_31, %c0_32] : memref<6x12x128xbf16, #tpu.memory_space<vmem>>, vector<1x12x128xbf16>
    %29 = vector.shape_cast %28 : vector<1x12x128xbf16> to vector<12x128xbf16>
    %cst_33 = arith.constant dense<0.000000e+00> : vector<128x128xf32>
    %30 = tpu.matmul %27, %29, %cst_33 {dimension_numbers = #tpu.dot_dimension_numbers<[1], [0], [0], [1], [0, 0, 1, 1], [], []>} : vector<128x12xbf16>, vector<12x128xbf16>, vector<128x128xf32> -> vector<128x128xf32>
    %c9 = arith.constant 9 : index
    %c0_34 = arith.constant 0 : index
    %31 = vector.load %arg10[%c9, %c0_34] : memref<144x12xbf16, #tpu.memory_space<vmem>>, vector<128x12xbf16>
    %c5_35 = arith.constant 5 : index
    %c0_36 = arith.constant 0 : index
    %c0_37 = arith.constant 0 : index
    %32 = vector.load %arg1[%c5_35, %c0_36, %c0_37] : memref<6x12x128xbf16, #tpu.memory_space<vmem>>, vector<1x12x128xbf16>
    %33 = vector.shape_cast %32 : vector<1x12x128xbf16> to vector<12x128xbf16>
    %cst_38 = arith.constant dense<0.000000e+00> : vector<128x128xf32>
    %34 = tpu.matmul %31, %33, %cst_38 {dimension_numbers = #tpu.dot_dimension_numbers<[1], [0], [0], [1], [0, 0, 1, 1], [], []>} : vector<128x12xbf16>, vector<12x128xbf16>, vector<128x128xf32> -> vector<128x128xf32>
    %35 = arith.addf %30, %34 : vector<128x128xf32>
    %36 = arith.addf %26, %35 : vector<128x128xf32>
    %37 = arith.addf %17, %36 : vector<128x128xf32>
    %c0_39 = arith.constant 0 : index
    %c0_40 = arith.constant 0 : index
    %38 = vector.load %arg2[%c0_39, %c0_40] : memref<1x128xf32, #tpu.memory_space<vmem>>, vector<1x128xf32>
    %39 = vector.broadcast %38 : vector<1x128xf32> to vector<128x128xf32>
    %40 = arith.addf %37, %39 : vector<128x128xf32>
    %cst_41 = arith.constant 0.000000e+00 : f32
    %41 = vector.broadcast %cst_41 : f32 to vector<128x128xf32>
    %42 = arith.maximumf %40, %41 : vector<128x128xf32>
    %43 = arith.truncf %42 : vector<128x128xf32> to vector<128x128xbf16>
    %c0_42 = arith.constant 0 : index
    %c0_43 = arith.constant 0 : index
    %44 = vector.load %arg11[%c0_42, %c0_43] : memref<144x128xbf16, #tpu.memory_space<vmem>>, vector<128x128xbf16>
    tpu.vector_store %arg11[%c0_42, %c0_43], %43 {strides = array<i32>} : memref<144x128xbf16, #tpu.memory_space<vmem>>, vector<128x128xbf16>,
    %c0_44 = arith.constant 0 : index
    %c0_45 = arith.constant 0 : index
    %45 = vector.load %arg11[%c0_44, %c0_45] : memref<144x128xbf16, #tpu.memory_space<vmem>>, vector<128x128xbf16>
    %c0_46 = arith.constant 0 : index
    %c0_47 = arith.constant 0 : index
    %c0_48 = arith.constant 0 : index
    %46 = vector.load %arg3[%c0_46, %c0_47, %c0_48] : memref<6x128x128xbf16, #tpu.memory_space<vmem>>, vector<1x128x128xbf16>
    %47 = vector.shape_cast %46 : vector<1x128x128xbf16> to vector<128x128xbf16>
    %cst_49 = arith.constant dense<0.000000e+00> : vector<128x128xf32>
    %48 = tpu.matmul %45, %47, %cst_49 {dimension_numbers = #tpu.dot_dimension_numbers<[1], [0], [0], [1], [0, 0, 1, 1], [], []>} : vector<128x128xbf16>, vector<128x128xbf16>, vector<128x128xf32> -> vector<128x128xf32>
    %c1_50 = arith.constant 1 : index
    %c0_51 = arith.constant 0 : index
    %49 = vector.load %arg11[%c1_50, %c0_51] : memref<144x128xbf16, #tpu.memory_space<vmem>>, vector<128x128xbf16>
    %c1_52 = arith.constant 1 : index
    %c0_53 = arith.constant 0 : index
    %c0_54 = arith.constant 0 : index
    %50 = vector.load %arg3[%c1_52, %c0_53, %c0_54] : memref<6x128x128xbf16, #tpu.memory_space<vmem>>, vector<1x128x128xbf16>
    %51 = vector.shape_cast %50 : vector<1x128x128xbf16> to vector<128x128xbf16>
    %cst_55 = arith.constant dense<0.000000e+00> : vector<128x128xf32>
    %52 = tpu.matmul %49, %51, %cst_55 {dimension_numbers = #tpu.dot_dimension_numbers<[1], [0], [0], [1], [0, 0, 1, 1], [], []>} : vector<128x128xbf16>, vector<128x128xbf16>, vector<128x128xf32> -> vector<128x128xf32>
    %53 = arith.addf %48, %52 : vector<128x128xf32>
    %c4_56 = arith.constant 4 : index
    %c0_57 = arith.constant 0 : index
    %54 = vector.load %arg11[%c4_56, %c0_57] : memref<144x128xbf16, #tpu.memory_space<vmem>>, vector<128x128xbf16>
    %c2_58 = arith.constant 2 : index
    %c0_59 = arith.constant 0 : index
    %c0_60 = arith.constant 0 : index
    %55 = vector.load %arg3[%c2_58, %c0_59, %c0_60] : memref<6x128x128xbf16, #tpu.memory_space<vmem>>, vector<1x128x128xbf16>
    %56 = vector.shape_cast %55 : vector<1x128x128xbf16> to vector<128x128xbf16>
    %cst_61 = arith.constant dense<0.000000e+00> : vector<128x128xf32>
    %57 = tpu.matmul %54, %56, %cst_61 {dimension_numbers = #tpu.dot_dimension_numbers<[1], [0], [0], [1], [0, 0, 1, 1], [], []>} : vector<128x128xbf16>, vector<128x128xbf16>, vector<128x128xf32> -> vector<128x128xf32>
    %c5_62 = arith.constant 5 : index
    %c0_63 = arith.constant 0 : index
    %58 = vector.load %arg11[%c5_62, %c0_63] : memref<144x128xbf16, #tpu.memory_space<vmem>>, vector<128x128xbf16>
    %c3_64 = arith.constant 3 : index
    %c0_65 = arith.constant 0 : index
    %c0_66 = arith.constant 0 : index
    %59 = vector.load %arg3[%c3_64, %c0_65, %c0_66] : memref<6x128x128xbf16, #tpu.memory_space<vmem>>, vector<1x128x128xbf16>
    %60 = vector.shape_cast %59 : vector<1x128x128xbf16> to vector<128x128xbf16>
    %cst_67 = arith.constant dense<0.000000e+00> : vector<128x128xf32>
    %61 = tpu.matmul %58, %60, %cst_67 {dimension_numbers = #tpu.dot_dimension_numbers<[1], [0], [0], [1], [0, 0, 1, 1], [], []>} : vector<128x128xbf16>, vector<128x128xbf16>, vector<128x128xf32> -> vector<128x128xf32>
    %62 = arith.addf %57, %61 : vector<128x128xf32>
    %c8_68 = arith.constant 8 : index
    %c0_69 = arith.constant 0 : index
    %63 = vector.load %arg11[%c8_68, %c0_69] : memref<144x128xbf16, #tpu.memory_space<vmem>>, vector<128x128xbf16>
    %c4_70 = arith.constant 4 : index
    %c0_71 = arith.constant 0 : index
    %c0_72 = arith.constant 0 : index
    %64 = vector.load %arg3[%c4_70, %c0_71, %c0_72] : memref<6x128x128xbf16, #tpu.memory_space<vmem>>, vector<1x128x128xbf16>
    %65 = vector.shape_cast %64 : vector<1x128x128xbf16> to vector<128x128xbf16>
    %cst_73 = arith.constant dense<0.000000e+00> : vector<128x128xf32>
    %66 = tpu.matmul %63, %65, %cst_73 {dimension_numbers = #tpu.dot_dimension_numbers<[1], [0], [0], [1], [0, 0, 1, 1], [], []>} : vector<128x128xbf16>, vector<128x128xbf16>, vector<128x128xf32> -> vector<128x128xf32>
    %c9_74 = arith.constant 9 : index
    %c0_75 = arith.constant 0 : index
    %67 = vector.load %arg11[%c9_74, %c0_75] : memref<144x128xbf16, #tpu.memory_space<vmem>>, vector<128x128xbf16>
    %c5_76 = arith.constant 5 : index
    %c0_77 = arith.constant 0 : index
    %c0_78 = arith.constant 0 : index
    %68 = vector.load %arg3[%c5_76, %c0_77, %c0_78] : memref<6x128x128xbf16, #tpu.memory_space<vmem>>, vector<1x128x128xbf16>
    %69 = vector.shape_cast %68 : vector<1x128x128xbf16> to vector<128x128xbf16>
    %cst_79 = arith.constant dense<0.000000e+00> : vector<128x128xf32>
    %70 = tpu.matmul %67, %69, %cst_79 {dimension_numbers = #tpu.dot_dimension_numbers<[1], [0], [0], [1], [0, 0, 1, 1], [], []>} : vector<128x128xbf16>, vector<128x128xbf16>, vector<128x128xf32> -> vector<128x128xf32>
    %71 = arith.addf %66, %70 : vector<128x128xf32>
    %72 = arith.addf %62, %71 : vector<128x128xf32>
    %73 = arith.addf %53, %72 : vector<128x128xf32>
    %c0_80 = arith.constant 0 : index
    %c0_81 = arith.constant 0 : index
    %74 = vector.load %arg4[%c0_80, %c0_81] : memref<1x128xf32, #tpu.memory_space<vmem>>, vector<1x128xf32>
    %75 = vector.broadcast %74 : vector<1x128xf32> to vector<128x128xf32>
    %76 = arith.addf %73, %75 : vector<128x128xf32>
    %cst_82 = arith.constant 0.000000e+00 : f32
    %77 = vector.broadcast %cst_82 : f32 to vector<128x128xf32>
    %78 = arith.maximumf %76, %77 : vector<128x128xf32>
    %79 = arith.truncf %78 : vector<128x128xf32> to vector<128x128xbf16>
    %c0_83 = arith.constant 0 : index
    %c0_84 = arith.constant 0 : index
    %80 = vector.load %arg12[%c0_83, %c0_84] : memref<144x128xbf16, #tpu.memory_space<vmem>>, vector<128x128xbf16>
    tpu.vector_store %arg12[%c0_83, %c0_84], %79 {strides = array<i32>} : memref<144x128xbf16, #tpu.memory_space<vmem>>, vector<128x128xbf16>,
    %c0_85 = arith.constant 0 : index
    %c0_86 = arith.constant 0 : index
    %81 = vector.load %arg12[%c0_85, %c0_86] : memref<144x128xbf16, #tpu.memory_space<vmem>>, vector<128x128xbf16>
    %c0_87 = arith.constant 0 : index
    %c0_88 = arith.constant 0 : index
    %c0_89 = arith.constant 0 : index
    %82 = vector.load %arg5[%c0_87, %c0_88, %c0_89] : memref<6x128x128xbf16, #tpu.memory_space<vmem>>, vector<1x128x128xbf16>
    %83 = vector.shape_cast %82 : vector<1x128x128xbf16> to vector<128x128xbf16>
    %cst_90 = arith.constant dense<0.000000e+00> : vector<128x128xf32>
    %84 = tpu.matmul %81, %83, %cst_90 {dimension_numbers = #tpu.dot_dimension_numbers<[1], [0], [0], [1], [0, 0, 1, 1], [], []>} : vector<128x128xbf16>, vector<128x128xbf16>, vector<128x128xf32> -> vector<128x128xf32>
    %c1_91 = arith.constant 1 : index
    %c0_92 = arith.constant 0 : index
    %85 = vector.load %arg12[%c1_91, %c0_92] : memref<144x128xbf16, #tpu.memory_space<vmem>>, vector<128x128xbf16>
    %c1_93 = arith.constant 1 : index
    %c0_94 = arith.constant 0 : index
    %c0_95 = arith.constant 0 : index
    %86 = vector.load %arg5[%c1_93, %c0_94, %c0_95] : memref<6x128x128xbf16, #tpu.memory_space<vmem>>, vector<1x128x128xbf16>
    %87 = vector.shape_cast %86 : vector<1x128x128xbf16> to vector<128x128xbf16>
    %cst_96 = arith.constant dense<0.000000e+00> : vector<128x128xf32>
    %88 = tpu.matmul %85, %87, %cst_96 {dimension_numbers = #tpu.dot_dimension_numbers<[1], [0], [0], [1], [0, 0, 1, 1], [], []>} : vector<128x128xbf16>, vector<128x128xbf16>, vector<128x128xf32> -> vector<128x128xf32>
    %89 = arith.addf %84, %88 : vector<128x128xf32>
    %c4_97 = arith.constant 4 : index
    %c0_98 = arith.constant 0 : index
    %90 = vector.load %arg12[%c4_97, %c0_98] : memref<144x128xbf16, #tpu.memory_space<vmem>>, vector<128x128xbf16>
    %c2_99 = arith.constant 2 : index
    %c0_100 = arith.constant 0 : index
    %c0_101 = arith.constant 0 : index
    %91 = vector.load %arg5[%c2_99, %c0_100, %c0_101] : memref<6x128x128xbf16, #tpu.memory_space<vmem>>, vector<1x128x128xbf16>
    %92 = vector.shape_cast %91 : vector<1x128x128xbf16> to vector<128x128xbf16>
    %cst_102 = arith.constant dense<0.000000e+00> : vector<128x128xf32>
    %93 = tpu.matmul %90, %92, %cst_102 {dimension_numbers = #tpu.dot_dimension_numbers<[1], [0], [0], [1], [0, 0, 1, 1], [], []>} : vector<128x128xbf16>, vector<128x128xbf16>, vector<128x128xf32> -> vector<128x128xf32>
    %c5_103 = arith.constant 5 : index
    %c0_104 = arith.constant 0 : index
    %94 = vector.load %arg12[%c5_103, %c0_104] : memref<144x128xbf16, #tpu.memory_space<vmem>>, vector<128x128xbf16>
    %c3_105 = arith.constant 3 : index
    %c0_106 = arith.constant 0 : index
    %c0_107 = arith.constant 0 : index
    %95 = vector.load %arg5[%c3_105, %c0_106, %c0_107] : memref<6x128x128xbf16, #tpu.memory_space<vmem>>, vector<1x128x128xbf16>
    %96 = vector.shape_cast %95 : vector<1x128x128xbf16> to vector<128x128xbf16>
    %cst_108 = arith.constant dense<0.000000e+00> : vector<128x128xf32>
    %97 = tpu.matmul %94, %96, %cst_108 {dimension_numbers = #tpu.dot_dimension_numbers<[1], [0], [0], [1], [0, 0, 1, 1], [], []>} : vector<128x128xbf16>, vector<128x128xbf16>, vector<128x128xf32> -> vector<128x128xf32>
    %98 = arith.addf %93, %97 : vector<128x128xf32>
    %c8_109 = arith.constant 8 : index
    %c0_110 = arith.constant 0 : index
    %99 = vector.load %arg12[%c8_109, %c0_110] : memref<144x128xbf16, #tpu.memory_space<vmem>>, vector<128x128xbf16>
    %c4_111 = arith.constant 4 : index
    %c0_112 = arith.constant 0 : index
    %c0_113 = arith.constant 0 : index
    %100 = vector.load %arg5[%c4_111, %c0_112, %c0_113] : memref<6x128x128xbf16, #tpu.memory_space<vmem>>, vector<1x128x128xbf16>
    %101 = vector.shape_cast %100 : vector<1x128x128xbf16> to vector<128x128xbf16>
    %cst_114 = arith.constant dense<0.000000e+00> : vector<128x128xf32>
    %102 = tpu.matmul %99, %101, %cst_114 {dimension_numbers = #tpu.dot_dimension_numbers<[1], [0], [0], [1], [0, 0, 1, 1], [], []>} : vector<128x128xbf16>, vector<128x128xbf16>, vector<128x128xf32> -> vector<128x128xf32>
    %c9_115 = arith.constant 9 : index
    %c0_116 = arith.constant 0 : index
    %103 = vector.load %arg12[%c9_115, %c0_116] : memref<144x128xbf16, #tpu.memory_space<vmem>>, vector<128x128xbf16>
    %c5_117 = arith.constant 5 : index
    %c0_118 = arith.constant 0 : index
    %c0_119 = arith.constant 0 : index
    %104 = vector.load %arg5[%c5_117, %c0_118, %c0_119] : memref<6x128x128xbf16, #tpu.memory_space<vmem>>, vector<1x128x128xbf16>
    %105 = vector.shape_cast %104 : vector<1x128x128xbf16> to vector<128x128xbf16>
    %cst_120 = arith.constant dense<0.000000e+00> : vector<128x128xf32>
    %106 = tpu.matmul %103, %105, %cst_120 {dimension_numbers = #tpu.dot_dimension_numbers<[1], [0], [0], [1], [0, 0, 1, 1], [], []>} : vector<128x128xbf16>, vector<128x128xbf16>, vector<128x128xf32> -> vector<128x128xf32>
    %107 = arith.addf %102, %106 : vector<128x128xf32>
    %108 = arith.addf %98, %107 : vector<128x128xf32>
    %109 = arith.addf %89, %108 : vector<128x128xf32>
    %c0_121 = arith.constant 0 : index
    %c0_122 = arith.constant 0 : index
    %110 = vector.load %arg6[%c0_121, %c0_122] : memref<1x128xf32, #tpu.memory_space<vmem>>, vector<1x128xf32>
    %111 = vector.broadcast %110 : vector<1x128xf32> to vector<128x128xf32>
    %112 = arith.addf %109, %111 : vector<128x128xf32>
    %cst_123 = arith.constant 0.000000e+00 : f32
    %113 = vector.broadcast %cst_123 : f32 to vector<128x128xf32>
    %114 = arith.maximumf %112, %113 : vector<128x128xf32>
    %115 = arith.truncf %114 : vector<128x128xf32> to vector<128x128xbf16>
    %c0_124 = arith.constant 0 : index
    %c0_125 = arith.constant 0 : index
    %116 = vector.load %arg11[%c0_124, %c0_125] : memref<144x128xbf16, #tpu.memory_space<vmem>>, vector<128x128xbf16>
    tpu.vector_store %arg11[%c0_124, %c0_125], %115 {strides = array<i32>} : memref<144x128xbf16, #tpu.memory_space<vmem>>, vector<128x128xbf16>,
    %c0_126 = arith.constant 0 : index
    %c0_127 = arith.constant 0 : index
    %117 = vector.load %arg11[%c0_126, %c0_127] : memref<144x128xbf16, #tpu.memory_space<vmem>>, vector<128x128xbf16>
    %c4_128 = arith.constant 4 : index
    %c0_129 = arith.constant 0 : index
    %118 = vector.load %arg11[%c4_128, %c0_129] : memref<144x128xbf16, #tpu.memory_space<vmem>>, vector<128x128xbf16>
    %119 = arith.maximumf %117, %118 : vector<128x128xbf16>
    %120 = vector.extract_strided_slice %119 {offsets = [0, 0], sizes = [128, 96], strides = [1, 1]} : vector<128x128xbf16> to vector<128x96xbf16>
    %121 = vector.extract_strided_slice %119 {offsets = [0, 32], sizes = [128, 96], strides = [1, 1]} : vector<128x128xbf16> to vector<128x96xbf16>
    %122 = arith.maximumf %120, %121 : vector<128x96xbf16>
    %123 = arith.extf %122 : vector<128x96xbf16> to vector<128x96xf32>
    %c0_130 = arith.constant 0 : index
    %c0_131 = arith.constant 0 : index
    %c0_132 = arith.constant 0 : index
    %124 = vector.load %arg7[%c0_130, %c0_131, %c0_132] : memref<2x40x96xf32, #tpu.memory_space<vmem>>, vector<1x40x96xf32>
    %125 = vector.shape_cast %124 : vector<1x40x96xf32> to vector<40x96xf32>
    %c1_133 = arith.constant 1 : index
    %c0_134 = arith.constant 0 : index
    %c0_135 = arith.constant 0 : index
    %126 = vector.load %arg7[%c1_133, %c0_134, %c0_135] : memref<2x40x96xf32, #tpu.memory_space<vmem>>, vector<1x40x96xf32>
    %127 = vector.shape_cast %126 : vector<1x40x96xf32> to vector<40x96xf32>
    %128 = vector.extract_strided_slice %123 {offsets = [0, 0], sizes = [40, 96], strides = [1, 1]} : vector<128x96xf32> to vector<40x96xf32>
    %129 = arith.mulf %128, %125 : vector<40x96xf32>
    %cst_136 = arith.constant dense<0.000000e+00> : vector<40xf32>
    %130 = vector.multi_reduction <add>, %129, %cst_136 [1] : vector<40x96xf32> to vector<40xf32>
    %131 = vector.shape_cast %130 : vector<40xf32> to vector<40x1xf32>
    %cst_137 = arith.constant dense<0.000000e+00> : vector<1xf32>
    %132 = vector.multi_reduction <add>, %131, %cst_137 [0] : vector<40x1xf32> to vector<1xf32>
    %133 = vector.shape_cast %132 : vector<1xf32> to vector<1x1xf32>
    %134 = arith.mulf %128, %127 : vector<40x96xf32>
    %cst_138 = arith.constant dense<0.000000e+00> : vector<40xf32>
    %135 = vector.multi_reduction <add>, %134, %cst_138 [1] : vector<40x96xf32> to vector<40xf32>
    %136 = vector.shape_cast %135 : vector<40xf32> to vector<40x1xf32>
    %cst_139 = arith.constant dense<0.000000e+00> : vector<1xf32>
    %137 = vector.multi_reduction <add>, %136, %cst_139 [0] : vector<40x1xf32> to vector<1xf32>
    %138 = vector.shape_cast %137 : vector<1xf32> to vector<1x1xf32>
    %139 = tpu.concatenate %133, %138 in 1 : vector<1x1xf32>, vector<1x1xf32> -> vector<1x2xf32>
    %140 = vector.extract_strided_slice %123 {offsets = [64, 0], sizes = [40, 96], strides = [1, 1]} : vector<128x96xf32> to vector<40x96xf32>
    %141 = arith.mulf %140, %125 : vector<40x96xf32>
    %cst_140 = arith.constant dense<0.000000e+00> : vector<40xf32>
    %142 = vector.multi_reduction <add>, %141, %cst_140 [1] : vector<40x96xf32> to vector<40xf32>
    %143 = vector.shape_cast %142 : vector<40xf32> to vector<40x1xf32>
    %cst_141 = arith.constant dense<0.000000e+00> : vector<1xf32>
    %144 = vector.multi_reduction <add>, %143, %cst_141 [0] : vector<40x1xf32> to vector<1xf32>
    %145 = vector.shape_cast %144 : vector<1xf32> to vector<1x1xf32>
    %146 = arith.mulf %140, %127 : vector<40x96xf32>
    %cst_142 = arith.constant dense<0.000000e+00> : vector<40xf32>
    %147 = vector.multi_reduction <add>, %146, %cst_142 [1] : vector<40x96xf32> to vector<40xf32>
    %148 = vector.shape_cast %147 : vector<40xf32> to vector<40x1xf32>
    %cst_143 = arith.constant dense<0.000000e+00> : vector<1xf32>
    %149 = vector.multi_reduction <add>, %148, %cst_143 [0] : vector<40x1xf32> to vector<1xf32>
    %150 = vector.shape_cast %149 : vector<1xf32> to vector<1x1xf32>
    %151 = tpu.concatenate %145, %150 in 1 : vector<1x1xf32>, vector<1x1xf32> -> vector<1x2xf32>
    %152 = tpu.concatenate %139, %151 in 0 : vector<1x2xf32>, vector<1x2xf32> -> vector<2x2xf32>
    %c0_144 = arith.constant 0 : index
    %c0_145 = arith.constant 0 : index
    %153 = vector.load %arg8[%c0_144, %c0_145] : memref<1x2xf32, #tpu.memory_space<vmem>>, vector<1x2xf32>
    %154 = vector.broadcast %153 : vector<1x2xf32> to vector<2x2xf32>
    %155 = arith.addf %152, %154 : vector<2x2xf32>
    %cst_146 = arith.constant 0.000000e+00 : f32
    %156 = vector.broadcast %cst_146 : f32 to vector<2x2xf32>
    %157 = arith.subf %156, %155 : vector<2x2xf32>
    %158 = math.exp %157 : vector<2x2xf32>
    %cst_147 = arith.constant 1.000000e+00 : f32
    %159 = vector.broadcast %cst_147 : f32 to vector<2x2xf32>
    %160 = arith.addf %159, %158 : vector<2x2xf32>
    %cst_148 = arith.constant 1.000000e+00 : f32
    %161 = vector.broadcast %cst_148 : f32 to vector<2x2xf32>
    %162 = arith.divf %161, %160 : vector<2x2xf32>
    %c0_149 = arith.constant 0 : index
    %c0_150 = arith.constant 0 : index
    %163 = vector.load %arg9[%c0_149, %c0_150] : memref<2x2xf32, #tpu.memory_space<vmem>>, vector<2x2xf32>
    tpu.vector_store %arg9[%c0_149, %c0_150], %162 {strides = array<i32>} : memref<2x2xf32, #tpu.memory_space<vmem>>, vector<2x2xf32>,
    return
  }
}

</mosaic_0001>

<llo_original>
// kernel: cancer_model_forward.1
$region0: #{cancer_model_forward.1}
  #allocation0 [shape = 'u32[]', space=smem, size = 0x4, offset = 0x4, fixed_abs, tag = 'smem constant byte address 0x4 - core index']
  #allocation1 [shape = 'u32[144,128]{1,0:T(1,128)}', space=vmem, size = 0x12000, scoped, tag = 'internal scratch']
  #allocation2 [shape = 'bf16[144,12]{1,0:T(8,128)(2,1)}', space=vmem, size = 0x9000, scoped, tag = 'scratch operand']
  #allocation3 [shape = 'bf16[144,128]{1,0:T(8,128)(2,1)}', space=vmem, size = 0x9000, scoped, tag = 'scratch operand']
  #allocation4 [shape = 'bf16[144,128]{1,0:T(8,128)(2,1)}', space=vmem, size = 0x9000, scoped, tag = 'scratch operand']
  %s0 = inlined_call_operand.vmem [shape: f32[128,12], index: 0, kind: input, shape index: {}]
  %s1 = inlined_call_operand.vmem [shape: bf16[6,12,128], index: 1, kind: input, shape index: {}]
  %s2 = inlined_call_operand.vmem [shape: f32[1,128], index: 2, kind: input, shape index: {}]
  %s3 = inlined_call_operand.vmem [shape: bf16[6,128,128], index: 3, kind: input, shape index: {}]
  %s4 = inlined_call_operand.vmem [shape: f32[1,128], index: 4, kind: input, shape index: {}]
  %s5 = inlined_call_operand.vmem [shape: bf16[6,128,128], index: 5, kind: input, shape index: {}]
  %s6 = inlined_call_operand.vmem [shape: f32[1,128], index: 6, kind: input, shape index: {}]
  %s7 = inlined_call_operand.vmem [shape: f32[2,40,96], index: 7, kind: input, shape index: {}]
  %s8 = inlined_call_operand.vmem [shape: f32[1,2], index: 8, kind: input, shape index: {}]
  %s9 = inlined_call_operand.hbm [shape: f32[2,2], index: 9, kind: output, shape index: {}]
  %s10 = sld [smem:[#allocation0]]
  $region46: #{cancer_model_forward.1} parent=0
    _
  %s12 = ssub.s32 1, %s10
  %s13 = scalar_select 0, %s12, %s10
  $region1: #{cancer_model_forward.1} parent=0
    #allocation5 [shape = 'u8[1024]{0}', space=vmem, size = 0x400, scoped, tag = 'output window, operand 0, single buffered']
    #allocation6 [shape = 's32[1]{0}', space=sflag, size = 0x4, scoped, tag = 'scoped memory for cancer_model_forward.1']
    %14 = vsyncpa [#allocation6], 0
    // Predicated region
    $region2: #{cancer_model_forward.1} parent=1 // pred_check
      _
    $region3: #{cancer_model_forward.1} parent=1 // pred_check_branch
      %16 = sbr.rel (0) target = $region5
    $region4: #{cancer_model_forward.1} parent=1 // pred_region
      _
    $region5: #{cancer_model_forward.1} parent=1 // pred_fallthru
      _
    // Predicated region
    $region6: #{cancer_model_forward.1} parent=1 // pred_check
      _
    $region7: #{cancer_model_forward.1} parent=1 // pred_check_branch
      %18 = sbr.rel (0) target = $region9
    $region8: #{cancer_model_forward.1} parent=1 // pred_region
      _
    $region9: #{cancer_model_forward.1} parent=1 // pred_fallthru
      _
    // Predicated region
    $region10: #{cancer_model_forward.1} parent=1 // pred_check
      _
    $region11: #{cancer_model_forward.1} parent=1 // pred_check_branch
      %20 = sbr.rel (0) target = $region13
    $region12: #{cancer_model_forward.1} parent=1 // pred_region
      _
    $region13: #{cancer_model_forward.1} parent=1 // pred_fallthru
      _
    // Predicated region
    $region14: #{cancer_model_forward.1} parent=1 // pred_check
      _
    $region15: #{cancer_model_forward.1} parent=1 // pred_check_branch
      %22 = sbr.rel (0) target = $region17
    $region16: #{cancer_model_forward.1} parent=1 // pred_region
      _
    $region17: #{cancer_model_forward.1} parent=1 // pred_fallthru
      _
    // Predicated region
    $region18: #{cancer_model_forward.1} parent=1 // pred_check
      _
    $region19: #{cancer_model_forward.1} parent=1 // pred_check_branch
      %24 = sbr.rel (0) target = $region21
    $region20: #{cancer_model_forward.1} parent=1 // pred_region
      _
    $region21: #{cancer_model_forward.1} parent=1 // pred_fallthru
      _
    // Predicated region
    $region22: #{cancer_model_forward.1} parent=1 // pred_check
      _
    $region23: #{cancer_model_forward.1} parent=1 // pred_check_branch
      %26 = sbr.rel (0) target = $region25
    $region24: #{cancer_model_forward.1} parent=1 // pred_region
      _
    $region25: #{cancer_model_forward.1} parent=1 // pred_fallthru
      _
    // Predicated region
    $region26: #{cancer_model_forward.1} parent=1 // pred_check
      _
    $region27: #{cancer_model_forward.1} parent=1 // pred_check_branch
      %28 = sbr.rel (0) target = $region29
    $region28: #{cancer_model_forward.1} parent=1 // pred_region
      _
    $region29: #{cancer_model_forward.1} parent=1 // pred_fallthru
      _
    // Predicated region
    $region30: #{cancer_model_forward.1} parent=1 // pred_check
      _
    $region31: #{cancer_model_forward.1} parent=1 // pred_check_branch
      %30 = sbr.rel (0) target = $region33
    $region32: #{cancer_model_forward.1} parent=1 // pred_region
      _
    $region33: #{cancer_model_forward.1} parent=1 // pred_fallthru
      _
    // Predicated region
    $region34: #{cancer_model_forward.1} parent=1 // pred_check
      _
    $region35: #{cancer_model_forward.1} parent=1 // pred_check_branch
      %32 = sbr.rel (0) target = $region37
    $region36: #{cancer_model_forward.1} parent=1 // pred_region
      _
    $region37: #{cancer_model_forward.1} parent=1 // pred_fallthru
      _
    %v34 = vld [vmem:[%s0] sm:$0xff]
    %v35 = vld [vmem:[%s0 + $0x8] sm:$0xff]
    %v36 = vld [vmem:[%s0 + $0x10] sm:$0xff]
    %v37 = vld [vmem:[%s0 + $0x18] sm:$0xff]
    %v38 = vld [vmem:[%s0 + $0x20] sm:$0xff]
    %v39 = vld [vmem:[%s0 + $0x28] sm:$0xff]
    %v40 = vld [vmem:[%s0 + $0x30] sm:$0xff]
    %v41 = vld [vmem:[%s0 + $0x38] sm:$0xff]
    %v42 = vld [vmem:[%s0 + $0x40] sm:$0xff]
    %v43 = vld [vmem:[%s0 + $0x48] sm:$0xff]
    %v44 = vld [vmem:[%s0 + $0x50] sm:$0xff]
    %v45 = vld [vmem:[%s0 + $0x58] sm:$0xff]
    %v46 = vld [vmem:[%s0 + $0x60] sm:$0xff]
    %v47 = vld [vmem:[%s0 + $0x68] sm:$0xff]
    %v48 = vld [vmem:[%s0 + $0x70] sm:$0xff]
    %v49 = vld [vmem:[%s0 + $0x78] sm:$0xff]
    %v50 = vpack.c.bf16 %v35, %v34
    %v51 = vpack.c.bf16 %v37, %v36
    %v52 = vpack.c.bf16 %v39, %v38
    %v53 = vpack.c.bf16 %v41, %v40
    %v54 = vpack.c.bf16 %v43, %v42
    %v55 = vpack.c.bf16 %v45, %v44
    %v56 = vpack.c.bf16 %v47, %v46
    %v57 = vpack.c.bf16 %v49, %v48
    %v66 = vunpack.c.l.b16 %v50
    %v67 = vunpack.c.h.b16 %v50
    %v68 = vunpack.c.l.b16 %v51
    %v69 = vunpack.c.h.b16 %v51
    %v70 = vunpack.c.l.b16 %v52
    %v71 = vunpack.c.h.b16 %v52
    %v72 = vunpack.c.l.b16 %v53
    %v73 = vunpack.c.h.b16 %v53
    %v74 = vunpack.c.l.b16 %v54
    %v75 = vunpack.c.h.b16 %v54
    %v76 = vunpack.c.l.b16 %v55
    %v77 = vunpack.c.h.b16 %v55
    %v78 = vunpack.c.l.b16 %v56
    %v79 = vunpack.c.h.b16 %v56
    %v80 = vunpack.c.l.b16 %v57
    %v81 = vunpack.c.h.b16 %v57
    %v82 = vpack.c.b16 %v66, %v66
    %v83 = vpack.c.b16 %v67, %v67
    %v84 = vpack.c.b16 %v68, %v68
    %v85 = vpack.c.b16 %v69, %v69
    %v86 = vpack.c.b16 %v70, %v70
    %v87 = vpack.c.b16 %v71, %v71
    %v88 = vpack.c.b16 %v72, %v72
    %v89 = vpack.c.b16 %v73, %v73
    %v90 = vpack.c.b16 %v74, %v74
    %v91 = vpack.c.b16 %v75, %v75
    %v92 = vpack.c.b16 %v76, %v76
    %v93 = vpack.c.b16 %v77, %v77
    %v94 = vpack.c.b16 %v78, %v78
    %v95 = vpack.c.b16 %v79, %v79
    %v96 = vpack.c.b16 %v80, %v80
    %v97 = vpack.c.b16 %v81, %v81
    %vm114 = vcmask 93184
    %115 = vst.msk [vmem:[#allocation2] sm:$0xf] %vm114, %v82
    %116 = vst.msk [vmem:[#allocation2 + $0x4] sm:$0xf] %vm114, %v83
    %117 = vst.msk [vmem:[#allocation2 + $0x8] sm:$0xf] %vm114, %v84
    %118 = vst.msk [vmem:[#allocation2 + $0xc] sm:$0xf] %vm114, %v85
    %119 = vst.msk [vmem:[#allocation2 + $0x10] sm:$0xf] %vm114, %v86
    %120 = vst.msk [vmem:[#allocation2 + $0x14] sm:$0xf] %vm114, %v87
    %121 = vst.msk [vmem:[#allocation2 + $0x18] sm:$0xf] %vm114, %v88
    %122 = vst.msk [vmem:[#allocation2 + $0x1c] sm:$0xf] %vm114, %v89
    %123 = vst.msk [vmem:[#allocation2 + $0x20] sm:$0xf] %vm114, %v90
    %124 = vst.msk [vmem:[#allocation2 + $0x24] sm:$0xf] %vm114, %v91
    %125 = vst.msk [vmem:[#allocation2 + $0x28] sm:$0xf] %vm114, %v92
    %126 = vst.msk [vmem:[#allocation2 + $0x2c] sm:$0xf] %vm114, %v93
    %127 = vst.msk [vmem:[#allocation2 + $0x30] sm:$0xf] %vm114, %v94
    %128 = vst.msk [vmem:[#allocation2 + $0x34] sm:$0xf] %vm114, %v95
    %129 = vst.msk [vmem:[#allocation2 + $0x38] sm:$0xf] %vm114, %v96
    %130 = vst.msk [vmem:[#allocation2 + $0x3c] sm:$0xf] %vm114, %v97
    %131 = vst.msk [vmem:[#allocation2 + $0x40] sm:$0xf] %vm114, 0
    %132 = vst.msk [vmem:[#allocation2 + $0x44] sm:$0xf] %vm114, 0
    %133 = vst [vmem:[#allocation3 + $0x40] sm:$0xf] 0
    %134 = vst [vmem:[#allocation3 + $0x44] sm:$0xf] 0
    %135 = vst [vmem:[#allocation4 + $0x40] sm:$0xf] 0
    %136 = vst [vmem:[#allocation4 + $0x44] sm:$0xf] 0
    %v137 = vld [vmem:[#allocation2] sm:$0xf]
    %v138 = vld [vmem:[#allocation2 + $0x4] sm:$0xf]
    %v139 = vld [vmem:[#allocation2 + $0x8] sm:$0xf]
    %v140 = vld [vmem:[#allocation2 + $0xc] sm:$0xf]
    %v141 = vld [vmem:[#allocation2 + $0x10] sm:$0xf]
    %v142 = vld [vmem:[#allocation2 + $0x14] sm:$0xf]
    %v143 = vld [vmem:[#allocation2 + $0x18] sm:$0xf]
    %v144 = vld [vmem:[#allocation2 + $0x1c] sm:$0xf]
    %v145 = vld [vmem:[#allocation2 + $0x20] sm:$0xf]
    %v146 = vld [vmem:[#allocation2 + $0x24] sm:$0xf]
    %v147 = vld [vmem:[#allocation2 + $0x28] sm:$0xf]
    %v148 = vld [vmem:[#allocation2 + $0x2c] sm:$0xf]
    %v149 = vld [vmem:[#allocation2 + $0x30] sm:$0xf]
    %v150 = vld [vmem:[#allocation2 + $0x34] sm:$0xf]
    %v151 = vld [vmem:[#allocation2 + $0x38] sm:$0xf]
    %v152 = vld [vmem:[#allocation2 + $0x3c] sm:$0xf]
    %v153 = vld [vmem:[%s1] sm:$0xf]
    %v154 = vld [vmem:[%s1 + $0x4] sm:$0x3]
    %v155 = vld [vmem:[#allocation2 + $0x40] sm:$0x1]
    %s156 = scalar_lea.vmem %s1, 8
    %v157 = vld [vmem:[%s156] sm:$0xf]
    %v158 = vld [vmem:[%s156 + $0x4] sm:$0x3]
    %v176 = vunpack.c.l.b16 %v137
    %v177 = vunpack.c.l.b16 %v138
    %v178 = vunpack.c.l.b16 %v139
    %v179 = vunpack.c.l.b16 %v140
    %v180 = vunpack.c.l.b16 %v141
    %v181 = vunpack.c.l.b16 %v142
    %v182 = vunpack.c.l.b16 %v143
    %v183 = vunpack.c.l.b16 %v144
    %v184 = vunpack.c.l.b16 %v145
    %v185 = vunpack.c.l.b16 %v146
    %v186 = vunpack.c.l.b16 %v147
    %v187 = vunpack.c.l.b16 %v148
    %v188 = vunpack.c.l.b16 %v149
    %v189 = vunpack.c.l.b16 %v150
    %v190 = vunpack.c.l.b16 %v151
    %v191 = vunpack.c.l.b16 %v152
    %v192 = vunpack.c.l.b16 %v155
    %v193 = vpack.c.b16 %v177, %v176
    %v194 = vpack.c.b16 %v179, %v178
    %v195 = vpack.c.b16 %v181, %v180
    %v196 = vpack.c.b16 %v183, %v182
    %v197 = vpack.c.b16 %v185, %v184
    %v198 = vpack.c.b16 %v187, %v186
    %v199 = vpack.c.b16 %v189, %v188
    %v200 = vpack.c.b16 %v191, %v190
    %v201 = vpack.c.b16 %v192, %v192
    %vm202 = vsmask.f32 7424
    %v204 = vshrl.u32 %v193, 16
    %v206 = vshll.u32 %v193, 16
    %v208 = vrot.slane %v206, 1
    %v209 = vor.u32 %v204, %v208
    %v211 = vshll.u32 %v194, 16
    %v213 = vrot.slane %v211, 1
    %v214 = vsel %vm202, %v209, %v213
    %v215 = vshrl.u32 %v194, 16
    %v217 = vor.u32 %v215, %v213
    %v219 = vshll.u32 %v195, 16
    %v221 = vrot.slane %v219, 1
    %v222 = vsel %vm202, %v217, %v221
    %v223 = vshrl.u32 %v195, 16
    %v225 = vor.u32 %v223, %v221
    %v227 = vshll.u32 %v196, 16
    %v229 = vrot.slane %v227, 1
    %v230 = vsel %vm202, %v225, %v229
    %v231 = vshrl.u32 %v196, 16
    %v233 = vor.u32 %v231, %v229
    %v235 = vshll.u32 %v197, 16
    %v237 = vrot.slane %v235, 1
    %v238 = vsel %vm202, %v233, %v237
    %v239 = vshrl.u32 %v197, 16
    %v241 = vor.u32 %v239, %v237
    %v243 = vshll.u32 %v198, 16
    %v245 = vrot.slane %v243, 1
    %v246 = vsel %vm202, %v241, %v245
    %v247 = vshrl.u32 %v198, 16
    %v249 = vor.u32 %v247, %v245
    %v251 = vshll.u32 %v199, 16
    %v253 = vrot.slane %v251, 1
    %v254 = vsel %vm202, %v249, %v253
    %v255 = vshrl.u32 %v199, 16
    %v257 = vor.u32 %v255, %v253
    %v259 = vshll.u32 %v200, 16
    %v261 = vrot.slane %v259, 1
    %v262 = vsel %vm202, %v257, %v261
    %v263 = vshrl.u32 %v200, 16
    %v265 = vor.u32 %v263, %v261
    %v267 = vshll.u32 %v201, 16
    %v269 = vrot.slane %v267, 1
    %v270 = vsel %vm202, %v265, %v269
    %v273 = vunpack.c.l.b16 %v157
    %v274 = vunpack.c.l.b16 %v158
    %v275 = vpack.c.b16 %v274, %v273
    %vm276 = vcmask 97280
    %v278 = vsel %vm276, %v214, 0
    %v281 = vsel %vm276, %v222, 0
    %v284 = vsel %vm276, %v230, 0
    %v287 = vsel %vm276, %v238, 0
    %v290 = vsel %vm276, %v246, 0
    %v293 = vsel %vm276, %v254, 0
    %v296 = vsel %vm276, %v262, 0
    %v299 = vsel %vm276, %v270, 0
    %vm301 = vcmask 1045504
    %v303 = vsel %vm301, %v275, 0
    %305 = vmatprep.subr.bf16.mxu0 0
    %306 = vmatpush1.bf16.msra.mxu0 0
    %307 = vmatprep.subr.bf16.mxu0 0
    %308 = vmatpush1.bf16.msra.mxu0 0
    %309 = vmatprep.subr.bf16.mxu0 0
    %310 = vmatpush1.bf16.msra.mxu0 0
    %311 = vmatprep.subr.bf16.mxu0 0
    %312 = vmatpush1.bf16.msra.mxu0 0
    %313 = vmatprep.subr.bf16.mxu0 0
    %314 = vmatpush1.bf16.msra.mxu0 0
    %315 = vmatprep.subr.bf16.mxu0 0
    %316 = vmatpush1.bf16.msra.mxu0 0
    %317 = vmatprep.subr.bf16.mxu0 0
    %318 = vmatpush1.bf16.msra.mxu0 0
    %319 = vmatprep.subr.bf16.mxu0 0
    %320 = vmatpush1.bf16.msra.mxu0 %v303
    %321 = vmatprep.subr.bf16.mxu0 0
    %322 = vmatpush2.bf16.msra.mxu0 0
    %323 = vmatprep.subr.bf16.mxu0 0
    %324 = vmatpush2.bf16.msra.mxu0 0
    %325 = vmatprep.subr.bf16.mxu0 0
    %326 = vmatpush2.bf16.msra.mxu0 0
    %327 = vmatprep.subr.bf16.mxu0 0
    %328 = vmatpush2.bf16.msra.mxu0 0
    %329 = vmatprep.subr.bf16.mxu0 0
    %330 = vmatpush2.bf16.msra.mxu0 0
    %331 = vmatprep.subr.bf16.mxu0 0
    %332 = vmatpush2.bf16.msra.mxu0 0
    %333 = vmatprep.subr.bf16.mxu0 0
    %334 = vmatpush2.bf16.msra.mxu0 0
    %335 = vmatprep.subr.bf16.mxu0 0
    %336 = vmatpush2.bf16.msra.mxu0 0
    %337 = vmatprep.mubr.bf16.mxu0 0
    %338 = vmatmul.mubr.bf16.gmra.mxu0 %v278
    %v339 = vpop.f32.mrf.mxu0
    %v340 = vadd.f32 0.0, %v339
    %v341 = vpop.f32.mrf.mxu0
    %v342 = vpop.f32.mrf.mxu0
    %v343 = vadd.f32 0.0, %v342
    %v344 = vpop.f32.mrf.mxu0
    %345 = vmatprep.mubr.bf16.mxu0 0
    %346 = vmatmul.mubr.bf16.gmra.mxu0 %v281
    %v347 = vpop.f32.mrf.mxu0
    %v348 = vadd.f32 0.0, %v347
    %v349 = vpop.f32.mrf.mxu0
    %v350 = vpop.f32.mrf.mxu0
    %v351 = vadd.f32 0.0, %v350
    %v352 = vpop.f32.mrf.mxu0
    %353 = vmatprep.mubr.bf16.mxu0 0
    %354 = vmatmul.mubr.bf16.gmra.mxu0 %v284
    %v355 = vpop.f32.mrf.mxu0
    %v356 = vadd.f32 0.0, %v355
    %v357 = vpop.f32.mrf.mxu0
    %v358 = vpop.f32.mrf.mxu0
    %v359 = vadd.f32 0.0, %v358
    %v360 = vpop.f32.mrf.mxu0
    %361 = vmatprep.mubr.bf16.mxu0 0
    %362 = vmatmul.mubr.bf16.gmra.mxu0 %v287
    %v363 = vpop.f32.mrf.mxu0
    %v364 = vadd.f32 0.0, %v363
    %v365 = vpop.f32.mrf.mxu0
    %v366 = vpop.f32.mrf.mxu0
    %v367 = vadd.f32 0.0, %v366
    %v368 = vpop.f32.mrf.mxu0
    %369 = vmatprep.mubr.bf16.mxu0 0
    %370 = vmatmul.mubr.bf16.gmra.mxu0 %v290
    %v371 = vpop.f32.mrf.mxu0
    %v372 = vadd.f32 0.0, %v371
    %v373 = vpop.f32.mrf.mxu0
    %v374 = vpop.f32.mrf.mxu0
    %v375 = vadd.f32 0.0, %v374
    %v376 = vpop.f32.mrf.mxu0
    %377 = vmatprep.mubr.bf16.mxu0 0
    %378 = vmatmul.mubr.bf16.gmra.mxu0 %v293
    %v379 = vpop.f32.mrf.mxu0
    %v380 = vadd.f32 0.0, %v379
    %v381 = vpop.f32.mrf.mxu0
    %v382 = vpop.f32.mrf.mxu0
    %v383 = vadd.f32 0.0, %v382
    %v384 = vpop.f32.mrf.mxu0
    %385 = vmatprep.mubr.bf16.mxu0 0
    %386 = vmatmul.mubr.bf16.gmra.mxu0 %v296
    %v387 = vpop.f32.mrf.mxu0
    %v388 = vadd.f32 0.0, %v387
    %v389 = vpop.f32.mrf.mxu0
    %v390 = vpop.f32.mrf.mxu0
    %v391 = vadd.f32 0.0, %v390
    %v392 = vpop.f32.mrf.mxu0
    %393 = vmatprep.mubr.bf16.mxu0 0
    %394 = vmatmul.mubr.bf16.gmra.mxu0 %v299
    %v395 = vpop.f32.mrf.mxu0
    %v396 = vadd.f32 0.0, %v395
    %v397 = vpop.f32.mrf.mxu0
    %v398 = vpop.f32.mrf.mxu0
    %v399 = vadd.f32 0.0, %v398
    %v400 = vpop.f32.mrf.mxu0
    %401 = vdwg.mxu0
    %v404 = vunpack.c.l.b16 %v153
    %v405 = vunpack.c.l.b16 %v154
    %v406 = vpack.c.b16 %v405, %v404
    %v407 = vsel %vm276, %v193, 0
    %v409 = vsel %vm276, %v194, 0
    %v411 = vsel %vm276, %v195, 0
    %v413 = vsel %vm276, %v196, 0
    %v415 = vsel %vm276, %v197, 0
    %v417 = vsel %vm276, %v198, 0
    %v419 = vsel %vm276, %v199, 0
    %v421 = vsel %vm276, %v200, 0
    %v424 = vsel %vm301, %v406, 0
    %426 = vmatprep.subr.bf16.mxu0 0
    %427 = vmatpush1.bf16.msra.mxu0 0
    %428 = vmatprep.subr.bf16.mxu0 0
    %429 = vmatpush1.bf16.msra.mxu0 0
    %430 = vmatprep.subr.bf16.mxu0 0
    %431 = vmatpush1.bf16.msra.mxu0 0
    %432 = vmatprep.subr.bf16.mxu0 0
    %433 = vmatpush1.bf16.msra.mxu0 0
    %434 = vmatprep.subr.bf16.mxu0 0
    %435 = vmatpush1.bf16.msra.mxu0 0
    %436 = vmatprep.subr.bf16.mxu0 0
    %437 = vmatpush1.bf16.msra.mxu0 0
    %438 = vmatprep.subr.bf16.mxu0 0
    %439 = vmatpush1.bf16.msra.mxu0 0
    %440 = vmatprep.subr.bf16.mxu0 0
    %441 = vmatpush1.bf16.msra.mxu0 %v424
    %442 = vmatprep.subr.bf16.mxu0 0
    %443 = vmatpush2.bf16.msra.mxu0 0
    %444 = vmatprep.subr.bf16.mxu0 0
    %445 = vmatpush2.bf16.msra.mxu0 0
    %446 = vmatprep.subr.bf16.mxu0 0
    %447 = vmatpush2.bf16.msra.mxu0 0
    %448 = vmatprep.subr.bf16.mxu0 0
    %449 = vmatpush2.bf16.msra.mxu0 0
    %450 = vmatprep.subr.bf16.mxu0 0
    %451 = vmatpush2.bf16.msra.mxu0 0
    %452 = vmatprep.subr.bf16.mxu0 0
    %453 = vmatpush2.bf16.msra.mxu0 0
    %454 = vmatprep.subr.bf16.mxu0 0
    %455 = vmatpush2.bf16.msra.mxu0 0
    %456 = vmatprep.subr.bf16.mxu0 0
    %457 = vmatpush2.bf16.msra.mxu0 0
    %458 = vmatprep.mubr.bf16.mxu0 0
    %459 = vmatmul.mubr.bf16.gmra.mxu0 %v407
    %v460 = vpop.f32.mrf.mxu0
    %v461 = vadd.f32 %v340, %v460
    %v462 = vpop.f32.mrf.mxu0
    %v463 = vpop.f32.mrf.mxu0
    %v464 = vadd.f32 %v343, %v463
    %v465 = vpop.f32.mrf.mxu0
    %466 = vmatprep.mubr.bf16.mxu0 0
    %467 = vmatmul.mubr.bf16.gmra.mxu0 %v409
    %v468 = vpop.f32.mrf.mxu0
    %v469 = vadd.f32 %v348, %v468
    %v470 = vpop.f32.mrf.mxu0
    %v471 = vpop.f32.mrf.mxu0
    %v472 = vadd.f32 %v351, %v471
    %v473 = vpop.f32.mrf.mxu0
    %474 = vmatprep.mubr.bf16.mxu0 0
    %475 = vmatmul.mubr.bf16.gmra.mxu0 %v411
    %v476 = vpop.f32.mrf.mxu0
    %v477 = vadd.f32 %v356, %v476
    %v478 = vpop.f32.mrf.mxu0
    %v479 = vpop.f32.mrf.mxu0
    %v480 = vadd.f32 %v359, %v479
    %v481 = vpop.f32.mrf.mxu0
    %482 = vmatprep.mubr.bf16.mxu0 0
    %483 = vmatmul.mubr.bf16.gmra.mxu0 %v413
    %v484 = vpop.f32.mrf.mxu0
    %v485 = vadd.f32 %v364, %v484
    %v486 = vpop.f32.mrf.mxu0
    %v487 = vpop.f32.mrf.mxu0
    %v488 = vadd.f32 %v367, %v487
    %v489 = vpop.f32.mrf.mxu0
    %490 = vmatprep.mubr.bf16.mxu0 0
    %491 = vmatmul.mubr.bf16.gmra.mxu0 %v415
    %v492 = vpop.f32.mrf.mxu0
    %v493 = vadd.f32 %v372, %v492
    %v494 = vpop.f32.mrf.mxu0
    %v495 = vpop.f32.mrf.mxu0
    %v496 = vadd.f32 %v375, %v495
    %v497 = vpop.f32.mrf.mxu0
    %498 = vmatprep.mubr.bf16.mxu0 0
    %499 = vmatmul.mubr.bf16.gmra.mxu0 %v417
    %v500 = vpop.f32.mrf.mxu0
    %v501 = vadd.f32 %v380, %v500
    %v502 = vpop.f32.mrf.mxu0
    %v503 = vpop.f32.mrf.mxu0
    %v504 = vadd.f32 %v383, %v503
    %v505 = vpop.f32.mrf.mxu0
    %506 = vmatprep.mubr.bf16.mxu0 0
    %507 = vmatmul.mubr.bf16.gmra.mxu0 %v419
    %v508 = vpop.f32.mrf.mxu0
    %v509 = vadd.f32 %v388, %v508
    %v510 = vpop.f32.mrf.mxu0
    %v511 = vpop.f32.mrf.mxu0
    %v512 = vadd.f32 %v391, %v511
    %v513 = vpop.f32.mrf.mxu0
    %514 = vmatprep.mubr.bf16.mxu0 0
    %515 = vmatmul.mubr.bf16.gmra.mxu0 %v421
    %v516 = vpop.f32.mrf.mxu0
    %v517 = vadd.f32 %v396, %v516
    %v518 = vpop.f32.mrf.mxu0
    %v519 = vpop.f32.mrf.mxu0
    %v520 = vadd.f32 %v399, %v519
    %v521 = vpop.f32.mrf.mxu0
    %522 = vdwg.mxu0
    %v523 = vld [vmem:[#allocation2] sm:$0xc]
    %v524 = vld [vmem:[#allocation2 + $0x40] sm:$0x3]
    %s525 = scalar_lea.vmem %s1, 16
    %v526 = vld [vmem:[%s525] sm:$0xf]
    %v527 = vld [vmem:[%s525 + $0x4] sm:$0x3]
    %v528 = vld [vmem:[#allocation2 + $0x40] sm:$0x7]
    %s529 = scalar_lea.vmem %s1, 24
    %v530 = vld [vmem:[%s529] sm:$0xf]
    %v531 = vld [vmem:[%s529 + $0x4] sm:$0x3]
    %v534 = vunpack.c.l.b16 %v523
    %v535 = vunpack.c.l.b16 %v528
    %v536 = vpack.c.b16 %v177, %v534
    %v537 = vpack.c.b16 %v535, %v535
    %vm538 = vsmask.f32 5376
    %v540 = vshrl.u32 %v536, 16
    %v542 = vrot.slane %v540, 2
    %v543 = vshll.u32 %v536, 16
    %v545 = vrot.slane %v543, 3
    %v546 = vor.u32 %v542, %v545
    %v547 = vrot.slane %v215, 2
    %v548 = vrot.slane %v211, 3
    %v549 = vor.u32 %v547, %v548
    %v550 = vsel %vm538, %v546, %v549
    %v551 = vrot.slane %v223, 2
    %v552 = vrot.slane %v219, 3
    %v553 = vor.u32 %v551, %v552
    %v554 = vsel %vm538, %v549, %v553
    %v555 = vrot.slane %v231, 2
    %v556 = vrot.slane %v227, 3
    %v557 = vor.u32 %v555, %v556
    %v558 = vsel %vm538, %v553, %v557
    %v559 = vrot.slane %v239, 2
    %v560 = vrot.slane %v235, 3
    %v561 = vor.u32 %v559, %v560
    %v562 = vsel %vm538, %v557, %v561
    %v563 = vrot.slane %v247, 2
    %v564 = vrot.slane %v243, 3
    %v565 = vor.u32 %v563, %v564
    %v566 = vsel %vm538, %v561, %v565
    %v567 = vrot.slane %v255, 2
    %v568 = vrot.slane %v251, 3
    %v569 = vor.u32 %v567, %v568
    %v570 = vsel %vm538, %v565, %v569
    %v571 = vrot.slane %v263, 2
    %v572 = vrot.slane %v259, 3
    %v573 = vor.u32 %v571, %v572
    %v574 = vsel %vm538, %v569, %v573
    %v576 = vshrl.u32 %v537, 16
    %v578 = vrot.slane %v576, 2
    %v579 = vshll.u32 %v537, 16
    %v581 = vrot.slane %v579, 3
    %v582 = vor.u32 %v578, %v581
    %v583 = vsel %vm538, %v573, %v582
    %v586 = vunpack.c.l.b16 %v530
    %v587 = vunpack.c.l.b16 %v531
    %v588 = vpack.c.b16 %v587, %v586
    %v590 = vsel %vm276, %v550, 0
    %v593 = vsel %vm276, %v554, 0
    %v596 = vsel %vm276, %v558, 0
    %v599 = vsel %vm276, %v562, 0
    %v602 = vsel %vm276, %v566, 0
    %v605 = vsel %vm276, %v570, 0
    %v608 = vsel %vm276, %v574, 0
    %v611 = vsel %vm276, %v583, 0
    %v614 = vsel %vm301, %v588, 0
    %616 = vmatprep.subr.bf16.mxu0 0
    %617 = vmatpush1.bf16.msra.mxu0 0
    %618 = vmatprep.subr.bf16.mxu0 0
    %619 = vmatpush1.bf16.msra.mxu0 0
    %620 = vmatprep.subr.bf16.mxu0 0
    %621 = vmatpush1.bf16.msra.mxu0 0
    %622 = vmatprep.subr.bf16.mxu0 0
    %623 = vmatpush1.bf16.msra.mxu0 0
    %624 = vmatprep.subr.bf16.mxu0 0
    %625 = vmatpush1.bf16.msra.mxu0 0
    %626 = vmatprep.subr.bf16.mxu0 0
    %627 = vmatpush1.bf16.msra.mxu0 0
    %628 = vmatprep.subr.bf16.mxu0 0
    %629 = vmatpush1.bf16.msra.mxu0 0
    %630 = vmatprep.subr.bf16.mxu0 0
    %631 = vmatpush1.bf16.msra.mxu0 %v614
    %632 = vmatprep.subr.bf16.mxu0 0
    %633 = vmatpush2.bf16.msra.mxu0 0
    %634 = vmatprep.subr.bf16.mxu0 0
    %635 = vmatpush2.bf16.msra.mxu0 0
    %636 = vmatprep.subr.bf16.mxu0 0
    %637 = vmatpush2.bf16.msra.mxu0 0
    %638 = vmatprep.subr.bf16.mxu0 0
    %639 = vmatpush2.bf16.msra.mxu0 0
    %640 = vmatprep.subr.bf16.mxu0 0
    %641 = vmatpush2.bf16.msra.mxu0 0
    %642 = vmatprep.subr.bf16.mxu0 0
    %643 = vmatpush2.bf16.msra.mxu0 0
    %644 = vmatprep.subr.bf16.mxu0 0
    %645 = vmatpush2.bf16.msra.mxu0 0
    %646 = vmatprep.subr.bf16.mxu0 0
    %647 = vmatpush2.bf16.msra.mxu0 0
    %648 = vmatprep.mubr.bf16.mxu0 0
    %649 = vmatmul.mubr.bf16.gmra.mxu0 %v590
    %v650 = vpop.f32.mrf.mxu0
    %v651 = vadd.f32 0.0, %v650
    %v652 = vpop.f32.mrf.mxu0
    %v653 = vpop.f32.mrf.mxu0
    %v654 = vadd.f32 0.0, %v653
    %v655 = vpop.f32.mrf.mxu0
    %656 = vmatprep.mubr.bf16.mxu0 0
    %657 = vmatmul.mubr.bf16.gmra.mxu0 %v593
    %v658 = vpop.f32.mrf.mxu0
    %v659 = vadd.f32 0.0, %v658
    %v660 = vpop.f32.mrf.mxu0
    %v661 = vpop.f32.mrf.mxu0
    %v662 = vadd.f32 0.0, %v661
    %v663 = vpop.f32.mrf.mxu0
    %664 = vmatprep.mubr.bf16.mxu0 0
    %665 = vmatmul.mubr.bf16.gmra.mxu0 %v596
    %v666 = vpop.f32.mrf.mxu0
    %v667 = vadd.f32 0.0, %v666
    %v668 = vpop.f32.mrf.mxu0
    %v669 = vpop.f32.mrf.mxu0
    %v670 = vadd.f32 0.0, %v669
    %v671 = vpop.f32.mrf.mxu0
    %672 = vmatprep.mubr.bf16.mxu0 0
    %673 = vmatmul.mubr.bf16.gmra.mxu0 %v599
    %v674 = vpop.f32.mrf.mxu0
    %v675 = vadd.f32 0.0, %v674
    %v676 = vpop.f32.mrf.mxu0
    %v677 = vpop.f32.mrf.mxu0
    %v678 = vadd.f32 0.0, %v677
    %v679 = vpop.f32.mrf.mxu0
    %680 = vmatprep.mubr.bf16.mxu0 0
    %681 = vmatmul.mubr.bf16.gmra.mxu0 %v602
    %v682 = vpop.f32.mrf.mxu0
    %v683 = vadd.f32 0.0, %v682
    %v684 = vpop.f32.mrf.mxu0
    %v685 = vpop.f32.mrf.mxu0
    %v686 = vadd.f32 0.0, %v685
    %v687 = vpop.f32.mrf.mxu0
    %688 = vmatprep.mubr.bf16.mxu0 0
    %689 = vmatmul.mubr.bf16.gmra.mxu0 %v605
    %v690 = vpop.f32.mrf.mxu0
    %v691 = vadd.f32 0.0, %v690
    %v692 = vpop.f32.mrf.mxu0
    %v693 = vpop.f32.mrf.mxu0
    %v694 = vadd.f32 0.0, %v693
    %v695 = vpop.f32.mrf.mxu0
    %696 = vmatprep.mubr.bf16.mxu0 0
    %697 = vmatmul.mubr.bf16.gmra.mxu0 %v608
    %v698 = vpop.f32.mrf.mxu0
    %v699 = vadd.f32 0.0, %v698
    %v700 = vpop.f32.mrf.mxu0
    %v701 = vpop.f32.mrf.mxu0
    %v702 = vadd.f32 0.0, %v701
    %v703 = vpop.f32.mrf.mxu0
    %704 = vmatprep.mubr.bf16.mxu0 0
    %705 = vmatmul.mubr.bf16.gmra.mxu0 %v611
    %v706 = vpop.f32.mrf.mxu0
    %v707 = vadd.f32 0.0, %v706
    %v708 = vpop.f32.mrf.mxu0
    %v709 = vpop.f32.mrf.mxu0
    %v710 = vadd.f32 0.0, %v709
    %v711 = vpop.f32.mrf.mxu0
    %712 = vdwg.mxu0
    %v714 = vunpack.c.l.b16 %v524
    %v715 = vpack.c.b16 %v714, %v714
    %vm716 = vcmask 1045504
    %v717 = vrot.slane %v536, 2
    %v718 = vrot.slane %v194, 2
    %v719 = vsel %vm716, %v717, %v718
    %v720 = vrot.slane %v195, 2
    %v721 = vsel %vm716, %v718, %v720
    %v722 = vrot.slane %v196, 2
    %v723 = vsel %vm716, %v720, %v722
    %v724 = vrot.slane %v197, 2
    %v725 = vsel %vm716, %v722, %v724
    %v726 = vrot.slane %v198, 2
    %v727 = vsel %vm716, %v724, %v726
    %v728 = vrot.slane %v199, 2
    %v729 = vsel %vm716, %v726, %v728
    %v730 = vrot.slane %v200, 2
    %v731 = vsel %vm716, %v728, %v730
    %v732 = vrot.slane %v715, 2
    %v733 = vsel %vm716, %v730, %v732
    %v736 = vunpack.c.l.b16 %v526
    %v737 = vunpack.c.l.b16 %v527
    %v738 = vpack.c.b16 %v737, %v736
    %v740 = vsel %vm276, %v719, 0
    %v743 = vsel %vm276, %v721, 0
    %v746 = vsel %vm276, %v723, 0
    %v749 = vsel %vm276, %v725, 0
    %v752 = vsel %vm276, %v727, 0
    %v755 = vsel %vm276, %v729, 0
    %v758 = vsel %vm276, %v731, 0
    %v761 = vsel %vm276, %v733, 0
    %v764 = vsel %vm301, %v738, 0
    %766 = vmatprep.subr.bf16.mxu0 0
    %767 = vmatpush1.bf16.msra.mxu0 0
    %768 = vmatprep.subr.bf16.mxu0 0
    %769 = vmatpush1.bf16.msra.mxu0 0
    %770 = vmatprep.subr.bf16.mxu0 0
    %771 = vmatpush1.bf16.msra.mxu0 0
    %772 = vmatprep.subr.bf16.mxu0 0
    %773 = vmatpush1.bf16.msra.mxu0 0
    %774 = vmatprep.subr.bf16.mxu0 0
    %775 = vmatpush1.bf16.msra.mxu0 0
    %776 = vmatprep.subr.bf16.mxu0 0
    %777 = vmatpush1.bf16.msra.mxu0 0
    %778 = vmatprep.subr.bf16.mxu0 0
    %779 = vmatpush1.bf16.msra.mxu0 0
    %780 = vmatprep.subr.bf16.mxu0 0
    %781 = vmatpush1.bf16.msra.mxu0 %v764
    %782 = vmatprep.subr.bf16.mxu0 0
    %783 = vmatpush2.bf16.msra.mxu0 0
    %784 = vmatprep.subr.bf16.mxu0 0
    %785 = vmatpush2.bf16.msra.mxu0 0
    %786 = vmatprep.subr.bf16.mxu0 0
    %787 = vmatpush2.bf16.msra.mxu0 0
    %788 = vmatprep.subr.bf16.mxu0 0
    %789 = vmatpush2.bf16.msra.mxu0 0
    %790 = vmatprep.subr.bf16.mxu0 0
    %791 = vmatpush2.bf16.msra.mxu0 0
    %792 = vmatprep.subr.bf16.mxu0 0
    %793 = vmatpush2.bf16.msra.mxu0 0
    %794 = vmatprep.subr.bf16.mxu0 0
    %795 = vmatpush2.bf16.msra.mxu0 0
    %796 = vmatprep.subr.bf16.mxu0 0
    %797 = vmatpush2.bf16.msra.mxu0 0
    %798 = vmatprep.mubr.bf16.mxu0 0
    %799 = vmatmul.mubr.bf16.gmra.mxu0 %v740
    %v800 = vpop.f32.mrf.mxu0
    %v801 = vadd.f32 %v651, %v800
    %v802 = vpop.f32.mrf.mxu0
    %v803 = vpop.f32.mrf.mxu0
    %v804 = vadd.f32 %v654, %v803
    %v805 = vpop.f32.mrf.mxu0
    %806 = vmatprep.mubr.bf16.mxu0 0
    %807 = vmatmul.mubr.bf16.gmra.mxu0 %v743
    %v808 = vpop.f32.mrf.mxu0
    %v809 = vadd.f32 %v659, %v808
    %v810 = vpop.f32.mrf.mxu0
    %v811 = vpop.f32.mrf.mxu0
    %v812 = vadd.f32 %v662, %v811
    %v813 = vpop.f32.mrf.mxu0
    %814 = vmatprep.mubr.bf16.mxu0 0
    %815 = vmatmul.mubr.bf16.gmra.mxu0 %v746
    %v816 = vpop.f32.mrf.mxu0
    %v817 = vadd.f32 %v667, %v816
    %v818 = vpop.f32.mrf.mxu0
    %v819 = vpop.f32.mrf.mxu0
    %v820 = vadd.f32 %v670, %v819
    %v821 = vpop.f32.mrf.mxu0
    %822 = vmatprep.mubr.bf16.mxu0 0
    %823 = vmatmul.mubr.bf16.gmra.mxu0 %v749
    %v824 = vpop.f32.mrf.mxu0
    %v825 = vadd.f32 %v675, %v824
    %v826 = vpop.f32.mrf.mxu0
    %v827 = vpop.f32.mrf.mxu0
    %v828 = vadd.f32 %v678, %v827
    %v829 = vpop.f32.mrf.mxu0
    %830 = vmatprep.mubr.bf16.mxu0 0
    %831 = vmatmul.mubr.bf16.gmra.mxu0 %v752
    %v832 = vpop.f32.mrf.mxu0
    %v833 = vadd.f32 %v683, %v832
    %v834 = vpop.f32.mrf.mxu0
    %v835 = vpop.f32.mrf.mxu0
    %v836 = vadd.f32 %v686, %v835
    %v837 = vpop.f32.mrf.mxu0
    %838 = vmatprep.mubr.bf16.mxu0 0
    %839 = vmatmul.mubr.bf16.gmra.mxu0 %v755
    %v840 = vpop.f32.mrf.mxu0
    %v841 = vadd.f32 %v691, %v840
    %v842 = vpop.f32.mrf.mxu0
    %v843 = vpop.f32.mrf.mxu0
    %v844 = vadd.f32 %v694, %v843
    %v845 = vpop.f32.mrf.mxu0
    %846 = vmatprep.mubr.bf16.mxu0 0
    %847 = vmatmul.mubr.bf16.gmra.mxu0 %v758
    %v848 = vpop.f32.mrf.mxu0
    %v849 = vadd.f32 %v699, %v848
    %v850 = vpop.f32.mrf.mxu0
    %v851 = vpop.f32.mrf.mxu0
    %v852 = vadd.f32 %v702, %v851
    %v853 = vpop.f32.mrf.mxu0
    %854 = vmatprep.mubr.bf16.mxu0 0
    %855 = vmatmul.mubr.bf16.gmra.mxu0 %v761
    %v856 = vpop.f32.mrf.mxu0
    %v857 = vadd.f32 %v707, %v856
    %v858 = vpop.f32.mrf.mxu0
    %v859 = vpop.f32.mrf.mxu0
    %v860 = vadd.f32 %v710, %v859
    %v861 = vpop.f32.mrf.mxu0
    %862 = vdwg.mxu0
    %v863 = vld [vmem:[#allocation2 + $0x40] sm:$0xf]
    %s864 = scalar_lea.vmem %s1, 32
    %v865 = vld [vmem:[%s864] sm:$0xf]
    %v866 = vld [vmem:[%s864 + $0x4] sm:$0x3]
    %v867 = vld [vmem:[#allocation2 + $0x4] sm:$0xf]
    %v868 = vld [vmem:[#allocation2 + $0x8] sm:$0xf]
    %v869 = vld [vmem:[#allocation2 + $0xc] sm:$0xf]
    %v870 = vld [vmem:[#allocation2 + $0x10] sm:$0xf]
    %v871 = vld [vmem:[#allocation2 + $0x14] sm:$0xf]
    %v872 = vld [vmem:[#allocation2 + $0x18] sm:$0xf]
    %v873 = vld [vmem:[#allocation2 + $0x1c] sm:$0xf]
    %v874 = vld [vmem:[#allocation2 + $0x20] sm:$0xf]
    %v875 = vld [vmem:[#allocation2 + $0x24] sm:$0xf]
    %v876 = vld [vmem:[#allocation2 + $0x28] sm:$0xf]
    %v877 = vld [vmem:[#allocation2 + $0x2c] sm:$0xf]
    %v878 = vld [vmem:[#allocation2 + $0x30] sm:$0xf]
    %v879 = vld [vmem:[#allocation2 + $0x34] sm:$0xf]
    %v880 = vld [vmem:[#allocation2 + $0x38] sm:$0xf]
    %v881 = vld [vmem:[#allocation2 + $0x3c] sm:$0xf]
    %v882 = vld [vmem:[#allocation2 + $0x44] sm:$0x1]
    %s883 = scalar_lea.vmem %s1, 40
    %v884 = vld [vmem:[%s883] sm:$0xf]
    %v885 = vld [vmem:[%s883 + $0x4] sm:$0x3]
    %v903 = vunpack.c.l.b16 %v867
    %v904 = vunpack.c.l.b16 %v868
    %v905 = vunpack.c.l.b16 %v869
    %v906 = vunpack.c.l.b16 %v870
    %v907 = vunpack.c.l.b16 %v871
    %v908 = vunpack.c.l.b16 %v872
    %v909 = vunpack.c.l.b16 %v873
    %v910 = vunpack.c.l.b16 %v874
    %v911 = vunpack.c.l.b16 %v875
    %v912 = vunpack.c.l.b16 %v876
    %v913 = vunpack.c.l.b16 %v877
    %v914 = vunpack.c.l.b16 %v878
    %v915 = vunpack.c.l.b16 %v879
    %v916 = vunpack.c.l.b16 %v880
    %v917 = vunpack.c.l.b16 %v881
    %v918 = vunpack.c.l.b16 %v863
    %v919 = vunpack.c.l.b16 %v882
    %v920 = vpack.c.b16 %v904, %v903
    %v921 = vpack.c.b16 %v906, %v905
    %v922 = vpack.c.b16 %v908, %v907
    %v923 = vpack.c.b16 %v910, %v909
    %v924 = vpack.c.b16 %v912, %v911
    %v925 = vpack.c.b16 %v914, %v913
    %v926 = vpack.c.b16 %v916, %v915
    %v927 = vpack.c.b16 %v918, %v917
    %v928 = vpack.c.b16 %v919, %v919
    %v930 = vshrl.u32 %v920, 16
    %v932 = vshll.u32 %v920, 16
    %v934 = vrot.slane %v932, 1
    %v935 = vor.u32 %v930, %v934
    %v937 = vshll.u32 %v921, 16
    %v939 = vrot.slane %v937, 1
    %v940 = vsel %vm202, %v935, %v939
    %v941 = vshrl.u32 %v921, 16
    %v943 = vor.u32 %v941, %v939
    %v945 = vshll.u32 %v922, 16
    %v947 = vrot.slane %v945, 1
    %v948 = vsel %vm202, %v943, %v947
    %v949 = vshrl.u32 %v922, 16
    %v951 = vor.u32 %v949, %v947
    %v953 = vshll.u32 %v923, 16
    %v955 = vrot.slane %v953, 1
    %v956 = vsel %vm202, %v951, %v955
    %v957 = vshrl.u32 %v923, 16
    %v959 = vor.u32 %v957, %v955
    %v961 = vshll.u32 %v924, 16
    %v963 = vrot.slane %v961, 1
    %v964 = vsel %vm202, %v959, %v963
    %v965 = vshrl.u32 %v924, 16
    %v967 = vor.u32 %v965, %v963
    %v969 = vshll.u32 %v925, 16
    %v971 = vrot.slane %v969, 1
    %v972 = vsel %vm202, %v967, %v971
    %v973 = vshrl.u32 %v925, 16
    %v975 = vor.u32 %v973, %v971
    %v977 = vshll.u32 %v926, 16
    %v979 = vrot.slane %v977, 1
    %v980 = vsel %vm202, %v975, %v979
    %v981 = vshrl.u32 %v926, 16
    %v983 = vor.u32 %v981, %v979
    %v985 = vshll.u32 %v927, 16
    %v987 = vrot.slane %v985, 1
    %v988 = vsel %vm202, %v983, %v987
    %v989 = vshrl.u32 %v927, 16
    %v991 = vor.u32 %v989, %v987
    %v993 = vshll.u32 %v928, 16
    %v995 = vrot.slane %v993, 1
    %v996 = vsel %vm202, %v991, %v995
    %v999 = vunpack.c.l.b16 %v884
    %v1000 = vunpack.c.l.b16 %v885
    %v1001 = vpack.c.b16 %v1000, %v999
    %v1003 = vsel %vm276, %v940, 0
    %v1006 = vsel %vm276, %v948, 0
    %v1009 = vsel %vm276, %v956, 0
    %v1012 = vsel %vm276, %v964, 0
    %v1015 = vsel %vm276, %v972, 0
    %v1018 = vsel %vm276, %v980, 0
    %v1021 = vsel %vm276, %v988, 0
    %v1024 = vsel %vm276, %v996, 0
    %v1027 = vsel %vm301, %v1001, 0
    %1029 = vmatprep.subr.bf16.mxu0 0
    %1030 = vmatpush1.bf16.msra.mxu0 0
    %1031 = vmatprep.subr.bf16.mxu0 0
    %1032 = vmatpush1.bf16.msra.mxu0 0
    %1033 = vmatprep.subr.bf16.mxu0 0
    %1034 = vmatpush1.bf16.msra.mxu0 0
    %1035 = vmatprep.subr.bf16.mxu0 0
    %1036 = vmatpush1.bf16.msra.mxu0 0
    %1037 = vmatprep.subr.bf16.mxu0 0
    %1038 = vmatpush1.bf16.msra.mxu0 0
    %1039 = vmatprep.subr.bf16.mxu0 0
    %1040 = vmatpush1.bf16.msra.mxu0 0
    %1041 = vmatprep.subr.bf16.mxu0 0
    %1042 = vmatpush1.bf16.msra.mxu0 0
    %1043 = vmatprep.subr.bf16.mxu0 0
    %1044 = vmatpush1.bf16.msra.mxu0 %v1027
    %1045 = vmatprep.subr.bf16.mxu0 0
    %1046 = vmatpush2.bf16.msra.mxu0 0
    %1047 = vmatprep.subr.bf16.mxu0 0
    %1048 = vmatpush2.bf16.msra.mxu0 0
    %1049 = vmatprep.subr.bf16.mxu0 0
    %1050 = vmatpush2.bf16.msra.mxu0 0
    %1051 = vmatprep.subr.bf16.mxu0 0
    %1052 = vmatpush2.bf16.msra.mxu0 0
    %1053 = vmatprep.subr.bf16.mxu0 0
    %1054 = vmatpush2.bf16.msra.mxu0 0
    %1055 = vmatprep.subr.bf16.mxu0 0
    %1056 = vmatpush2.bf16.msra.mxu0 0
    %1057 = vmatprep.subr.bf16.mxu0 0
    %1058 = vmatpush2.bf16.msra.mxu0 0
    %1059 = vmatprep.subr.bf16.mxu0 0
    %1060 = vmatpush2.bf16.msra.mxu0 0
    %1061 = vmatprep.mubr.bf16.mxu0 0
    %1062 = vmatmul.mubr.bf16.gmra.mxu0 %v1003
    %v1063 = vpop.f32.mrf.mxu0
    %v1064 = vadd.f32 0.0, %v1063
    %v1065 = vpop.f32.mrf.mxu0
    %v1066 = vpop.f32.mrf.mxu0
    %v1067 = vadd.f32 0.0, %v1066
    %v1068 = vpop.f32.mrf.mxu0
    %1069 = vmatprep.mubr.bf16.mxu0 0
    %1070 = vmatmul.mubr.bf16.gmra.mxu0 %v1006
    %v1071 = vpop.f32.mrf.mxu0
    %v1072 = vadd.f32 0.0, %v1071
    %v1073 = vpop.f32.mrf.mxu0
    %v1074 = vpop.f32.mrf.mxu0
    %v1075 = vadd.f32 0.0, %v1074
    %v1076 = vpop.f32.mrf.mxu0
    %1077 = vmatprep.mubr.bf16.mxu0 0
    %1078 = vmatmul.mubr.bf16.gmra.mxu0 %v1009
    %v1079 = vpop.f32.mrf.mxu0
    %v1080 = vadd.f32 0.0, %v1079
    %v1081 = vpop.f32.mrf.mxu0
    %v1082 = vpop.f32.mrf.mxu0
    %v1083 = vadd.f32 0.0, %v1082
    %v1084 = vpop.f32.mrf.mxu0
    %1085 = vmatprep.mubr.bf16.mxu0 0
    %1086 = vmatmul.mubr.bf16.gmra.mxu0 %v1012
    %v1087 = vpop.f32.mrf.mxu0
    %v1088 = vadd.f32 0.0, %v1087
    %v1089 = vpop.f32.mrf.mxu0
    %v1090 = vpop.f32.mrf.mxu0
    %v1091 = vadd.f32 0.0, %v1090
    %v1092 = vpop.f32.mrf.mxu0
    %1093 = vmatprep.mubr.bf16.mxu0 0
    %1094 = vmatmul.mubr.bf16.gmra.mxu0 %v1015
    %v1095 = vpop.f32.mrf.mxu0
    %v1096 = vadd.f32 0.0, %v1095
    %v1097 = vpop.f32.mrf.mxu0
    %v1098 = vpop.f32.mrf.mxu0
    %v1099 = vadd.f32 0.0, %v1098
    %v1100 = vpop.f32.mrf.mxu0
    %1101 = vmatprep.mubr.bf16.mxu0 0
    %1102 = vmatmul.mubr.bf16.gmra.mxu0 %v1018
    %v1103 = vpop.f32.mrf.mxu0
    %v1104 = vadd.f32 0.0, %v1103
    %v1105 = vpop.f32.mrf.mxu0
    %v1106 = vpop.f32.mrf.mxu0
    %v1107 = vadd.f32 0.0, %v1106
    %v1108 = vpop.f32.mrf.mxu0
    %1109 = vmatprep.mubr.bf16.mxu0 0
    %1110 = vmatmul.mubr.bf16.gmra.mxu0 %v1021
    %v1111 = vpop.f32.mrf.mxu0
    %v1112 = vadd.f32 0.0, %v1111
    %v1113 = vpop.f32.mrf.mxu0
    %v1114 = vpop.f32.mrf.mxu0
    %v1115 = vadd.f32 0.0, %v1114
    %v1116 = vpop.f32.mrf.mxu0
    %1117 = vmatprep.mubr.bf16.mxu0 0
    %1118 = vmatmul.mubr.bf16.gmra.mxu0 %v1024
    %v1119 = vpop.f32.mrf.mxu0
    %v1120 = vadd.f32 0.0, %v1119
    %v1121 = vpop.f32.mrf.mxu0
    %v1122 = vpop.f32.mrf.mxu0
    %v1123 = vadd.f32 0.0, %v1122
    %v1124 = vpop.f32.mrf.mxu0
    %1125 = vdwg.mxu0
    %v1126 = vpack.c.b16 %v178, %v177
    %v1127 = vpack.c.b16 %v180, %v179
    %v1128 = vpack.c.b16 %v182, %v181
    %v1129 = vpack.c.b16 %v184, %v183
    %v1130 = vpack.c.b16 %v186, %v185
    %v1131 = vpack.c.b16 %v188, %v187
    %v1132 = vpack.c.b16 %v190, %v189
    %v1133 = vpack.c.b16 %v918, %v191
    %v1136 = vunpack.c.l.b16 %v865
    %v1137 = vunpack.c.l.b16 %v866
    %v1138 = vpack.c.b16 %v1137, %v1136
    %v1140 = vsel %vm276, %v1126, 0
    %v1143 = vsel %vm276, %v1127, 0
    %v1146 = vsel %vm276, %v1128, 0
    %v1149 = vsel %vm276, %v1129, 0
    %v1152 = vsel %vm276, %v1130, 0
    %v1155 = vsel %vm276, %v1131, 0
    %v1158 = vsel %vm276, %v1132, 0
    %v1161 = vsel %vm276, %v1133, 0
    %v1164 = vsel %vm301, %v1138, 0
    %1166 = vmatprep.subr.bf16.mxu0 0
    %1167 = vmatpush1.bf16.msra.mxu0 0
    %1168 = vmatprep.subr.bf16.mxu0 0
    %1169 = vmatpush1.bf16.msra.mxu0 0
    %1170 = vmatprep.subr.bf16.mxu0 0
    %1171 = vmatpush1.bf16.msra.mxu0 0
    %1172 = vmatprep.subr.bf16.mxu0 0
    %1173 = vmatpush1.bf16.msra.mxu0 0
    %1174 = vmatprep.subr.bf16.mxu0 0
    %1175 = vmatpush1.bf16.msra.mxu0 0
    %1176 = vmatprep.subr.bf16.mxu0 0
    %1177 = vmatpush1.bf16.msra.mxu0 0
    %1178 = vmatprep.subr.bf16.mxu0 0
    %1179 = vmatpush1.bf16.msra.mxu0 0
    %1180 = vmatprep.subr.bf16.mxu0 0
    %1181 = vmatpush1.bf16.msra.mxu0 %v1164
    %1182 = vmatprep.subr.bf16.mxu0 0
    %1183 = vmatpush2.bf16.msra.mxu0 0
    %1184 = vmatprep.subr.bf16.mxu0 0
    %1185 = vmatpush2.bf16.msra.mxu0 0
    %1186 = vmatprep.subr.bf16.mxu0 0
    %1187 = vmatpush2.bf16.msra.mxu0 0
    %1188 = vmatprep.subr.bf16.mxu0 0
    %1189 = vmatpush2.bf16.msra.mxu0 0
    %1190 = vmatprep.subr.bf16.mxu0 0
    %1191 = vmatpush2.bf16.msra.mxu0 0
    %1192 = vmatprep.subr.bf16.mxu0 0
    %1193 = vmatpush2.bf16.msra.mxu0 0
    %1194 = vmatprep.subr.bf16.mxu0 0
    %1195 = vmatpush2.bf16.msra.mxu0 0
    %1196 = vmatprep.subr.bf16.mxu0 0
    %1197 = vmatpush2.bf16.msra.mxu0 0
    %1198 = vmatprep.mubr.bf16.mxu0 0
    %1199 = vmatmul.mubr.bf16.gmra.mxu0 %v1140
    %v1200 = vpop.f32.mrf.mxu0
    %v1201 = vadd.f32 %v1064, %v1200
    %v1202 = vpop.f32.mrf.mxu0
    %v1203 = vpop.f32.mrf.mxu0
    %v1204 = vadd.f32 %v1067, %v1203
    %v1205 = vpop.f32.mrf.mxu0
    %1206 = vmatprep.mubr.bf16.mxu0 0
    %1207 = vmatmul.mubr.bf16.gmra.mxu0 %v1143
    %v1208 = vpop.f32.mrf.mxu0
    %v1209 = vadd.f32 %v1072, %v1208
    %v1210 = vpop.f32.mrf.mxu0
    %v1211 = vpop.f32.mrf.mxu0
    %v1212 = vadd.f32 %v1075, %v1211
    %v1213 = vpop.f32.mrf.mxu0
    %1214 = vmatprep.mubr.bf16.mxu0 0
    %1215 = vmatmul.mubr.bf16.gmra.mxu0 %v1146
    %v1216 = vpop.f32.mrf.mxu0
    %v1217 = vadd.f32 %v1080, %v1216
    %v1218 = vpop.f32.mrf.mxu0
    %v1219 = vpop.f32.mrf.mxu0
    %v1220 = vadd.f32 %v1083, %v1219
    %v1221 = vpop.f32.mrf.mxu0
    %1222 = vmatprep.mubr.bf16.mxu0 0
    %1223 = vmatmul.mubr.bf16.gmra.mxu0 %v1149
    %v1224 = vpop.f32.mrf.mxu0
    %v1225 = vadd.f32 %v1088, %v1224
    %v1226 = vpop.f32.mrf.mxu0
    %v1227 = vpop.f32.mrf.mxu0
    %v1228 = vadd.f32 %v1091, %v1227
    %v1229 = vpop.f32.mrf.mxu0
    %1230 = vmatprep.mubr.bf16.mxu0 0
    %1231 = vmatmul.mubr.bf16.gmra.mxu0 %v1152
    %v1232 = vpop.f32.mrf.mxu0
    %v1233 = vadd.f32 %v1096, %v1232
    %v1234 = vpop.f32.mrf.mxu0
    %v1235 = vpop.f32.mrf.mxu0
    %v1236 = vadd.f32 %v1099, %v1235
    %v1237 = vpop.f32.mrf.mxu0
    %1238 = vmatprep.mubr.bf16.mxu0 0
    %1239 = vmatmul.mubr.bf16.gmra.mxu0 %v1155
    %v1240 = vpop.f32.mrf.mxu0
    %v1241 = vadd.f32 %v1104, %v1240
    %v1242 = vpop.f32.mrf.mxu0
    %v1243 = vpop.f32.mrf.mxu0
    %v1244 = vadd.f32 %v1107, %v1243
    %v1245 = vpop.f32.mrf.mxu0
    %1246 = vmatprep.mubr.bf16.mxu0 0
    %1247 = vmatmul.mubr.bf16.gmra.mxu0 %v1158
    %v1248 = vpop.f32.mrf.mxu0
    %v1249 = vadd.f32 %v1112, %v1248
    %v1250 = vpop.f32.mrf.mxu0
    %v1251 = vpop.f32.mrf.mxu0
    %v1252 = vadd.f32 %v1115, %v1251
    %v1253 = vpop.f32.mrf.mxu0
    %1254 = vmatprep.mubr.bf16.mxu0 0
    %1255 = vmatmul.mubr.bf16.gmra.mxu0 %v1161
    %v1256 = vpop.f32.mrf.mxu0
    %v1257 = vadd.f32 %v1120, %v1256
    %v1258 = vpop.f32.mrf.mxu0
    %v1259 = vpop.f32.mrf.mxu0
    %v1260 = vadd.f32 %v1123, %v1259
    %v1261 = vpop.f32.mrf.mxu0
    %1262 = vdwg.mxu0
    %v1263 = vadd.f32 %v801, %v1201
    %v1264 = vadd.f32 %v804, %v1204
    %v1265 = vadd.f32 %v809, %v1209
    %v1266 = vadd.f32 %v812, %v1212
    %v1267 = vadd.f32 %v817, %v1217
    %v1268 = vadd.f32 %v820, %v1220
    %v1269 = vadd.f32 %v825, %v1225
    %v1270 = vadd.f32 %v828, %v1228
    %v1271 = vadd.f32 %v833, %v1233
    %v1272 = vadd.f32 %v836, %v1236
    %v1273 = vadd.f32 %v841, %v1241
    %v1274 = vadd.f32 %v844, %v1244
    %v1275 = vadd.f32 %v849, %v1249
    %v1276 = vadd.f32 %v852, %v1252
    %v1277 = vadd.f32 %v857, %v1257
    %v1278 = vadd.f32 %v860, %v1260
    %v1279 = vadd.f32 %v461, %v1263
    %v1280 = vadd.f32 %v464, %v1264
    %v1281 = vadd.f32 %v469, %v1265
    %v1282 = vadd.f32 %v472, %v1266
    %v1283 = vadd.f32 %v477, %v1267
    %v1284 = vadd.f32 %v480, %v1268
    %v1285 = vadd.f32 %v485, %v1269
    %v1286 = vadd.f32 %v488, %v1270
    %v1287 = vadd.f32 %v493, %v1271
    %v1288 = vadd.f32 %v496, %v1272
    %v1289 = vadd.f32 %v501, %v1273
    %v1290 = vadd.f32 %v504, %v1274
    %v1291 = vadd.f32 %v509, %v1275
    %v1292 = vadd.f32 %v512, %v1276
    %v1293 = vadd.f32 %v517, %v1277
    %v1294 = vadd.f32 %v520, %v1278
    %v1295 = vld [vmem:[%s2] sm:$0x1]
    %v1297 = vlaneseq
    %v1298 = vshrl.u32 %v1297, 7
    %v1299 = vsub.s32 0, %v1298
    %v1300 = vrot.slane %v1295, %v1299
    %v1302 = vadd.f32 %v1279, %v1300
    %v1303 = vadd.f32 %v1280, %v1300
    %v1304 = vadd.f32 %v1281, %v1300
    %v1305 = vadd.f32 %v1282, %v1300
    %v1306 = vadd.f32 %v1283, %v1300
    %v1307 = vadd.f32 %v1284, %v1300
    %v1308 = vadd.f32 %v1285, %v1300
    %v1309 = vadd.f32 %v1286, %v1300
    %v1310 = vadd.f32 %v1287, %v1300
    %v1311 = vadd.f32 %v1288, %v1300
    %v1312 = vadd.f32 %v1289, %v1300
    %v1313 = vadd.f32 %v1290, %v1300
    %v1314 = vadd.f32 %v1291, %v1300
    %v1315 = vadd.f32 %v1292, %v1300
    %v1316 = vadd.f32 %v1293, %v1300
    %v1317 = vadd.f32 %v1294, %v1300
    %v1318 = vmax.f32 %v1302, 0.0
    %v1319 = vmax.f32 %v1303, 0.0
    %v1320 = vmax.f32 %v1304, 0.0
    %v1321 = vmax.f32 %v1305, 0.0
    %v1322 = vmax.f32 %v1306, 0.0
    %v1323 = vmax.f32 %v1307, 0.0
    %v1324 = vmax.f32 %v1308, 0.0
    %v1325 = vmax.f32 %v1309, 0.0
    %v1326 = vmax.f32 %v1310, 0.0
    %v1327 = vmax.f32 %v1311, 0.0
    %v1328 = vmax.f32 %v1312, 0.0
    %v1329 = vmax.f32 %v1313, 0.0
    %v1330 = vmax.f32 %v1314, 0.0
    %v1331 = vmax.f32 %v1315, 0.0
    %v1332 = vmax.f32 %v1316, 0.0
    %v1333 = vmax.f32 %v1317, 0.0
    %v1334 = vpack.c.bf16 %v1319, %v1318
    %v1335 = vpack.c.bf16 %v1321, %v1320
    %v1336 = vpack.c.bf16 %v1323, %v1322
    %v1337 = vpack.c.bf16 %v1325, %v1324
    %v1338 = vpack.c.bf16 %v1327, %v1326
    %v1339 = vpack.c.bf16 %v1329, %v1328
    %v1340 = vpack.c.bf16 %v1331, %v1330
    %v1341 = vpack.c.bf16 %v1333, %v1332
    %v1350 = vunpack.c.l.b16 %v1334
    %v1351 = vunpack.c.h.b16 %v1334
    %v1352 = vunpack.c.l.b16 %v1335
    %v1353 = vunpack.c.h.b16 %v1335
    %v1354 = vunpack.c.l.b16 %v1336
    %v1355 = vunpack.c.h.b16 %v1336
    %v1356 = vunpack.c.l.b16 %v1337
    %v1357 = vunpack.c.h.b16 %v1337
    %v1358 = vunpack.c.l.b16 %v1338
    %v1359 = vunpack.c.h.b16 %v1338
    %v1360 = vunpack.c.l.b16 %v1339
    %v1361 = vunpack.c.h.b16 %v1339
    %v1362 = vunpack.c.l.b16 %v1340
    %v1363 = vunpack.c.h.b16 %v1340
    %v1364 = vunpack.c.l.b16 %v1341
    %v1365 = vunpack.c.h.b16 %v1341
    %v1366 = vpack.c.b16 %v1350, %v1350
    %v1367 = vpack.c.b16 %v1351, %v1351
    %v1368 = vpack.c.b16 %v1352, %v1352
    %v1369 = vpack.c.b16 %v1353, %v1353
    %v1370 = vpack.c.b16 %v1354, %v1354
    %v1371 = vpack.c.b16 %v1355, %v1355
    %v1372 = vpack.c.b16 %v1356, %v1356
    %v1373 = vpack.c.b16 %v1357, %v1357
    %v1374 = vpack.c.b16 %v1358, %v1358
    %v1375 = vpack.c.b16 %v1359, %v1359
    %v1376 = vpack.c.b16 %v1360, %v1360
    %v1377 = vpack.c.b16 %v1361, %v1361
    %v1378 = vpack.c.b16 %v1362, %v1362
    %v1379 = vpack.c.b16 %v1363, %v1363
    %v1380 = vpack.c.b16 %v1364, %v1364
    %v1381 = vpack.c.b16 %v1365, %v1365
    %1398 = vst [vmem:[#allocation3] sm:$0xf] %v1366
    %1399 = vst [vmem:[#allocation3 + $0x4] sm:$0xf] %v1367
    %1400 = vst [vmem:[#allocation3 + $0x8] sm:$0xf] %v1368
    %1401 = vst [vmem:[#allocation3 + $0xc] sm:$0xf] %v1369
    %1402 = vst [vmem:[#allocation3 + $0x10] sm:$0xf] %v1370
    %1403 = vst [vmem:[#allocation3 + $0x14] sm:$0xf] %v1371
    %1404 = vst [vmem:[#allocation3 + $0x18] sm:$0xf] %v1372
    %1405 = vst [vmem:[#allocation3 + $0x1c] sm:$0xf] %v1373
    %1406 = vst [vmem:[#allocation3 + $0x20] sm:$0xf] %v1374
    %1407 = vst [vmem:[#allocation3 + $0x24] sm:$0xf] %v1375
    %1408 = vst [vmem:[#allocation3 + $0x28] sm:$0xf] %v1376
    %1409 = vst [vmem:[#allocation3 + $0x2c] sm:$0xf] %v1377
    %1410 = vst [vmem:[#allocation3 + $0x30] sm:$0xf] %v1378
    %1411 = vst [vmem:[#allocation3 + $0x34] sm:$0xf] %v1379
    %1412 = vst [vmem:[#allocation3 + $0x38] sm:$0xf] %v1380
    %1413 = vst [vmem:[#allocation3 + $0x3c] sm:$0xf] %v1381
    %v1414 = vld [vmem:[#allocation3] sm:$0xf]
    %v1415 = vld [vmem:[#allocation3 + $0x4] sm:$0xf]
    %v1416 = vld [vmem:[#allocation3 + $0x8] sm:$0xf]
    %v1417 = vld [vmem:[#allocation3 + $0xc] sm:$0xf]
    %v1418 = vld [vmem:[#allocation3 + $0x10] sm:$0xf]
    %v1419 = vld [vmem:[#allocation3 + $0x14] sm:$0xf]
    %v1420 = vld [vmem:[#allocation3 + $0x18] sm:$0xf]
    %v1421 = vld [vmem:[#allocation3 + $0x1c] sm:$0xf]
    %v1422 = vld [vmem:[#allocation3 + $0x20] sm:$0xf]
    %v1423 = vld [vmem:[#allocation3 + $0x24] sm:$0xf]
    %v1424 = vld [vmem:[#allocation3 + $0x28] sm:$0xf]
    %v1425 = vld [vmem:[#allocation3 + $0x2c] sm:$0xf]
    %v1426 = vld [vmem:[#allocation3 + $0x30] sm:$0xf]
    %v1427 = vld [vmem:[#allocation3 + $0x34] sm:$0xf]
    %v1428 = vld [vmem:[#allocation3 + $0x38] sm:$0xf]
    %v1429 = vld [vmem:[#allocation3 + $0x3c] sm:$0xf]
    %v1430 = vld [vmem:[%s3] sm:$0xf]
    %v1431 = vld [vmem:[%s3 + $0x4] sm:$0xf]
    %v1432 = vld [vmem:[%s3 + $0x8] sm:$0xf]
    %v1433 = vld [vmem:[%s3 + $0xc] sm:$0xf]
    %v1434 = vld [vmem:[%s3 + $0x10] sm:$0xf]
    %v1435 = vld [vmem:[%s3 + $0x14] sm:$0xf]
    %v1436 = vld [vmem:[%s3 + $0x18] sm:$0xf]
    %v1437 = vld [vmem:[%s3 + $0x1c] sm:$0xf]
    %v1438 = vld [vmem:[%s3 + $0x20] sm:$0xf]
    %v1439 = vld [vmem:[%s3 + $0x24] sm:$0xf]
    %v1440 = vld [vmem:[%s3 + $0x28] sm:$0xf]
    %v1441 = vld [vmem:[%s3 + $0x2c] sm:$0xf]
    %v1442 = vld [vmem:[%s3 + $0x30] sm:$0xf]
    %v1443 = vld [vmem:[%s3 + $0x34] sm:$0xf]
    %v1444 = vld [vmem:[%s3 + $0x38] sm:$0xf]
    %v1445 = vld [vmem:[%s3 + $0x3c] sm:$0xf]
    %v1446 = vld [vmem:[#allocation3 + $0x40] sm:$0x1]
    %s1447 = scalar_lea.vmem %s3, 64
    %v1448 = vld [vmem:[%s1447] sm:$0xf]
    %v1449 = vld [vmem:[%s1447 + $0x4] sm:$0xf]
    %v1450 = vld [vmem:[%s1447 + $0x8] sm:$0xf]
    %v1451 = vld [vmem:[%s1447 + $0xc] sm:$0xf]
    %v1452 = vld [vmem:[%s1447 + $0x10] sm:$0xf]
    %v1453 = vld [vmem:[%s1447 + $0x14] sm:$0xf]
    %v1454 = vld [vmem:[%s1447 + $0x18] sm:$0xf]
    %v1455 = vld [vmem:[%s1447 + $0x1c] sm:$0xf]
    %v1456 = vld [vmem:[%s1447 + $0x20] sm:$0xf]
    %v1457 = vld [vmem:[%s1447 + $0x24] sm:$0xf]
    %v1458 = vld [vmem:[%s1447 + $0x28] sm:$0xf]
    %v1459 = vld [vmem:[%s1447 + $0x2c] sm:$0xf]
    %v1460 = vld [vmem:[%s1447 + $0x30] sm:$0xf]
    %v1461 = vld [vmem:[%s1447 + $0x34] sm:$0xf]
    %v1462 = vld [vmem:[%s1447 + $0x38] sm:$0xf]
    %v1463 = vld [vmem:[%s1447 + $0x3c] sm:$0xf]
    %v1481 = vunpack.c.l.b16 %v1414
    %v1482 = vunpack.c.l.b16 %v1415
    %v1483 = vunpack.c.l.b16 %v1416
    %v1484 = vunpack.c.l.b16 %v1417
    %v1485 = vunpack.c.l.b16 %v1418
    %v1486 = vunpack.c.l.b16 %v1419
    %v1487 = vunpack.c.l.b16 %v1420
    %v1488 = vunpack.c.l.b16 %v1421
    %v1489 = vunpack.c.l.b16 %v1422
    %v1490 = vunpack.c.l.b16 %v1423
    %v1491 = vunpack.c.l.b16 %v1424
    %v1492 = vunpack.c.l.b16 %v1425
    %v1493 = vunpack.c.l.b16 %v1426
    %v1494 = vunpack.c.l.b16 %v1427
    %v1495 = vunpack.c.l.b16 %v1428
    %v1496 = vunpack.c.l.b16 %v1429
    %v1497 = vunpack.c.l.b16 %v1446
    %v1498 = vpack.c.b16 %v1482, %v1481
    %v1499 = vpack.c.b16 %v1484, %v1483
    %v1500 = vpack.c.b16 %v1486, %v1485
    %v1501 = vpack.c.b16 %v1488, %v1487
    %v1502 = vpack.c.b16 %v1490, %v1489
    %v1503 = vpack.c.b16 %v1492, %v1491
    %v1504 = vpack.c.b16 %v1494, %v1493
    %v1505 = vpack.c.b16 %v1496, %v1495
    %v1506 = vpack.c.b16 %v1497, %v1497
    %v1508 = vshrl.u32 %v1498, 16
    %v1510 = vshll.u32 %v1498, 16
    %v1512 = vrot.slane %v1510, 1
    %v1513 = vor.u32 %v1508, %v1512
    %v1515 = vshll.u32 %v1499, 16
    %v1517 = vrot.slane %v1515, 1
    %v1518 = vsel %vm202, %v1513, %v1517
    %v1519 = vshrl.u32 %v1499, 16
    %v1521 = vor.u32 %v1519, %v1517
    %v1523 = vshll.u32 %v1500, 16
    %v1525 = vrot.slane %v1523, 1
    %v1526 = vsel %vm202, %v1521, %v1525
    %v1527 = vshrl.u32 %v1500, 16
    %v1529 = vor.u32 %v1527, %v1525
    %v1531 = vshll.u32 %v1501, 16
    %v1533 = vrot.slane %v1531, 1
    %v1534 = vsel %vm202, %v1529, %v1533
    %v1535 = vshrl.u32 %v1501, 16
    %v1537 = vor.u32 %v1535, %v1533
    %v1539 = vshll.u32 %v1502, 16
    %v1541 = vrot.slane %v1539, 1
    %v1542 = vsel %vm202, %v1537, %v1541
    %v1543 = vshrl.u32 %v1502, 16
    %v1545 = vor.u32 %v1543, %v1541
    %v1547 = vshll.u32 %v1503, 16
    %v1549 = vrot.slane %v1547, 1
    %v1550 = vsel %vm202, %v1545, %v1549
    %v1551 = vshrl.u32 %v1503, 16
    %v1553 = vor.u32 %v1551, %v1549
    %v1555 = vshll.u32 %v1504, 16
    %v1557 = vrot.slane %v1555, 1
    %v1558 = vsel %vm202, %v1553, %v1557
    %v1559 = vshrl.u32 %v1504, 16
    %v1561 = vor.u32 %v1559, %v1557
    %v1563 = vshll.u32 %v1505, 16
    %v1565 = vrot.slane %v1563, 1
    %v1566 = vsel %vm202, %v1561, %v1565
    %v1567 = vshrl.u32 %v1505, 16
    %v1569 = vor.u32 %v1567, %v1565
    %v1571 = vshll.u32 %v1506, 16
    %v1573 = vrot.slane %v1571, 1
    %v1574 = vsel %vm202, %v1569, %v1573
    %v1599 = vunpack.c.l.b16 %v1448
    %v1600 = vunpack.c.l.b16 %v1449
    %v1601 = vunpack.c.l.b16 %v1450
    %v1602 = vunpack.c.l.b16 %v1451
    %v1603 = vunpack.c.l.b16 %v1452
    %v1604 = vunpack.c.l.b16 %v1453
    %v1605 = vunpack.c.l.b16 %v1454
    %v1606 = vunpack.c.l.b16 %v1455
    %v1607 = vunpack.c.l.b16 %v1456
    %v1608 = vunpack.c.l.b16 %v1457
    %v1609 = vunpack.c.l.b16 %v1458
    %v1610 = vunpack.c.l.b16 %v1459
    %v1611 = vunpack.c.l.b16 %v1460
    %v1612 = vunpack.c.l.b16 %v1461
    %v1613 = vunpack.c.l.b16 %v1462
    %v1614 = vunpack.c.l.b16 %v1463
    %v1615 = vpack.c.b16 %v1600, %v1599
    %v1616 = vpack.c.b16 %v1602, %v1601
    %v1617 = vpack.c.b16 %v1604, %v1603
    %v1618 = vpack.c.b16 %v1606, %v1605
    %v1619 = vpack.c.b16 %v1608, %v1607
    %v1620 = vpack.c.b16 %v1610, %v1609
    %v1621 = vpack.c.b16 %v1612, %v1611
    %v1622 = vpack.c.b16 %v1614, %v1613
    %1631 = vmatprep.subr.bf16.mxu0 0
    %1632 = vmatpush1.bf16.msra.mxu0 %v1622
    %1633 = vmatprep.subr.bf16.mxu0 0
    %1634 = vmatpush1.bf16.msra.mxu0 %v1621
    %1635 = vmatprep.subr.bf16.mxu0 0
    %1636 = vmatpush1.bf16.msra.mxu0 %v1620
    %1637 = vmatprep.subr.bf16.mxu0 0
    %1638 = vmatpush1.bf16.msra.mxu0 %v1619
    %1639 = vmatprep.subr.bf16.mxu0 0
    %1640 = vmatpush1.bf16.msra.mxu0 %v1618
    %1641 = vmatprep.subr.bf16.mxu0 0
    %1642 = vmatpush1.bf16.msra.mxu0 %v1617
    %1643 = vmatprep.subr.bf16.mxu0 0
    %1644 = vmatpush1.bf16.msra.mxu0 %v1616
    %1645 = vmatprep.subr.bf16.mxu0 0
    %1646 = vmatpush1.bf16.msra.mxu0 %v1615
    %1647 = vmatprep.subr.bf16.mxu0 0
    %1648 = vmatpush2.bf16.msra.mxu0 0
    %1649 = vmatprep.subr.bf16.mxu0 0
    %1650 = vmatpush2.bf16.msra.mxu0 0
    %1651 = vmatprep.subr.bf16.mxu0 0
    %1652 = vmatpush2.bf16.msra.mxu0 0
    %1653 = vmatprep.subr.bf16.mxu0 0
    %1654 = vmatpush2.bf16.msra.mxu0 0
    %1655 = vmatprep.subr.bf16.mxu0 0
    %1656 = vmatpush2.bf16.msra.mxu0 0
    %1657 = vmatprep.subr.bf16.mxu0 0
    %1658 = vmatpush2.bf16.msra.mxu0 0
    %1659 = vmatprep.subr.bf16.mxu0 0
    %1660 = vmatpush2.bf16.msra.mxu0 0
    %1661 = vmatprep.subr.bf16.mxu0 0
    %1662 = vmatpush2.bf16.msra.mxu0 0
    %1663 = vmatprep.mubr.bf16.mxu0 0
    %1664 = vmatmul.mubr.bf16.gmra.mxu0 %v1518
    %v1665 = vpop.f32.mrf.mxu0
    %v1666 = vadd.f32 0.0, %v1665
    %v1667 = vpop.f32.mrf.mxu0
    %v1668 = vpop.f32.mrf.mxu0
    %v1669 = vadd.f32 0.0, %v1668
    %v1670 = vpop.f32.mrf.mxu0
    %1671 = vmatprep.mubr.bf16.mxu0 0
    %1672 = vmatmul.mubr.bf16.gmra.mxu0 %v1526
    %v1673 = vpop.f32.mrf.mxu0
    %v1674 = vadd.f32 0.0, %v1673
    %v1675 = vpop.f32.mrf.mxu0
    %v1676 = vpop.f32.mrf.mxu0
    %v1677 = vadd.f32 0.0, %v1676
    %v1678 = vpop.f32.mrf.mxu0
    %1679 = vmatprep.mubr.bf16.mxu0 0
    %1680 = vmatmul.mubr.bf16.gmra.mxu0 %v1534
    %v1681 = vpop.f32.mrf.mxu0
    %v1682 = vadd.f32 0.0, %v1681
    %v1683 = vpop.f32.mrf.mxu0
    %v1684 = vpop.f32.mrf.mxu0
    %v1685 = vadd.f32 0.0, %v1684
    %v1686 = vpop.f32.mrf.mxu0
    %1687 = vmatprep.mubr.bf16.mxu0 0
    %1688 = vmatmul.mubr.bf16.gmra.mxu0 %v1542
    %v1689 = vpop.f32.mrf.mxu0
    %v1690 = vadd.f32 0.0, %v1689
    %v1691 = vpop.f32.mrf.mxu0
    %v1692 = vpop.f32.mrf.mxu0
    %v1693 = vadd.f32 0.0, %v1692
    %v1694 = vpop.f32.mrf.mxu0
    %1695 = vmatprep.mubr.bf16.mxu0 0
    %1696 = vmatmul.mubr.bf16.gmra.mxu0 %v1550
    %v1697 = vpop.f32.mrf.mxu0
    %v1698 = vadd.f32 0.0, %v1697
    %v1699 = vpop.f32.mrf.mxu0
    %v1700 = vpop.f32.mrf.mxu0
    %v1701 = vadd.f32 0.0, %v1700
    %v1702 = vpop.f32.mrf.mxu0
    %1703 = vmatprep.mubr.bf16.mxu0 0
    %1704 = vmatmul.mubr.bf16.gmra.mxu0 %v1558
    %v1705 = vpop.f32.mrf.mxu0
    %v1706 = vadd.f32 0.0, %v1705
    %v1707 = vpop.f32.mrf.mxu0
    %v1708 = vpop.f32.mrf.mxu0
    %v1709 = vadd.f32 0.0, %v1708
    %v1710 = vpop.f32.mrf.mxu0
    %1711 = vmatprep.mubr.bf16.mxu0 0
    %1712 = vmatmul.mubr.bf16.gmra.mxu0 %v1566
    %v1713 = vpop.f32.mrf.mxu0
    %v1714 = vadd.f32 0.0, %v1713
    %v1715 = vpop.f32.mrf.mxu0
    %v1716 = vpop.f32.mrf.mxu0
    %v1717 = vadd.f32 0.0, %v1716
    %v1718 = vpop.f32.mrf.mxu0
    %1719 = vmatprep.mubr.bf16.mxu0 0
    %1720 = vmatmul.mubr.bf16.gmra.mxu0 %v1574
    %v1721 = vpop.f32.mrf.mxu0
    %v1722 = vadd.f32 0.0, %v1721
    %v1723 = vpop.f32.mrf.mxu0
    %v1724 = vpop.f32.mrf.mxu0
    %v1725 = vadd.f32 0.0, %v1724
    %v1726 = vpop.f32.mrf.mxu0
    %1727 = vdwg.mxu0
    %v1752 = vunpack.c.l.b16 %v1430
    %v1753 = vunpack.c.l.b16 %v1431
    %v1754 = vunpack.c.l.b16 %v1432
    %v1755 = vunpack.c.l.b16 %v1433
    %v1756 = vunpack.c.l.b16 %v1434
    %v1757 = vunpack.c.l.b16 %v1435
    %v1758 = vunpack.c.l.b16 %v1436
    %v1759 = vunpack.c.l.b16 %v1437
    %v1760 = vunpack.c.l.b16 %v1438
    %v1761 = vunpack.c.l.b16 %v1439
    %v1762 = vunpack.c.l.b16 %v1440
    %v1763 = vunpack.c.l.b16 %v1441
    %v1764 = vunpack.c.l.b16 %v1442
    %v1765 = vunpack.c.l.b16 %v1443
    %v1766 = vunpack.c.l.b16 %v1444
    %v1767 = vunpack.c.l.b16 %v1445
    %v1768 = vpack.c.b16 %v1753, %v1752
    %v1769 = vpack.c.b16 %v1755, %v1754
    %v1770 = vpack.c.b16 %v1757, %v1756
    %v1771 = vpack.c.b16 %v1759, %v1758
    %v1772 = vpack.c.b16 %v1761, %v1760
    %v1773 = vpack.c.b16 %v1763, %v1762
    %v1774 = vpack.c.b16 %v1765, %v1764
    %v1775 = vpack.c.b16 %v1767, %v1766
    %1784 = vmatprep.subr.bf16.mxu0 0
    %1785 = vmatpush1.bf16.msra.mxu0 %v1775
    %1786 = vmatprep.subr.bf16.mxu0 0
    %1787 = vmatpush1.bf16.msra.mxu0 %v1774
    %1788 = vmatprep.subr.bf16.mxu0 0
    %1789 = vmatpush1.bf16.msra.mxu0 %v1773
    %1790 = vmatprep.subr.bf16.mxu0 0
    %1791 = vmatpush1.bf16.msra.mxu0 %v1772
    %1792 = vmatprep.subr.bf16.mxu0 0
    %1793 = vmatpush1.bf16.msra.mxu0 %v1771
    %1794 = vmatprep.subr.bf16.mxu0 0
    %1795 = vmatpush1.bf16.msra.mxu0 %v1770
    %1796 = vmatprep.subr.bf16.mxu0 0
    %1797 = vmatpush1.bf16.msra.mxu0 %v1769
    %1798 = vmatprep.subr.bf16.mxu0 0
    %1799 = vmatpush1.bf16.msra.mxu0 %v1768
    %1800 = vmatprep.subr.bf16.mxu0 0
    %1801 = vmatpush2.bf16.msra.mxu0 0
    %1802 = vmatprep.subr.bf16.mxu0 0
    %1803 = vmatpush2.bf16.msra.mxu0 0
    %1804 = vmatprep.subr.bf16.mxu0 0
    %1805 = vmatpush2.bf16.msra.mxu0 0
    %1806 = vmatprep.subr.bf16.mxu0 0
    %1807 = vmatpush2.bf16.msra.mxu0 0
    %1808 = vmatprep.subr.bf16.mxu0 0
    %1809 = vmatpush2.bf16.msra.mxu0 0
    %1810 = vmatprep.subr.bf16.mxu0 0
    %1811 = vmatpush2.bf16.msra.mxu0 0
    %1812 = vmatprep.subr.bf16.mxu0 0
    %1813 = vmatpush2.bf16.msra.mxu0 0
    %1814 = vmatprep.subr.bf16.mxu0 0
    %1815 = vmatpush2.bf16.msra.mxu0 0
    %1816 = vmatprep.mubr.bf16.mxu0 0
    %1817 = vmatmul.mubr.bf16.gmra.mxu0 %v1498
    %v1818 = vpop.f32.mrf.mxu0
    %v1819 = vadd.f32 %v1666, %v1818
    %v1820 = vpop.f32.mrf.mxu0
    %v1821 = vpop.f32.mrf.mxu0
    %v1822 = vadd.f32 %v1669, %v1821
    %v1823 = vpop.f32.mrf.mxu0
    %1824 = vmatprep.mubr.bf16.mxu0 0
    %1825 = vmatmul.mubr.bf16.gmra.mxu0 %v1499
    %v1826 = vpop.f32.mrf.mxu0
    %v1827 = vadd.f32 %v1674, %v1826
    %v1828 = vpop.f32.mrf.mxu0
    %v1829 = vpop.f32.mrf.mxu0
    %v1830 = vadd.f32 %v1677, %v1829
    %v1831 = vpop.f32.mrf.mxu0
    %1832 = vmatprep.mubr.bf16.mxu0 0
    %1833 = vmatmul.mubr.bf16.gmra.mxu0 %v1500
    %v1834 = vpop.f32.mrf.mxu0
    %v1835 = vadd.f32 %v1682, %v1834
    %v1836 = vpop.f32.mrf.mxu0
    %v1837 = vpop.f32.mrf.mxu0
    %v1838 = vadd.f32 %v1685, %v1837
    %v1839 = vpop.f32.mrf.mxu0
    %1840 = vmatprep.mubr.bf16.mxu0 0
    %1841 = vmatmul.mubr.bf16.gmra.mxu0 %v1501
    %v1842 = vpop.f32.mrf.mxu0
    %v1843 = vadd.f32 %v1690, %v1842
    %v1844 = vpop.f32.mrf.mxu0
    %v1845 = vpop.f32.mrf.mxu0
    %v1846 = vadd.f32 %v1693, %v1845
    %v1847 = vpop.f32.mrf.mxu0
    %1848 = vmatprep.mubr.bf16.mxu0 0
    %1849 = vmatmul.mubr.bf16.gmra.mxu0 %v1502
    %v1850 = vpop.f32.mrf.mxu0
    %v1851 = vadd.f32 %v1698, %v1850
    %v1852 = vpop.f32.mrf.mxu0
    %v1853 = vpop.f32.mrf.mxu0
    %v1854 = vadd.f32 %v1701, %v1853
    %v1855 = vpop.f32.mrf.mxu0
    %1856 = vmatprep.mubr.bf16.mxu0 0
    %1857 = vmatmul.mubr.bf16.gmra.mxu0 %v1503
    %v1858 = vpop.f32.mrf.mxu0
    %v1859 = vadd.f32 %v1706, %v1858
    %v1860 = vpop.f32.mrf.mxu0
    %v1861 = vpop.f32.mrf.mxu0
    %v1862 = vadd.f32 %v1709, %v1861
    %v1863 = vpop.f32.mrf.mxu0
    %1864 = vmatprep.mubr.bf16.mxu0 0
    %1865 = vmatmul.mubr.bf16.gmra.mxu0 %v1504
    %v1866 = vpop.f32.mrf.mxu0
    %v1867 = vadd.f32 %v1714, %v1866
    %v1868 = vpop.f32.mrf.mxu0
    %v1869 = vpop.f32.mrf.mxu0
    %v1870 = vadd.f32 %v1717, %v1869
    %v1871 = vpop.f32.mrf.mxu0
    %1872 = vmatprep.mubr.bf16.mxu0 0
    %1873 = vmatmul.mubr.bf16.gmra.mxu0 %v1505
    %v1874 = vpop.f32.mrf.mxu0
    %v1875 = vadd.f32 %v1722, %v1874
    %v1876 = vpop.f32.mrf.mxu0
    %v1877 = vpop.f32.mrf.mxu0
    %v1878 = vadd.f32 %v1725, %v1877
    %v1879 = vpop.f32.mrf.mxu0
    %1880 = vdwg.mxu0
    %v1881 = vld [vmem:[#allocation3] sm:$0xc]
    %v1882 = vld [vmem:[#allocation3 + $0x40] sm:$0x3]
    %s1883 = scalar_lea.vmem %s3, 128
    %v1884 = vld [vmem:[%s1883] sm:$0xf]
    %v1885 = vld [vmem:[%s1883 + $0x4] sm:$0xf]
    %v1886 = vld [vmem:[%s1883 + $0x8] sm:$0xf]
    %v1887 = vld [vmem:[%s1883 + $0xc] sm:$0xf]
    %v1888 = vld [vmem:[%s1883 + $0x10] sm:$0xf]
    %v1889 = vld [vmem:[%s1883 + $0x14] sm:$0xf]
    %v1890 = vld [vmem:[%s1883 + $0x18] sm:$0xf]
    %v1891 = vld [vmem:[%s1883 + $0x1c] sm:$0xf]
    %v1892 = vld [vmem:[%s1883 + $0x20] sm:$0xf]
    %v1893 = vld [vmem:[%s1883 + $0x24] sm:$0xf]
    %v1894 = vld [vmem:[%s1883 + $0x28] sm:$0xf]
    %v1895 = vld [vmem:[%s1883 + $0x2c] sm:$0xf]
    %v1896 = vld [vmem:[%s1883 + $0x30] sm:$0xf]
    %v1897 = vld [vmem:[%s1883 + $0x34] sm:$0xf]
    %v1898 = vld [vmem:[%s1883 + $0x38] sm:$0xf]
    %v1899 = vld [vmem:[%s1883 + $0x3c] sm:$0xf]
    %v1900 = vld [vmem:[#allocation3 + $0x40] sm:$0x7]
    %s1901 = scalar_lea.vmem %s3, 192
    %v1902 = vld [vmem:[%s1901] sm:$0xf]
    %v1903 = vld [vmem:[%s1901 + $0x4] sm:$0xf]
    %v1904 = vld [vmem:[%s1901 + $0x8] sm:$0xf]
    %v1905 = vld [vmem:[%s1901 + $0xc] sm:$0xf]
    %v1906 = vld [vmem:[%s1901 + $0x10] sm:$0xf]
    %v1907 = vld [vmem:[%s1901 + $0x14] sm:$0xf]
    %v1908 = vld [vmem:[%s1901 + $0x18] sm:$0xf]
    %v1909 = vld [vmem:[%s1901 + $0x1c] sm:$0xf]
    %v1910 = vld [vmem:[%s1901 + $0x20] sm:$0xf]
    %v1911 = vld [vmem:[%s1901 + $0x24] sm:$0xf]
    %v1912 = vld [vmem:[%s1901 + $0x28] sm:$0xf]
    %v1913 = vld [vmem:[%s1901 + $0x2c] sm:$0xf]
    %v1914 = vld [vmem:[%s1901 + $0x30] sm:$0xf]
    %v1915 = vld [vmem:[%s1901 + $0x34] sm:$0xf]
    %v1916 = vld [vmem:[%s1901 + $0x38] sm:$0xf]
    %v1917 = vld [vmem:[%s1901 + $0x3c] sm:$0xf]
    %v1920 = vunpack.c.l.b16 %v1881
    %v1921 = vunpack.c.l.b16 %v1900
    %v1922 = vpack.c.b16 %v1482, %v1920
    %v1923 = vpack.c.b16 %v1921, %v1921
    %v1925 = vshrl.u32 %v1922, 16
    %v1927 = vrot.slane %v1925, 2
    %v1928 = vshll.u32 %v1922, 16
    %v1930 = vrot.slane %v1928, 3
    %v1931 = vor.u32 %v1927, %v1930
    %v1932 = vrot.slane %v1519, 2
    %v1933 = vrot.slane %v1515, 3
    %v1934 = vor.u32 %v1932, %v1933
    %v1935 = vsel %vm538, %v1931, %v1934
    %v1936 = vrot.slane %v1527, 2
    %v1937 = vrot.slane %v1523, 3
    %v1938 = vor.u32 %v1936, %v1937
    %v1939 = vsel %vm538, %v1934, %v1938
    %v1940 = vrot.slane %v1535, 2
    %v1941 = vrot.slane %v1531, 3
    %v1942 = vor.u32 %v1940, %v1941
    %v1943 = vsel %vm538, %v1938, %v1942
    %v1944 = vrot.slane %v1543, 2
    %v1945 = vrot.slane %v1539, 3
    %v1946 = vor.u32 %v1944, %v1945
    %v1947 = vsel %vm538, %v1942, %v1946
    %v1948 = vrot.slane %v1551, 2
    %v1949 = vrot.slane %v1547, 3
    %v1950 = vor.u32 %v1948, %v1949
    %v1951 = vsel %vm538, %v1946, %v1950
    %v1952 = vrot.slane %v1559, 2
    %v1953 = vrot.slane %v1555, 3
    %v1954 = vor.u32 %v1952, %v1953
    %v1955 = vsel %vm538, %v1950, %v1954
    %v1956 = vrot.slane %v1567, 2
    %v1957 = vrot.slane %v1563, 3
    %v1958 = vor.u32 %v1956, %v1957
    %v1959 = vsel %vm538, %v1954, %v1958
    %v1961 = vshrl.u32 %v1923, 16
    %v1963 = vrot.slane %v1961, 2
    %v1964 = vshll.u32 %v1923, 16
    %v1966 = vrot.slane %v1964, 3
    %v1967 = vor.u32 %v1963, %v1966
    %v1968 = vsel %vm538, %v1958, %v1967
    %v1993 = vunpack.c.l.b16 %v1902
    %v1994 = vunpack.c.l.b16 %v1903
    %v1995 = vunpack.c.l.b16 %v1904
    %v1996 = vunpack.c.l.b16 %v1905
    %v1997 = vunpack.c.l.b16 %v1906
    %v1998 = vunpack.c.l.b16 %v1907
    %v1999 = vunpack.c.l.b16 %v1908
    %v2000 = vunpack.c.l.b16 %v1909
    %v2001 = vunpack.c.l.b16 %v1910
    %v2002 = vunpack.c.l.b16 %v1911
    %v2003 = vunpack.c.l.b16 %v1912
    %v2004 = vunpack.c.l.b16 %v1913
    %v2005 = vunpack.c.l.b16 %v1914
    %v2006 = vunpack.c.l.b16 %v1915
    %v2007 = vunpack.c.l.b16 %v1916
    %v2008 = vunpack.c.l.b16 %v1917
    %v2009 = vpack.c.b16 %v1994, %v1993
    %v2010 = vpack.c.b16 %v1996, %v1995
    %v2011 = vpack.c.b16 %v1998, %v1997
    %v2012 = vpack.c.b16 %v2000, %v1999
    %v2013 = vpack.c.b16 %v2002, %v2001
    %v2014 = vpack.c.b16 %v2004, %v2003
    %v2015 = vpack.c.b16 %v2006, %v2005
    %v2016 = vpack.c.b16 %v2008, %v2007
    %2025 = vmatprep.subr.bf16.mxu0 0
    %2026 = vmatpush1.bf16.msra.mxu0 %v2016
    %2027 = vmatprep.subr.bf16.mxu0 0
    %2028 = vmatpush1.bf16.msra.mxu0 %v2015
    %2029 = vmatprep.subr.bf16.mxu0 0
    %2030 = vmatpush1.bf16.msra.mxu0 %v2014
    %2031 = vmatprep.subr.bf16.mxu0 0
    %2032 = vmatpush1.bf16.msra.mxu0 %v2013
    %2033 = vmatprep.subr.bf16.mxu0 0
    %2034 = vmatpush1.bf16.msra.mxu0 %v2012
    %2035 = vmatprep.subr.bf16.mxu0 0
    %2036 = vmatpush1.bf16.msra.mxu0 %v2011
    %2037 = vmatprep.subr.bf16.mxu0 0
    %2038 = vmatpush1.bf16.msra.mxu0 %v2010
    %2039 = vmatprep.subr.bf16.mxu0 0
    %2040 = vmatpush1.bf16.msra.mxu0 %v2009
    %2041 = vmatprep.subr.bf16.mxu0 0
    %2042 = vmatpush2.bf16.msra.mxu0 0
    %2043 = vmatprep.subr.bf16.mxu0 0
    %2044 = vmatpush2.bf16.msra.mxu0 0
    %2045 = vmatprep.subr.bf16.mxu0 0
    %2046 = vmatpush2.bf16.msra.mxu0 0
    %2047 = vmatprep.subr.bf16.mxu0 0
    %2048 = vmatpush2.bf16.msra.mxu0 0
    %2049 = vmatprep.subr.bf16.mxu0 0
    %2050 = vmatpush2.bf16.msra.mxu0 0
    %2051 = vmatprep.subr.bf16.mxu0 0
    %2052 = vmatpush2.bf16.msra.mxu0 0
    %2053 = vmatprep.subr.bf16.mxu0 0
    %2054 = vmatpush2.bf16.msra.mxu0 0
    %2055 = vmatprep.subr.bf16.mxu0 0
    %2056 = vmatpush2.bf16.msra.mxu0 0
    %2057 = vmatprep.mubr.bf16.mxu0 0
    %2058 = vmatmul.mubr.bf16.gmra.mxu0 %v1935
    %v2059 = vpop.f32.mrf.mxu0
    %v2060 = vadd.f32 0.0, %v2059
    %v2061 = vpop.f32.mrf.mxu0
    %v2062 = vpop.f32.mrf.mxu0
    %v2063 = vadd.f32 0.0, %v2062
    %v2064 = vpop.f32.mrf.mxu0
    %2065 = vmatprep.mubr.bf16.mxu0 0
    %2066 = vmatmul.mubr.bf16.gmra.mxu0 %v1939
    %v2067 = vpop.f32.mrf.mxu0
    %v2068 = vadd.f32 0.0, %v2067
    %v2069 = vpop.f32.mrf.mxu0
    %v2070 = vpop.f32.mrf.mxu0
    %v2071 = vadd.f32 0.0, %v2070
    %v2072 = vpop.f32.mrf.mxu0
    %2073 = vmatprep.mubr.bf16.mxu0 0
    %2074 = vmatmul.mubr.bf16.gmra.mxu0 %v1943
    %v2075 = vpop.f32.mrf.mxu0
    %v2076 = vadd.f32 0.0, %v2075
    %v2077 = vpop.f32.mrf.mxu0
    %v2078 = vpop.f32.mrf.mxu0
    %v2079 = vadd.f32 0.0, %v2078
    %v2080 = vpop.f32.mrf.mxu0
    %2081 = vmatprep.mubr.bf16.mxu0 0
    %2082 = vmatmul.mubr.bf16.gmra.mxu0 %v1947
    %v2083 = vpop.f32.mrf.mxu0
    %v2084 = vadd.f32 0.0, %v2083
    %v2085 = vpop.f32.mrf.mxu0
    %v2086 = vpop.f32.mrf.mxu0
    %v2087 = vadd.f32 0.0, %v2086
    %v2088 = vpop.f32.mrf.mxu0
    %2089 = vmatprep.mubr.bf16.mxu0 0
    %2090 = vmatmul.mubr.bf16.gmra.mxu0 %v1951
    %v2091 = vpop.f32.mrf.mxu0
    %v2092 = vadd.f32 0.0, %v2091
    %v2093 = vpop.f32.mrf.mxu0
    %v2094 = vpop.f32.mrf.mxu0
    %v2095 = vadd.f32 0.0, %v2094
    %v2096 = vpop.f32.mrf.mxu0
    %2097 = vmatprep.mubr.bf16.mxu0 0
    %2098 = vmatmul.mubr.bf16.gmra.mxu0 %v1955
    %v2099 = vpop.f32.mrf.mxu0
    %v2100 = vadd.f32 0.0, %v2099
    %v2101 = vpop.f32.mrf.mxu0
    %v2102 = vpop.f32.mrf.mxu0
    %v2103 = vadd.f32 0.0, %v2102
    %v2104 = vpop.f32.mrf.mxu0
    %2105 = vmatprep.mubr.bf16.mxu0 0
    %2106 = vmatmul.mubr.bf16.gmra.mxu0 %v1959
    %v2107 = vpop.f32.mrf.mxu0
    %v2108 = vadd.f32 0.0, %v2107
    %v2109 = vpop.f32.mrf.mxu0
    %v2110 = vpop.f32.mrf.mxu0
    %v2111 = vadd.f32 0.0, %v2110
    %v2112 = vpop.f32.mrf.mxu0
    %2113 = vmatprep.mubr.bf16.mxu0 0
    %2114 = vmatmul.mubr.bf16.gmra.mxu0 %v1968
    %v2115 = vpop.f32.mrf.mxu0
    %v2116 = vadd.f32 0.0, %v2115
    %v2117 = vpop.f32.mrf.mxu0
    %v2118 = vpop.f32.mrf.mxu0
    %v2119 = vadd.f32 0.0, %v2118
    %v2120 = vpop.f32.mrf.mxu0
    %2121 = vdwg.mxu0
    %v2123 = vunpack.c.l.b16 %v1882
    %v2124 = vpack.c.b16 %v2123, %v2123
    %v2125 = vrot.slane %v1922, 2
    %v2126 = vrot.slane %v1499, 2
    %v2127 = vsel %vm716, %v2125, %v2126
    %v2128 = vrot.slane %v1500, 2
    %v2129 = vsel %vm716, %v2126, %v2128
    %v2130 = vrot.slane %v1501, 2
    %v2131 = vsel %vm716, %v2128, %v2130
    %v2132 = vrot.slane %v1502, 2
    %v2133 = vsel %vm716, %v2130, %v2132
    %v2134 = vrot.slane %v1503, 2
    %v2135 = vsel %vm716, %v2132, %v2134
    %v2136 = vrot.slane %v1504, 2
    %v2137 = vsel %vm716, %v2134, %v2136
    %v2138 = vrot.slane %v1505, 2
    %v2139 = vsel %vm716, %v2136, %v2138
    %v2140 = vrot.slane %v2124, 2
    %v2141 = vsel %vm716, %v2138, %v2140
    %v2166 = vunpack.c.l.b16 %v1884
    %v2167 = vunpack.c.l.b16 %v1885
    %v2168 = vunpack.c.l.b16 %v1886
    %v2169 = vunpack.c.l.b16 %v1887
    %v2170 = vunpack.c.l.b16 %v1888
    %v2171 = vunpack.c.l.b16 %v1889
    %v2172 = vunpack.c.l.b16 %v1890
    %v2173 = vunpack.c.l.b16 %v1891
    %v2174 = vunpack.c.l.b16 %v1892
    %v2175 = vunpack.c.l.b16 %v1893
    %v2176 = vunpack.c.l.b16 %v1894
    %v2177 = vunpack.c.l.b16 %v1895
    %v2178 = vunpack.c.l.b16 %v1896
    %v2179 = vunpack.c.l.b16 %v1897
    %v2180 = vunpack.c.l.b16 %v1898
    %v2181 = vunpack.c.l.b16 %v1899
    %v2182 = vpack.c.b16 %v2167, %v2166
    %v2183 = vpack.c.b16 %v2169, %v2168
    %v2184 = vpack.c.b16 %v2171, %v2170
    %v2185 = vpack.c.b16 %v2173, %v2172
    %v2186 = vpack.c.b16 %v2175, %v2174
    %v2187 = vpack.c.b16 %v2177, %v2176
    %v2188 = vpack.c.b16 %v2179, %v2178
    %v2189 = vpack.c.b16 %v2181, %v2180
    %2198 = vmatprep.subr.bf16.mxu0 0
    %2199 = vmatpush1.bf16.msra.mxu0 %v2189
    %2200 = vmatprep.subr.bf16.mxu0 0
    %2201 = vmatpush1.bf16.msra.mxu0 %v2188
    %2202 = vmatprep.subr.bf16.mxu0 0
    %2203 = vmatpush1.bf16.msra.mxu0 %v2187
    %2204 = vmatprep.subr.bf16.mxu0 0
    %2205 = vmatpush1.bf16.msra.mxu0 %v2186
    %2206 = vmatprep.subr.bf16.mxu0 0
    %2207 = vmatpush1.bf16.msra.mxu0 %v2185
    %2208 = vmatprep.subr.bf16.mxu0 0
    %2209 = vmatpush1.bf16.msra.mxu0 %v2184
    %2210 = vmatprep.subr.bf16.mxu0 0
    %2211 = vmatpush1.bf16.msra.mxu0 %v2183
    %2212 = vmatprep.subr.bf16.mxu0 0
    %2213 = vmatpush1.bf16.msra.mxu0 %v2182
    %2214 = vmatprep.subr.bf16.mxu0 0
    %2215 = vmatpush2.bf16.msra.mxu0 0
    %2216 = vmatprep.subr.bf16.mxu0 0
    %2217 = vmatpush2.bf16.msra.mxu0 0
    %2218 = vmatprep.subr.bf16.mxu0 0
    %2219 = vmatpush2.bf16.msra.mxu0 0
    %2220 = vmatprep.subr.bf16.mxu0 0
    %2221 = vmatpush2.bf16.msra.mxu0 0
    %2222 = vmatprep.subr.bf16.mxu0 0
    %2223 = vmatpush2.bf16.msra.mxu0 0
    %2224 = vmatprep.subr.bf16.mxu0 0
    %2225 = vmatpush2.bf16.msra.mxu0 0
    %2226 = vmatprep.subr.bf16.mxu0 0
    %2227 = vmatpush2.bf16.msra.mxu0 0
    %2228 = vmatprep.subr.bf16.mxu0 0
    %2229 = vmatpush2.bf16.msra.mxu0 0
    %2230 = vmatprep.mubr.bf16.mxu0 0
    %2231 = vmatmul.mubr.bf16.gmra.mxu0 %v2127
    %v2232 = vpop.f32.mrf.mxu0
    %v2233 = vadd.f32 %v2060, %v2232
    %v2234 = vpop.f32.mrf.mxu0
    %v2235 = vpop.f32.mrf.mxu0
    %v2236 = vadd.f32 %v2063, %v2235
    %v2237 = vpop.f32.mrf.mxu0
    %2238 = vmatprep.mubr.bf16.mxu0 0
    %2239 = vmatmul.mubr.bf16.gmra.mxu0 %v2129
    %v2240 = vpop.f32.mrf.mxu0
    %v2241 = vadd.f32 %v2068, %v2240
    %v2242 = vpop.f32.mrf.mxu0
    %v2243 = vpop.f32.mrf.mxu0
    %v2244 = vadd.f32 %v2071, %v2243
    %v2245 = vpop.f32.mrf.mxu0
    %2246 = vmatprep.mubr.bf16.mxu0 0
    %2247 = vmatmul.mubr.bf16.gmra.mxu0 %v2131
    %v2248 = vpop.f32.mrf.mxu0
    %v2249 = vadd.f32 %v2076, %v2248
    %v2250 = vpop.f32.mrf.mxu0
    %v2251 = vpop.f32.mrf.mxu0
    %v2252 = vadd.f32 %v2079, %v2251
    %v2253 = vpop.f32.mrf.mxu0
    %2254 = vmatprep.mubr.bf16.mxu0 0
    %2255 = vmatmul.mubr.bf16.gmra.mxu0 %v2133
    %v2256 = vpop.f32.mrf.mxu0
    %v2257 = vadd.f32 %v2084, %v2256
    %v2258 = vpop.f32.mrf.mxu0
    %v2259 = vpop.f32.mrf.mxu0
    %v2260 = vadd.f32 %v2087, %v2259
    %v2261 = vpop.f32.mrf.mxu0
    %2262 = vmatprep.mubr.bf16.mxu0 0
    %2263 = vmatmul.mubr.bf16.gmra.mxu0 %v2135
    %v2264 = vpop.f32.mrf.mxu0
    %v2265 = vadd.f32 %v2092, %v2264
    %v2266 = vpop.f32.mrf.mxu0
    %v2267 = vpop.f32.mrf.mxu0
    %v2268 = vadd.f32 %v2095, %v2267
    %v2269 = vpop.f32.mrf.mxu0
    %2270 = vmatprep.mubr.bf16.mxu0 0
    %2271 = vmatmul.mubr.bf16.gmra.mxu0 %v2137
    %v2272 = vpop.f32.mrf.mxu0
    %v2273 = vadd.f32 %v2100, %v2272
    %v2274 = vpop.f32.mrf.mxu0
    %v2275 = vpop.f32.mrf.mxu0
    %v2276 = vadd.f32 %v2103, %v2275
    %v2277 = vpop.f32.mrf.mxu0
    %2278 = vmatprep.mubr.bf16.mxu0 0
    %2279 = vmatmul.mubr.bf16.gmra.mxu0 %v2139
    %v2280 = vpop.f32.mrf.mxu0
    %v2281 = vadd.f32 %v2108, %v2280
    %v2282 = vpop.f32.mrf.mxu0
    %v2283 = vpop.f32.mrf.mxu0
    %v2284 = vadd.f32 %v2111, %v2283
    %v2285 = vpop.f32.mrf.mxu0
    %2286 = vmatprep.mubr.bf16.mxu0 0
    %2287 = vmatmul.mubr.bf16.gmra.mxu0 %v2141
    %v2288 = vpop.f32.mrf.mxu0
    %v2289 = vadd.f32 %v2116, %v2288
    %v2290 = vpop.f32.mrf.mxu0
    %v2291 = vpop.f32.mrf.mxu0
    %v2292 = vadd.f32 %v2119, %v2291
    %v2293 = vpop.f32.mrf.mxu0
    %2294 = vdwg.mxu0
    %v2295 = vld [vmem:[#allocation3 + $0x40] sm:$0xf]
    %s2296 = scalar_lea.vmem %s3, 256
    %v2297 = vld [vmem:[%s2296] sm:$0xf]
    %v2298 = vld [vmem:[%s2296 + $0x4] sm:$0xf]
    %v2299 = vld [vmem:[%s2296 + $0x8] sm:$0xf]
    %v2300 = vld [vmem:[%s2296 + $0xc] sm:$0xf]
    %v2301 = vld [vmem:[%s2296 + $0x10] sm:$0xf]
    %v2302 = vld [vmem:[%s2296 + $0x14] sm:$0xf]
    %v2303 = vld [vmem:[%s2296 + $0x18] sm:$0xf]
    %v2304 = vld [vmem:[%s2296 + $0x1c] sm:$0xf]
    %v2305 = vld [vmem:[%s2296 + $0x20] sm:$0xf]
    %v2306 = vld [vmem:[%s2296 + $0x24] sm:$0xf]
    %v2307 = vld [vmem:[%s2296 + $0x28] sm:$0xf]
    %v2308 = vld [vmem:[%s2296 + $0x2c] sm:$0xf]
    %v2309 = vld [vmem:[%s2296 + $0x30] sm:$0xf]
    %v2310 = vld [vmem:[%s2296 + $0x34] sm:$0xf]
    %v2311 = vld [vmem:[%s2296 + $0x38] sm:$0xf]
    %v2312 = vld [vmem:[%s2296 + $0x3c] sm:$0xf]
    %v2313 = vld [vmem:[#allocation3 + $0x4] sm:$0xf]
    %v2314 = vld [vmem:[#allocation3 + $0x8] sm:$0xf]
    %v2315 = vld [vmem:[#allocation3 + $0xc] sm:$0xf]
    %v2316 = vld [vmem:[#allocation3 + $0x10] sm:$0xf]
    %v2317 = vld [vmem:[#allocation3 + $0x14] sm:$0xf]
    %v2318 = vld [vmem:[#allocation3 + $0x18] sm:$0xf]
    %v2319 = vld [vmem:[#allocation3 + $0x1c] sm:$0xf]
    %v2320 = vld [vmem:[#allocation3 + $0x20] sm:$0xf]
    %v2321 = vld [vmem:[#allocation3 + $0x24] sm:$0xf]
    %v2322 = vld [vmem:[#allocation3 + $0x28] sm:$0xf]
    %v2323 = vld [vmem:[#allocation3 + $0x2c] sm:$0xf]
    %v2324 = vld [vmem:[#allocation3 + $0x30] sm:$0xf]
    %v2325 = vld [vmem:[#allocation3 + $0x34] sm:$0xf]
    %v2326 = vld [vmem:[#allocation3 + $0x38] sm:$0xf]
    %v2327 = vld [vmem:[#allocation3 + $0x3c] sm:$0xf]
    %v2328 = vld [vmem:[#allocation3 + $0x40] sm:$0xf]
    %v2329 = vld [vmem:[#allocation3 + $0x44] sm:$0x1]
    %s2330 = scalar_lea.vmem %s3, 320
    %v2331 = vld [vmem:[%s2330] sm:$0xf]
    %v2332 = vld [vmem:[%s2330 + $0x4] sm:$0xf]
    %v2333 = vld [vmem:[%s2330 + $0x8] sm:$0xf]
    %v2334 = vld [vmem:[%s2330 + $0xc] sm:$0xf]
    %v2335 = vld [vmem:[%s2330 + $0x10] sm:$0xf]
    %v2336 = vld [vmem:[%s2330 + $0x14] sm:$0xf]
    %v2337 = vld [vmem:[%s2330 + $0x18] sm:$0xf]
    %v2338 = vld [vmem:[%s2330 + $0x1c] sm:$0xf]
    %v2339 = vld [vmem:[%s2330 + $0x20] sm:$0xf]
    %v2340 = vld [vmem:[%s2330 + $0x24] sm:$0xf]
    %v2341 = vld [vmem:[%s2330 + $0x28] sm:$0xf]
    %v2342 = vld [vmem:[%s2330 + $0x2c] sm:$0xf]
    %v2343 = vld [vmem:[%s2330 + $0x30] sm:$0xf]
    %v2344 = vld [vmem:[%s2330 + $0x34] sm:$0xf]
    %v2345 = vld [vmem:[%s2330 + $0x38] sm:$0xf]
    %v2346 = vld [vmem:[%s2330 + $0x3c] sm:$0xf]
    %v2364 = vunpack.c.l.b16 %v2313
    %v2365 = vunpack.c.l.b16 %v2314
    %v2366 = vunpack.c.l.b16 %v2315
    %v2367 = vunpack.c.l.b16 %v2316
    %v2368 = vunpack.c.l.b16 %v2317
    %v2369 = vunpack.c.l.b16 %v2318
    %v2370 = vunpack.c.l.b16 %v2319
    %v2371 = vunpack.c.l.b16 %v2320
    %v2372 = vunpack.c.l.b16 %v2321
    %v2373 = vunpack.c.l.b16 %v2322
    %v2374 = vunpack.c.l.b16 %v2323
    %v2375 = vunpack.c.l.b16 %v2324
    %v2376 = vunpack.c.l.b16 %v2325
    %v2377 = vunpack.c.l.b16 %v2326
    %v2378 = vunpack.c.l.b16 %v2327
    %v2379 = vunpack.c.l.b16 %v2328
    %v2380 = vunpack.c.l.b16 %v2329
    %v2381 = vpack.c.b16 %v2365, %v2364
    %v2382 = vpack.c.b16 %v2367, %v2366
    %v2383 = vpack.c.b16 %v2369, %v2368
    %v2384 = vpack.c.b16 %v2371, %v2370
    %v2385 = vpack.c.b16 %v2373, %v2372
    %v2386 = vpack.c.b16 %v2375, %v2374
    %v2387 = vpack.c.b16 %v2377, %v2376
    %v2388 = vpack.c.b16 %v2379, %v2378
    %v2389 = vpack.c.b16 %v2380, %v2380
    %v2391 = vshrl.u32 %v2381, 16
    %v2393 = vshll.u32 %v2381, 16
    %v2395 = vrot.slane %v2393, 1
    %v2396 = vor.u32 %v2391, %v2395
    %v2398 = vshll.u32 %v2382, 16
    %v2400 = vrot.slane %v2398, 1
    %v2401 = vsel %vm202, %v2396, %v2400
    %v2402 = vshrl.u32 %v2382, 16
    %v2404 = vor.u32 %v2402, %v2400
    %v2406 = vshll.u32 %v2383, 16
    %v2408 = vrot.slane %v2406, 1
    %v2409 = vsel %vm202, %v2404, %v2408
    %v2410 = vshrl.u32 %v2383, 16
    %v2412 = vor.u32 %v2410, %v2408
    %v2414 = vshll.u32 %v2384, 16
    %v2416 = vrot.slane %v2414, 1
    %v2417 = vsel %vm202, %v2412, %v2416
    %v2418 = vshrl.u32 %v2384, 16
    %v2420 = vor.u32 %v2418, %v2416
    %v2422 = vshll.u32 %v2385, 16
    %v2424 = vrot.slane %v2422, 1
    %v2425 = vsel %vm202, %v2420, %v2424
    %v2426 = vshrl.u32 %v2385, 16
    %v2428 = vor.u32 %v2426, %v2424
    %v2430 = vshll.u32 %v2386, 16
    %v2432 = vrot.slane %v2430, 1
    %v2433 = vsel %vm202, %v2428, %v2432
    %v2434 = vshrl.u32 %v2386, 16
    %v2436 = vor.u32 %v2434, %v2432
    %v2438 = vshll.u32 %v2387, 16
    %v2440 = vrot.slane %v2438, 1
    %v2441 = vsel %vm202, %v2436, %v2440
    %v2442 = vshrl.u32 %v2387, 16
    %v2444 = vor.u32 %v2442, %v2440
    %v2446 = vshll.u32 %v2388, 16
    %v2448 = vrot.slane %v2446, 1
    %v2449 = vsel %vm202, %v2444, %v2448
    %v2450 = vshrl.u32 %v2388, 16
    %v2452 = vor.u32 %v2450, %v2448
    %v2454 = vshll.u32 %v2389, 16
    %v2456 = vrot.slane %v2454, 1
    %v2457 = vsel %vm202, %v2452, %v2456
    %v2482 = vunpack.c.l.b16 %v2331
    %v2483 = vunpack.c.l.b16 %v2332
    %v2484 = vunpack.c.l.b16 %v2333
    %v2485 = vunpack.c.l.b16 %v2334
    %v2486 = vunpack.c.l.b16 %v2335
    %v2487 = vunpack.c.l.b16 %v2336
    %v2488 = vunpack.c.l.b16 %v2337
    %v2489 = vunpack.c.l.b16 %v2338
    %v2490 = vunpack.c.l.b16 %v2339
    %v2491 = vunpack.c.l.b16 %v2340
    %v2492 = vunpack.c.l.b16 %v2341
    %v2493 = vunpack.c.l.b16 %v2342
    %v2494 = vunpack.c.l.b16 %v2343
    %v2495 = vunpack.c.l.b16 %v2344
    %v2496 = vunpack.c.l.b16 %v2345
    %v2497 = vunpack.c.l.b16 %v2346
    %v2498 = vpack.c.b16 %v2483, %v2482
    %v2499 = vpack.c.b16 %v2485, %v2484
    %v2500 = vpack.c.b16 %v2487, %v2486
    %v2501 = vpack.c.b16 %v2489, %v2488
    %v2502 = vpack.c.b16 %v2491, %v2490
    %v2503 = vpack.c.b16 %v2493, %v2492
    %v2504 = vpack.c.b16 %v2495, %v2494
    %v2505 = vpack.c.b16 %v2497, %v2496
    %2514 = vmatprep.subr.bf16.mxu0 0
    %2515 = vmatpush1.bf16.msra.mxu0 %v2505
    %2516 = vmatprep.subr.bf16.mxu0 0
    %2517 = vmatpush1.bf16.msra.mxu0 %v2504
    %2518 = vmatprep.subr.bf16.mxu0 0
    %2519 = vmatpush1.bf16.msra.mxu0 %v2503
    %2520 = vmatprep.subr.bf16.mxu0 0
    %2521 = vmatpush1.bf16.msra.mxu0 %v2502
    %2522 = vmatprep.subr.bf16.mxu0 0
    %2523 = vmatpush1.bf16.msra.mxu0 %v2501
    %2524 = vmatprep.subr.bf16.mxu0 0
    %2525 = vmatpush1.bf16.msra.mxu0 %v2500
    %2526 = vmatprep.subr.bf16.mxu0 0
    %2527 = vmatpush1.bf16.msra.mxu0 %v2499
    %2528 = vmatprep.subr.bf16.mxu0 0
    %2529 = vmatpush1.bf16.msra.mxu0 %v2498
    %2530 = vmatprep.subr.bf16.mxu0 0
    %2531 = vmatpush2.bf16.msra.mxu0 0
    %2532 = vmatprep.subr.bf16.mxu0 0
    %2533 = vmatpush2.bf16.msra.mxu0 0
    %2534 = vmatprep.subr.bf16.mxu0 0
    %2535 = vmatpush2.bf16.msra.mxu0 0
    %2536 = vmatprep.subr.bf16.mxu0 0
    %2537 = vmatpush2.bf16.msra.mxu0 0
    %2538 = vmatprep.subr.bf16.mxu0 0
    %2539 = vmatpush2.bf16.msra.mxu0 0
    %2540 = vmatprep.subr.bf16.mxu0 0
    %2541 = vmatpush2.bf16.msra.mxu0 0
    %2542 = vmatprep.subr.bf16.mxu0 0
    %2543 = vmatpush2.bf16.msra.mxu0 0
    %2544 = vmatprep.subr.bf16.mxu0 0
    %2545 = vmatpush2.bf16.msra.mxu0 0
    %2546 = vmatprep.mubr.bf16.mxu0 0
    %2547 = vmatmul.mubr.bf16.gmra.mxu0 %v2401
    %v2548 = vpop.f32.mrf.mxu0
    %v2549 = vadd.f32 0.0, %v2548
    %v2550 = vpop.f32.mrf.mxu0
    %v2551 = vpop.f32.mrf.mxu0
    %v2552 = vadd.f32 0.0, %v2551
    %v2553 = vpop.f32.mrf.mxu0
    %2554 = vmatprep.mubr.bf16.mxu0 0
    %2555 = vmatmul.mubr.bf16.gmra.mxu0 %v2409
    %v2556 = vpop.f32.mrf.mxu0
    %v2557 = vadd.f32 0.0, %v2556
    %v2558 = vpop.f32.mrf.mxu0
    %v2559 = vpop.f32.mrf.mxu0
    %v2560 = vadd.f32 0.0, %v2559
    %v2561 = vpop.f32.mrf.mxu0
    %2562 = vmatprep.mubr.bf16.mxu0 0
    %2563 = vmatmul.mubr.bf16.gmra.mxu0 %v2417
    %v2564 = vpop.f32.mrf.mxu0
    %v2565 = vadd.f32 0.0, %v2564
    %v2566 = vpop.f32.mrf.mxu0
    %v2567 = vpop.f32.mrf.mxu0
    %v2568 = vadd.f32 0.0, %v2567
    %v2569 = vpop.f32.mrf.mxu0
    %2570 = vmatprep.mubr.bf16.mxu0 0
    %2571 = vmatmul.mubr.bf16.gmra.mxu0 %v2425
    %v2572 = vpop.f32.mrf.mxu0
    %v2573 = vadd.f32 0.0, %v2572
    %v2574 = vpop.f32.mrf.mxu0
    %v2575 = vpop.f32.mrf.mxu0
    %v2576 = vadd.f32 0.0, %v2575
    %v2577 = vpop.f32.mrf.mxu0
    %2578 = vmatprep.mubr.bf16.mxu0 0
    %2579 = vmatmul.mubr.bf16.gmra.mxu0 %v2433
    %v2580 = vpop.f32.mrf.mxu0
    %v2581 = vadd.f32 0.0, %v2580
    %v2582 = vpop.f32.mrf.mxu0
    %v2583 = vpop.f32.mrf.mxu0
    %v2584 = vadd.f32 0.0, %v2583
    %v2585 = vpop.f32.mrf.mxu0
    %2586 = vmatprep.mubr.bf16.mxu0 0
    %2587 = vmatmul.mubr.bf16.gmra.mxu0 %v2441
    %v2588 = vpop.f32.mrf.mxu0
    %v2589 = vadd.f32 0.0, %v2588
    %v2590 = vpop.f32.mrf.mxu0
    %v2591 = vpop.f32.mrf.mxu0
    %v2592 = vadd.f32 0.0, %v2591
    %v2593 = vpop.f32.mrf.mxu0
    %2594 = vmatprep.mubr.bf16.mxu0 0
    %2595 = vmatmul.mubr.bf16.gmra.mxu0 %v2449
    %v2596 = vpop.f32.mrf.mxu0
    %v2597 = vadd.f32 0.0, %v2596
    %v2598 = vpop.f32.mrf.mxu0
    %v2599 = vpop.f32.mrf.mxu0
    %v2600 = vadd.f32 0.0, %v2599
    %v2601 = vpop.f32.mrf.mxu0
    %2602 = vmatprep.mubr.bf16.mxu0 0
    %2603 = vmatmul.mubr.bf16.gmra.mxu0 %v2457
    %v2604 = vpop.f32.mrf.mxu0
    %v2605 = vadd.f32 0.0, %v2604
    %v2606 = vpop.f32.mrf.mxu0
    %v2607 = vpop.f32.mrf.mxu0
    %v2608 = vadd.f32 0.0, %v2607
    %v2609 = vpop.f32.mrf.mxu0
    %2610 = vdwg.mxu0
    %v2612 = vunpack.c.l.b16 %v2295
    %v2613 = vpack.c.b16 %v1483, %v1482
    %v2614 = vpack.c.b16 %v1485, %v1484
    %v2615 = vpack.c.b16 %v1487, %v1486
    %v2616 = vpack.c.b16 %v1489, %v1488
    %v2617 = vpack.c.b16 %v1491, %v1490
    %v2618 = vpack.c.b16 %v1493, %v1492
    %v2619 = vpack.c.b16 %v1495, %v1494
    %v2620 = vpack.c.b16 %v2612, %v1496
    %v2645 = vunpack.c.l.b16 %v2297
    %v2646 = vunpack.c.l.b16 %v2298
    %v2647 = vunpack.c.l.b16 %v2299
    %v2648 = vunpack.c.l.b16 %v2300
    %v2649 = vunpack.c.l.b16 %v2301
    %v2650 = vunpack.c.l.b16 %v2302
    %v2651 = vunpack.c.l.b16 %v2303
    %v2652 = vunpack.c.l.b16 %v2304
    %v2653 = vunpack.c.l.b16 %v2305
    %v2654 = vunpack.c.l.b16 %v2306
    %v2655 = vunpack.c.l.b16 %v2307
    %v2656 = vunpack.c.l.b16 %v2308
    %v2657 = vunpack.c.l.b16 %v2309
    %v2658 = vunpack.c.l.b16 %v2310
    %v2659 = vunpack.c.l.b16 %v2311
    %v2660 = vunpack.c.l.b16 %v2312
    %v2661 = vpack.c.b16 %v2646, %v2645
    %v2662 = vpack.c.b16 %v2648, %v2647
    %v2663 = vpack.c.b16 %v2650, %v2649
    %v2664 = vpack.c.b16 %v2652, %v2651
    %v2665 = vpack.c.b16 %v2654, %v2653
    %v2666 = vpack.c.b16 %v2656, %v2655
    %v2667 = vpack.c.b16 %v2658, %v2657
    %v2668 = vpack.c.b16 %v2660, %v2659
    %2677 = vmatprep.subr.bf16.mxu0 0
    %2678 = vmatpush1.bf16.msra.mxu0 %v2668
    %2679 = vmatprep.subr.bf16.mxu0 0
    %2680 = vmatpush1.bf16.msra.mxu0 %v2667
    %2681 = vmatprep.subr.bf16.mxu0 0
    %2682 = vmatpush1.bf16.msra.mxu0 %v2666
    %2683 = vmatprep.subr.bf16.mxu0 0
    %2684 = vmatpush1.bf16.msra.mxu0 %v2665
    %2685 = vmatprep.subr.bf16.mxu0 0
    %2686 = vmatpush1.bf16.msra.mxu0 %v2664
    %2687 = vmatprep.subr.bf16.mxu0 0
    %2688 = vmatpush1.bf16.msra.mxu0 %v2663
    %2689 = vmatprep.subr.bf16.mxu0 0
    %2690 = vmatpush1.bf16.msra.mxu0 %v2662
    %2691 = vmatprep.subr.bf16.mxu0 0
    %2692 = vmatpush1.bf16.msra.mxu0 %v2661
    %2693 = vmatprep.subr.bf16.mxu0 0
    %2694 = vmatpush2.bf16.msra.mxu0 0
    %2695 = vmatprep.subr.bf16.mxu0 0
    %2696 = vmatpush2.bf16.msra.mxu0 0
    %2697 = vmatprep.subr.bf16.mxu0 0
    %2698 = vmatpush2.bf16.msra.mxu0 0
    %2699 = vmatprep.subr.bf16.mxu0 0
    %2700 = vmatpush2.bf16.msra.mxu0 0
    %2701 = vmatprep.subr.bf16.mxu0 0
    %2702 = vmatpush2.bf16.msra.mxu0 0
    %2703 = vmatprep.subr.bf16.mxu0 0
    %2704 = vmatpush2.bf16.msra.mxu0 0
    %2705 = vmatprep.subr.bf16.mxu0 0
    %2706 = vmatpush2.bf16.msra.mxu0 0
    %2707 = vmatprep.subr.bf16.mxu0 0
    %2708 = vmatpush2.bf16.msra.mxu0 0
    %2709 = vmatprep.mubr.bf16.mxu0 0
    %2710 = vmatmul.mubr.bf16.gmra.mxu0 %v2613
    %v2711 = vpop.f32.mrf.mxu0
    %v2712 = vadd.f32 %v2549, %v2711
    %v2713 = vpop.f32.mrf.mxu0
    %v2714 = vpop.f32.mrf.mxu0
    %v2715 = vadd.f32 %v2552, %v2714
    %v2716 = vpop.f32.mrf.mxu0
    %2717 = vmatprep.mubr.bf16.mxu0 0
    %2718 = vmatmul.mubr.bf16.gmra.mxu0 %v2614
    %v2719 = vpop.f32.mrf.mxu0
    %v2720 = vadd.f32 %v2557, %v2719
    %v2721 = vpop.f32.mrf.mxu0
    %v2722 = vpop.f32.mrf.mxu0
    %v2723 = vadd.f32 %v2560, %v2722
    %v2724 = vpop.f32.mrf.mxu0
    %2725 = vmatprep.mubr.bf16.mxu0 0
    %2726 = vmatmul.mubr.bf16.gmra.mxu0 %v2615
    %v2727 = vpop.f32.mrf.mxu0
    %v2728 = vadd.f32 %v2565, %v2727
    %v2729 = vpop.f32.mrf.mxu0
    %v2730 = vpop.f32.mrf.mxu0
    %v2731 = vadd.f32 %v2568, %v2730
    %v2732 = vpop.f32.mrf.mxu0
    %2733 = vmatprep.mubr.bf16.mxu0 0
    %2734 = vmatmul.mubr.bf16.gmra.mxu0 %v2616
    %v2735 = vpop.f32.mrf.mxu0
    %v2736 = vadd.f32 %v2573, %v2735
    %v2737 = vpop.f32.mrf.mxu0
    %v2738 = vpop.f32.mrf.mxu0
    %v2739 = vadd.f32 %v2576, %v2738
    %v2740 = vpop.f32.mrf.mxu0
    %2741 = vmatprep.mubr.bf16.mxu0 0
    %2742 = vmatmul.mubr.bf16.gmra.mxu0 %v2617
    %v2743 = vpop.f32.mrf.mxu0
    %v2744 = vadd.f32 %v2581, %v2743
    %v2745 = vpop.f32.mrf.mxu0
    %v2746 = vpop.f32.mrf.mxu0
    %v2747 = vadd.f32 %v2584, %v2746
    %v2748 = vpop.f32.mrf.mxu0
    %2749 = vmatprep.mubr.bf16.mxu0 0
    %2750 = vmatmul.mubr.bf16.gmra.mxu0 %v2618
    %v2751 = vpop.f32.mrf.mxu0
    %v2752 = vadd.f32 %v2589, %v2751
    %v2753 = vpop.f32.mrf.mxu0
    %v2754 = vpop.f32.mrf.mxu0
    %v2755 = vadd.f32 %v2592, %v2754
    %v2756 = vpop.f32.mrf.mxu0
    %2757 = vmatprep.mubr.bf16.mxu0 0
    %2758 = vmatmul.mubr.bf16.gmra.mxu0 %v2619
    %v2759 = vpop.f32.mrf.mxu0
    %v2760 = vadd.f32 %v2597, %v2759
    %v2761 = vpop.f32.mrf.mxu0
    %v2762 = vpop.f32.mrf.mxu0
    %v2763 = vadd.f32 %v2600, %v2762
    %v2764 = vpop.f32.mrf.mxu0
    %2765 = vmatprep.mubr.bf16.mxu0 0
    %2766 = vmatmul.mubr.bf16.gmra.mxu0 %v2620
    %v2767 = vpop.f32.mrf.mxu0
    %v2768 = vadd.f32 %v2605, %v2767
    %v2769 = vpop.f32.mrf.mxu0
    %v2770 = vpop.f32.mrf.mxu0
    %v2771 = vadd.f32 %v2608, %v2770
    %v2772 = vpop.f32.mrf.mxu0
    %2773 = vdwg.mxu0
    %v2774 = vadd.f32 %v2233, %v2712
    %v2775 = vadd.f32 %v2236, %v2715
    %v2776 = vadd.f32 %v2241, %v2720
    %v2777 = vadd.f32 %v2244, %v2723
    %v2778 = vadd.f32 %v2249, %v2728
    %v2779 = vadd.f32 %v2252, %v2731
    %v2780 = vadd.f32 %v2257, %v2736
    %v2781 = vadd.f32 %v2260, %v2739
    %v2782 = vadd.f32 %v2265, %v2744
    %v2783 = vadd.f32 %v2268, %v2747
    %v2784 = vadd.f32 %v2273, %v2752
    %v2785 = vadd.f32 %v2276, %v2755
    %v2786 = vadd.f32 %v2281, %v2760
    %v2787 = vadd.f32 %v2284, %v2763
    %v2788 = vadd.f32 %v2289, %v2768
    %v2789 = vadd.f32 %v2292, %v2771
    %v2790 = vadd.f32 %v1819, %v2774
    %v2791 = vadd.f32 %v1822, %v2775
    %v2792 = vadd.f32 %v1827, %v2776
    %v2793 = vadd.f32 %v1830, %v2777
    %v2794 = vadd.f32 %v1835, %v2778
    %v2795 = vadd.f32 %v1838, %v2779
    %v2796 = vadd.f32 %v1843, %v2780
    %v2797 = vadd.f32 %v1846, %v2781
    %v2798 = vadd.f32 %v1851, %v2782
    %v2799 = vadd.f32 %v1854, %v2783
    %v2800 = vadd.f32 %v1859, %v2784
    %v2801 = vadd.f32 %v1862, %v2785
    %v2802 = vadd.f32 %v1867, %v2786
    %v2803 = vadd.f32 %v1870, %v2787
    %v2804 = vadd.f32 %v1875, %v2788
    %v2805 = vadd.f32 %v1878, %v2789
    %v2806 = vld [vmem:[%s4] sm:$0x1]
    %v2808 = vlaneseq
    %v2809 = vshrl.u32 %v2808, 7
    %v2810 = vsub.s32 0, %v2809
    %v2811 = vrot.slane %v2806, %v2810
    %v2813 = vadd.f32 %v2790, %v2811
    %v2814 = vadd.f32 %v2791, %v2811
    %v2815 = vadd.f32 %v2792, %v2811
    %v2816 = vadd.f32 %v2793, %v2811
    %v2817 = vadd.f32 %v2794, %v2811
    %v2818 = vadd.f32 %v2795, %v2811
    %v2819 = vadd.f32 %v2796, %v2811
    %v2820 = vadd.f32 %v2797, %v2811
    %v2821 = vadd.f32 %v2798, %v2811
    %v2822 = vadd.f32 %v2799, %v2811
    %v2823 = vadd.f32 %v2800, %v2811
    %v2824 = vadd.f32 %v2801, %v2811
    %v2825 = vadd.f32 %v2802, %v2811
    %v2826 = vadd.f32 %v2803, %v2811
    %v2827 = vadd.f32 %v2804, %v2811
    %v2828 = vadd.f32 %v2805, %v2811
    %v2829 = vmax.f32 %v2813, 0.0
    %v2830 = vmax.f32 %v2814, 0.0
    %v2831 = vmax.f32 %v2815, 0.0
    %v2832 = vmax.f32 %v2816, 0.0
    %v2833 = vmax.f32 %v2817, 0.0
    %v2834 = vmax.f32 %v2818, 0.0
    %v2835 = vmax.f32 %v2819, 0.0
    %v2836 = vmax.f32 %v2820, 0.0
    %v2837 = vmax.f32 %v2821, 0.0
    %v2838 = vmax.f32 %v2822, 0.0
    %v2839 = vmax.f32 %v2823, 0.0
    %v2840 = vmax.f32 %v2824, 0.0
    %v2841 = vmax.f32 %v2825, 0.0
    %v2842 = vmax.f32 %v2826, 0.0
    %v2843 = vmax.f32 %v2827, 0.0
    %v2844 = vmax.f32 %v2828, 0.0
    %v2845 = vpack.c.bf16 %v2830, %v2829
    %v2846 = vpack.c.bf16 %v2832, %v2831
    %v2847 = vpack.c.bf16 %v2834, %v2833
    %v2848 = vpack.c.bf16 %v2836, %v2835
    %v2849 = vpack.c.bf16 %v2838, %v2837
    %v2850 = vpack.c.bf16 %v2840, %v2839
    %v2851 = vpack.c.bf16 %v2842, %v2841
    %v2852 = vpack.c.bf16 %v2844, %v2843
    %v2861 = vunpack.c.l.b16 %v2845
    %v2862 = vunpack.c.h.b16 %v2845
    %v2863 = vunpack.c.l.b16 %v2846
    %v2864 = vunpack.c.h.b16 %v2846
    %v2865 = vunpack.c.l.b16 %v2847
    %v2866 = vunpack.c.h.b16 %v2847
    %v2867 = vunpack.c.l.b16 %v2848
    %v2868 = vunpack.c.h.b16 %v2848
    %v2869 = vunpack.c.l.b16 %v2849
    %v2870 = vunpack.c.h.b16 %v2849
    %v2871 = vunpack.c.l.b16 %v2850
    %v2872 = vunpack.c.h.b16 %v2850
    %v2873 = vunpack.c.l.b16 %v2851
    %v2874 = vunpack.c.h.b16 %v2851
    %v2875 = vunpack.c.l.b16 %v2852
    %v2876 = vunpack.c.h.b16 %v2852
    %v2877 = vpack.c.b16 %v2861, %v2861
    %v2878 = vpack.c.b16 %v2862, %v2862
    %v2879 = vpack.c.b16 %v2863, %v2863
    %v2880 = vpack.c.b16 %v2864, %v2864
    %v2881 = vpack.c.b16 %v2865, %v2865
    %v2882 = vpack.c.b16 %v2866, %v2866
    %v2883 = vpack.c.b16 %v2867, %v2867
    %v2884 = vpack.c.b16 %v2868, %v2868
    %v2885 = vpack.c.b16 %v2869, %v2869
    %v2886 = vpack.c.b16 %v2870, %v2870
    %v2887 = vpack.c.b16 %v2871, %v2871
    %v2888 = vpack.c.b16 %v2872, %v2872
    %v2889 = vpack.c.b16 %v2873, %v2873
    %v2890 = vpack.c.b16 %v2874, %v2874
    %v2891 = vpack.c.b16 %v2875, %v2875
    %v2892 = vpack.c.b16 %v2876, %v2876
    %2909 = vst [vmem:[#allocation4] sm:$0xf] %v2877
    %2910 = vst [vmem:[#allocation4 + $0x4] sm:$0xf] %v2878
    %2911 = vst [vmem:[#allocation4 + $0x8] sm:$0xf] %v2879
    %2912 = vst [vmem:[#allocation4 + $0xc] sm:$0xf] %v2880
    %2913 = vst [vmem:[#allocation4 + $0x10] sm:$0xf] %v2881
    %2914 = vst [vmem:[#allocation4 + $0x14] sm:$0xf] %v2882
    %2915 = vst [vmem:[#allocation4 + $0x18] sm:$0xf] %v2883
    %2916 = vst [vmem:[#allocation4 + $0x1c] sm:$0xf] %v2884
    %2917 = vst [vmem:[#allocation4 + $0x20] sm:$0xf] %v2885
    %2918 = vst [vmem:[#allocation4 + $0x24] sm:$0xf] %v2886
    %2919 = vst [vmem:[#allocation4 + $0x28] sm:$0xf] %v2887
    %2920 = vst [vmem:[#allocation4 + $0x2c] sm:$0xf] %v2888
    %2921 = vst [vmem:[#allocation4 + $0x30] sm:$0xf] %v2889
    %2922 = vst [vmem:[#allocation4 + $0x34] sm:$0xf] %v2890
    %2923 = vst [vmem:[#allocation4 + $0x38] sm:$0xf] %v2891
    %2924 = vst [vmem:[#allocation4 + $0x3c] sm:$0xf] %v2892
    %v2925 = vld [vmem:[#allocation4] sm:$0xf]
    %v2926 = vld [vmem:[#allocation4 + $0x4] sm:$0xf]
    %v2927 = vld [vmem:[#allocation4 + $0x8] sm:$0xf]
    %v2928 = vld [vmem:[#allocation4 + $0xc] sm:$0xf]
    %v2929 = vld [vmem:[#allocation4 + $0x10] sm:$0xf]
    %v2930 = vld [vmem:[#allocation4 + $0x14] sm:$0xf]
    %v2931 = vld [vmem:[#allocation4 + $0x18] sm:$0xf]
    %v2932 = vld [vmem:[#allocation4 + $0x1c] sm:$0xf]
    %v2933 = vld [vmem:[#allocation4 + $0x20] sm:$0xf]
    %v2934 = vld [vmem:[#allocation4 + $0x24] sm:$0xf]
    %v2935 = vld [vmem:[#allocation4 + $0x28] sm:$0xf]
    %v2936 = vld [vmem:[#allocation4 + $0x2c] sm:$0xf]
    %v2937 = vld [vmem:[#allocation4 + $0x30] sm:$0xf]
    %v2938 = vld [vmem:[#allocation4 + $0x34] sm:$0xf]
    %v2939 = vld [vmem:[#allocation4 + $0x38] sm:$0xf]
    %v2940 = vld [vmem:[#allocation4 + $0x3c] sm:$0xf]
    %v2941 = vld [vmem:[%s5] sm:$0xf]
    %v2942 = vld [vmem:[%s5 + $0x4] sm:$0xf]
    %v2943 = vld [vmem:[%s5 + $0x8] sm:$0xf]
    %v2944 = vld [vmem:[%s5 + $0xc] sm:$0xf]
    %v2945 = vld [vmem:[%s5 + $0x10] sm:$0xf]
    %v2946 = vld [vmem:[%s5 + $0x14] sm:$0xf]
    %v2947 = vld [vmem:[%s5 + $0x18] sm:$0xf]
    %v2948 = vld [vmem:[%s5 + $0x1c] sm:$0xf]
    %v2949 = vld [vmem:[%s5 + $0x20] sm:$0xf]
    %v2950 = vld [vmem:[%s5 + $0x24] sm:$0xf]
    %v2951 = vld [vmem:[%s5 + $0x28] sm:$0xf]
    %v2952 = vld [vmem:[%s5 + $0x2c] sm:$0xf]
    %v2953 = vld [vmem:[%s5 + $0x30] sm:$0xf]
    %v2954 = vld [vmem:[%s5 + $0x34] sm:$0xf]
    %v2955 = vld [vmem:[%s5 + $0x38] sm:$0xf]
    %v2956 = vld [vmem:[%s5 + $0x3c] sm:$0xf]
    %v2957 = vld [vmem:[#allocation4 + $0x40] sm:$0x1]
    %s2958 = scalar_lea.vmem %s5, 64
    %v2959 = vld [vmem:[%s2958] sm:$0xf]
    %v2960 = vld [vmem:[%s2958 + $0x4] sm:$0xf]
    %v2961 = vld [vmem:[%s2958 + $0x8] sm:$0xf]
    %v2962 = vld [vmem:[%s2958 + $0xc] sm:$0xf]
    %v2963 = vld [vmem:[%s2958 + $0x10] sm:$0xf]
    %v2964 = vld [vmem:[%s2958 + $0x14] sm:$0xf]
    %v2965 = vld [vmem:[%s2958 + $0x18] sm:$0xf]
    %v2966 = vld [vmem:[%s2958 + $0x1c] sm:$0xf]
    %v2967 = vld [vmem:[%s2958 + $0x20] sm:$0xf]
    %v2968 = vld [vmem:[%s2958 + $0x24] sm:$0xf]
    %v2969 = vld [vmem:[%s2958 + $0x28] sm:$0xf]
    %v2970 = vld [vmem:[%s2958 + $0x2c] sm:$0xf]
    %v2971 = vld [vmem:[%s2958 + $0x30] sm:$0xf]
    %v2972 = vld [vmem:[%s2958 + $0x34] sm:$0xf]
    %v2973 = vld [vmem:[%s2958 + $0x38] sm:$0xf]
    %v2974 = vld [vmem:[%s2958 + $0x3c] sm:$0xf]
    %v2992 = vunpack.c.l.b16 %v2925
    %v2993 = vunpack.c.l.b16 %v2926
    %v2994 = vunpack.c.l.b16 %v2927
    %v2995 = vunpack.c.l.b16 %v2928
    %v2996 = vunpack.c.l.b16 %v2929
    %v2997 = vunpack.c.l.b16 %v2930
    %v2998 = vunpack.c.l.b16 %v2931
    %v2999 = vunpack.c.l.b16 %v2932
    %v3000 = vunpack.c.l.b16 %v2933
    %v3001 = vunpack.c.l.b16 %v2934
    %v3002 = vunpack.c.l.b16 %v2935
    %v3003 = vunpack.c.l.b16 %v2936
    %v3004 = vunpack.c.l.b16 %v2937
    %v3005 = vunpack.c.l.b16 %v2938
    %v3006 = vunpack.c.l.b16 %v2939
    %v3007 = vunpack.c.l.b16 %v2940
    %v3008 = vunpack.c.l.b16 %v2957
    %v3009 = vpack.c.b16 %v2993, %v2992
    %v3010 = vpack.c.b16 %v2995, %v2994
    %v3011 = vpack.c.b16 %v2997, %v2996
    %v3012 = vpack.c.b16 %v2999, %v2998
    %v3013 = vpack.c.b16 %v3001, %v3000
    %v3014 = vpack.c.b16 %v3003, %v3002
    %v3015 = vpack.c.b16 %v3005, %v3004
    %v3016 = vpack.c.b16 %v3007, %v3006
    %v3017 = vpack.c.b16 %v3008, %v3008
    %v3019 = vshrl.u32 %v3009, 16
    %v3021 = vshll.u32 %v3009, 16
    %v3023 = vrot.slane %v3021, 1
    %v3024 = vor.u32 %v3019, %v3023
    %v3026 = vshll.u32 %v3010, 16
    %v3028 = vrot.slane %v3026, 1
    %v3029 = vsel %vm202, %v3024, %v3028
    %v3030 = vshrl.u32 %v3010, 16
    %v3032 = vor.u32 %v3030, %v3028
    %v3034 = vshll.u32 %v3011, 16
    %v3036 = vrot.slane %v3034, 1
    %v3037 = vsel %vm202, %v3032, %v3036
    %v3038 = vshrl.u32 %v3011, 16
    %v3040 = vor.u32 %v3038, %v3036
    %v3042 = vshll.u32 %v3012, 16
    %v3044 = vrot.slane %v3042, 1
    %v3045 = vsel %vm202, %v3040, %v3044
    %v3046 = vshrl.u32 %v3012, 16
    %v3048 = vor.u32 %v3046, %v3044
    %v3050 = vshll.u32 %v3013, 16
    %v3052 = vrot.slane %v3050, 1
    %v3053 = vsel %vm202, %v3048, %v3052
    %v3054 = vshrl.u32 %v3013, 16
    %v3056 = vor.u32 %v3054, %v3052
    %v3058 = vshll.u32 %v3014, 16
    %v3060 = vrot.slane %v3058, 1
    %v3061 = vsel %vm202, %v3056, %v3060
    %v3062 = vshrl.u32 %v3014, 16
    %v3064 = vor.u32 %v3062, %v3060
    %v3066 = vshll.u32 %v3015, 16
    %v3068 = vrot.slane %v3066, 1
    %v3069 = vsel %vm202, %v3064, %v3068
    %v3070 = vshrl.u32 %v3015, 16
    %v3072 = vor.u32 %v3070, %v3068
    %v3074 = vshll.u32 %v3016, 16
    %v3076 = vrot.slane %v3074, 1
    %v3077 = vsel %vm202, %v3072, %v3076
    %v3078 = vshrl.u32 %v3016, 16
    %v3080 = vor.u32 %v3078, %v3076
    %v3082 = vshll.u32 %v3017, 16
    %v3084 = vrot.slane %v3082, 1
    %v3085 = vsel %vm202, %v3080, %v3084
    %v3110 = vunpack.c.l.b16 %v2959
    %v3111 = vunpack.c.l.b16 %v2960
    %v3112 = vunpack.c.l.b16 %v2961
    %v3113 = vunpack.c.l.b16 %v2962
    %v3114 = vunpack.c.l.b16 %v2963
    %v3115 = vunpack.c.l.b16 %v2964
    %v3116 = vunpack.c.l.b16 %v2965
    %v3117 = vunpack.c.l.b16 %v2966
    %v3118 = vunpack.c.l.b16 %v2967
    %v3119 = vunpack.c.l.b16 %v2968
    %v3120 = vunpack.c.l.b16 %v2969
    %v3121 = vunpack.c.l.b16 %v2970
    %v3122 = vunpack.c.l.b16 %v2971
    %v3123 = vunpack.c.l.b16 %v2972
    %v3124 = vunpack.c.l.b16 %v2973
    %v3125 = vunpack.c.l.b16 %v2974
    %v3126 = vpack.c.b16 %v3111, %v3110
    %v3127 = vpack.c.b16 %v3113, %v3112
    %v3128 = vpack.c.b16 %v3115, %v3114
    %v3129 = vpack.c.b16 %v3117, %v3116
    %v3130 = vpack.c.b16 %v3119, %v3118
    %v3131 = vpack.c.b16 %v3121, %v3120
    %v3132 = vpack.c.b16 %v3123, %v3122
    %v3133 = vpack.c.b16 %v3125, %v3124
    %3142 = vmatprep.subr.bf16.mxu0 0
    %3143 = vmatpush1.bf16.msra.mxu0 %v3133
    %3144 = vmatprep.subr.bf16.mxu0 0
    %3145 = vmatpush1.bf16.msra.mxu0 %v3132
    %3146 = vmatprep.subr.bf16.mxu0 0
    %3147 = vmatpush1.bf16.msra.mxu0 %v3131
    %3148 = vmatprep.subr.bf16.mxu0 0
    %3149 = vmatpush1.bf16.msra.mxu0 %v3130
    %3150 = vmatprep.subr.bf16.mxu0 0
    %3151 = vmatpush1.bf16.msra.mxu0 %v3129
    %3152 = vmatprep.subr.bf16.mxu0 0
    %3153 = vmatpush1.bf16.msra.mxu0 %v3128
    %3154 = vmatprep.subr.bf16.mxu0 0
    %3155 = vmatpush1.bf16.msra.mxu0 %v3127
    %3156 = vmatprep.subr.bf16.mxu0 0
    %3157 = vmatpush1.bf16.msra.mxu0 %v3126
    %3158 = vmatprep.subr.bf16.mxu0 0
    %3159 = vmatpush2.bf16.msra.mxu0 0
    %3160 = vmatprep.subr.bf16.mxu0 0
    %3161 = vmatpush2.bf16.msra.mxu0 0
    %3162 = vmatprep.subr.bf16.mxu0 0
    %3163 = vmatpush2.bf16.msra.mxu0 0
    %3164 = vmatprep.subr.bf16.mxu0 0
    %3165 = vmatpush2.bf16.msra.mxu0 0
    %3166 = vmatprep.subr.bf16.mxu0 0
    %3167 = vmatpush2.bf16.msra.mxu0 0
    %3168 = vmatprep.subr.bf16.mxu0 0
    %3169 = vmatpush2.bf16.msra.mxu0 0
    %3170 = vmatprep.subr.bf16.mxu0 0
    %3171 = vmatpush2.bf16.msra.mxu0 0
    %3172 = vmatprep.subr.bf16.mxu0 0
    %3173 = vmatpush2.bf16.msra.mxu0 0
    %3174 = vmatprep.mubr.bf16.mxu0 0
    %3175 = vmatmul.mubr.bf16.gmra.mxu0 %v3029
    %v3176 = vpop.f32.mrf.mxu0
    %v3177 = vadd.f32 0.0, %v3176
    %v3178 = vpop.f32.mrf.mxu0
    %v3179 = vpop.f32.mrf.mxu0
    %v3180 = vadd.f32 0.0, %v3179
    %v3181 = vpop.f32.mrf.mxu0
    %3182 = vmatprep.mubr.bf16.mxu0 0
    %3183 = vmatmul.mubr.bf16.gmra.mxu0 %v3037
    %v3184 = vpop.f32.mrf.mxu0
    %v3185 = vadd.f32 0.0, %v3184
    %v3186 = vpop.f32.mrf.mxu0
    %v3187 = vpop.f32.mrf.mxu0
    %v3188 = vadd.f32 0.0, %v3187
    %v3189 = vpop.f32.mrf.mxu0
    %3190 = vmatprep.mubr.bf16.mxu0 0
    %3191 = vmatmul.mubr.bf16.gmra.mxu0 %v3045
    %v3192 = vpop.f32.mrf.mxu0
    %v3193 = vadd.f32 0.0, %v3192
    %v3194 = vpop.f32.mrf.mxu0
    %v3195 = vpop.f32.mrf.mxu0
    %v3196 = vadd.f32 0.0, %v3195
    %v3197 = vpop.f32.mrf.mxu0
    %3198 = vmatprep.mubr.bf16.mxu0 0
    %3199 = vmatmul.mubr.bf16.gmra.mxu0 %v3053
    %v3200 = vpop.f32.mrf.mxu0
    %v3201 = vadd.f32 0.0, %v3200
    %v3202 = vpop.f32.mrf.mxu0
    %v3203 = vpop.f32.mrf.mxu0
    %v3204 = vadd.f32 0.0, %v3203
    %v3205 = vpop.f32.mrf.mxu0
    %3206 = vmatprep.mubr.bf16.mxu0 0
    %3207 = vmatmul.mubr.bf16.gmra.mxu0 %v3061
    %v3208 = vpop.f32.mrf.mxu0
    %v3209 = vadd.f32 0.0, %v3208
    %v3210 = vpop.f32.mrf.mxu0
    %v3211 = vpop.f32.mrf.mxu0
    %v3212 = vadd.f32 0.0, %v3211
    %v3213 = vpop.f32.mrf.mxu0
    %3214 = vmatprep.mubr.bf16.mxu0 0
    %3215 = vmatmul.mubr.bf16.gmra.mxu0 %v3069
    %v3216 = vpop.f32.mrf.mxu0
    %v3217 = vadd.f32 0.0, %v3216
    %v3218 = vpop.f32.mrf.mxu0
    %v3219 = vpop.f32.mrf.mxu0
    %v3220 = vadd.f32 0.0, %v3219
    %v3221 = vpop.f32.mrf.mxu0
    %3222 = vmatprep.mubr.bf16.mxu0 0
    %3223 = vmatmul.mubr.bf16.gmra.mxu0 %v3077
    %v3224 = vpop.f32.mrf.mxu0
    %v3225 = vadd.f32 0.0, %v3224
    %v3226 = vpop.f32.mrf.mxu0
    %v3227 = vpop.f32.mrf.mxu0
    %v3228 = vadd.f32 0.0, %v3227
    %v3229 = vpop.f32.mrf.mxu0
    %3230 = vmatprep.mubr.bf16.mxu0 0
    %3231 = vmatmul.mubr.bf16.gmra.mxu0 %v3085
    %v3232 = vpop.f32.mrf.mxu0
    %v3233 = vadd.f32 0.0, %v3232
    %v3234 = vpop.f32.mrf.mxu0
    %v3235 = vpop.f32.mrf.mxu0
    %v3236 = vadd.f32 0.0, %v3235
    %v3237 = vpop.f32.mrf.mxu0
    %3238 = vdwg.mxu0
    %v3263 = vunpack.c.l.b16 %v2941
    %v3264 = vunpack.c.l.b16 %v2942
    %v3265 = vunpack.c.l.b16 %v2943
    %v3266 = vunpack.c.l.b16 %v2944
    %v3267 = vunpack.c.l.b16 %v2945
    %v3268 = vunpack.c.l.b16 %v2946
    %v3269 = vunpack.c.l.b16 %v2947
    %v3270 = vunpack.c.l.b16 %v2948
    %v3271 = vunpack.c.l.b16 %v2949
    %v3272 = vunpack.c.l.b16 %v2950
    %v3273 = vunpack.c.l.b16 %v2951
    %v3274 = vunpack.c.l.b16 %v2952
    %v3275 = vunpack.c.l.b16 %v2953
    %v3276 = vunpack.c.l.b16 %v2954
    %v3277 = vunpack.c.l.b16 %v2955
    %v3278 = vunpack.c.l.b16 %v2956
    %v3279 = vpack.c.b16 %v3264, %v3263
    %v3280 = vpack.c.b16 %v3266, %v3265
    %v3281 = vpack.c.b16 %v3268, %v3267
    %v3282 = vpack.c.b16 %v3270, %v3269
    %v3283 = vpack.c.b16 %v3272, %v3271
    %v3284 = vpack.c.b16 %v3274, %v3273
    %v3285 = vpack.c.b16 %v3276, %v3275
    %v3286 = vpack.c.b16 %v3278, %v3277
    %3295 = vmatprep.subr.bf16.mxu0 0
    %3296 = vmatpush1.bf16.msra.mxu0 %v3286
    %3297 = vmatprep.subr.bf16.mxu0 0
    %3298 = vmatpush1.bf16.msra.mxu0 %v3285
    %3299 = vmatprep.subr.bf16.mxu0 0
    %3300 = vmatpush1.bf16.msra.mxu0 %v3284
    %3301 = vmatprep.subr.bf16.mxu0 0
    %3302 = vmatpush1.bf16.msra.mxu0 %v3283
    %3303 = vmatprep.subr.bf16.mxu0 0
    %3304 = vmatpush1.bf16.msra.mxu0 %v3282
    %3305 = vmatprep.subr.bf16.mxu0 0
    %3306 = vmatpush1.bf16.msra.mxu0 %v3281
    %3307 = vmatprep.subr.bf16.mxu0 0
    %3308 = vmatpush1.bf16.msra.mxu0 %v3280
    %3309 = vmatprep.subr.bf16.mxu0 0
    %3310 = vmatpush1.bf16.msra.mxu0 %v3279
    %3311 = vmatprep.subr.bf16.mxu0 0
    %3312 = vmatpush2.bf16.msra.mxu0 0
    %3313 = vmatprep.subr.bf16.mxu0 0
    %3314 = vmatpush2.bf16.msra.mxu0 0
    %3315 = vmatprep.subr.bf16.mxu0 0
    %3316 = vmatpush2.bf16.msra.mxu0 0
    %3317 = vmatprep.subr.bf16.mxu0 0
    %3318 = vmatpush2.bf16.msra.mxu0 0
    %3319 = vmatprep.subr.bf16.mxu0 0
    %3320 = vmatpush2.bf16.msra.mxu0 0
    %3321 = vmatprep.subr.bf16.mxu0 0
    %3322 = vmatpush2.bf16.msra.mxu0 0
    %3323 = vmatprep.subr.bf16.mxu0 0
    %3324 = vmatpush2.bf16.msra.mxu0 0
    %3325 = vmatprep.subr.bf16.mxu0 0
    %3326 = vmatpush2.bf16.msra.mxu0 0
    %3327 = vmatprep.mubr.bf16.mxu0 0
    %3328 = vmatmul.mubr.bf16.gmra.mxu0 %v3009
    %v3329 = vpop.f32.mrf.mxu0
    %v3330 = vadd.f32 %v3177, %v3329
    %v3331 = vpop.f32.mrf.mxu0
    %v3332 = vpop.f32.mrf.mxu0
    %v3333 = vadd.f32 %v3180, %v3332
    %v3334 = vpop.f32.mrf.mxu0
    %3335 = vmatprep.mubr.bf16.mxu0 0
    %3336 = vmatmul.mubr.bf16.gmra.mxu0 %v3010
    %v3337 = vpop.f32.mrf.mxu0
    %v3338 = vadd.f32 %v3185, %v3337
    %v3339 = vpop.f32.mrf.mxu0
    %v3340 = vpop.f32.mrf.mxu0
    %v3341 = vadd.f32 %v3188, %v3340
    %v3342 = vpop.f32.mrf.mxu0
    %3343 = vmatprep.mubr.bf16.mxu0 0
    %3344 = vmatmul.mubr.bf16.gmra.mxu0 %v3011
    %v3345 = vpop.f32.mrf.mxu0
    %v3346 = vadd.f32 %v3193, %v3345
    %v3347 = vpop.f32.mrf.mxu0
    %v3348 = vpop.f32.mrf.mxu0
    %v3349 = vadd.f32 %v3196, %v3348
    %v3350 = vpop.f32.mrf.mxu0
    %3351 = vmatprep.mubr.bf16.mxu0 0
    %3352 = vmatmul.mubr.bf16.gmra.mxu0 %v3012
    %v3353 = vpop.f32.mrf.mxu0
    %v3354 = vadd.f32 %v3201, %v3353
    %v3355 = vpop.f32.mrf.mxu0
    %v3356 = vpop.f32.mrf.mxu0
    %v3357 = vadd.f32 %v3204, %v3356
    %v3358 = vpop.f32.mrf.mxu0
    %3359 = vmatprep.mubr.bf16.mxu0 0
    %3360 = vmatmul.mubr.bf16.gmra.mxu0 %v3013
    %v3361 = vpop.f32.mrf.mxu0
    %v3362 = vadd.f32 %v3209, %v3361
    %v3363 = vpop.f32.mrf.mxu0
    %v3364 = vpop.f32.mrf.mxu0
    %v3365 = vadd.f32 %v3212, %v3364
    %v3366 = vpop.f32.mrf.mxu0
    %3367 = vmatprep.mubr.bf16.mxu0 0
    %3368 = vmatmul.mubr.bf16.gmra.mxu0 %v3014
    %v3369 = vpop.f32.mrf.mxu0
    %v3370 = vadd.f32 %v3217, %v3369
    %v3371 = vpop.f32.mrf.mxu0
    %v3372 = vpop.f32.mrf.mxu0
    %v3373 = vadd.f32 %v3220, %v3372
    %v3374 = vpop.f32.mrf.mxu0
    %3375 = vmatprep.mubr.bf16.mxu0 0
    %3376 = vmatmul.mubr.bf16.gmra.mxu0 %v3015
    %v3377 = vpop.f32.mrf.mxu0
    %v3378 = vadd.f32 %v3225, %v3377
    %v3379 = vpop.f32.mrf.mxu0
    %v3380 = vpop.f32.mrf.mxu0
    %v3381 = vadd.f32 %v3228, %v3380
    %v3382 = vpop.f32.mrf.mxu0
    %3383 = vmatprep.mubr.bf16.mxu0 0
    %3384 = vmatmul.mubr.bf16.gmra.mxu0 %v3016
    %v3385 = vpop.f32.mrf.mxu0
    %v3386 = vadd.f32 %v3233, %v3385
    %v3387 = vpop.f32.mrf.mxu0
    %v3388 = vpop.f32.mrf.mxu0
    %v3389 = vadd.f32 %v3236, %v3388
    %v3390 = vpop.f32.mrf.mxu0
    %3391 = vdwg.mxu0
    %v3392 = vld [vmem:[#allocation4] sm:$0xc]
    %v3393 = vld [vmem:[#allocation4 + $0x40] sm:$0x3]
    %s3394 = scalar_lea.vmem %s5, 128
    %v3395 = vld [vmem:[%s3394] sm:$0xf]
    %v3396 = vld [vmem:[%s3394 + $0x4] sm:$0xf]
    %v3397 = vld [vmem:[%s3394 + $0x8] sm:$0xf]
    %v3398 = vld [vmem:[%s3394 + $0xc] sm:$0xf]
    %v3399 = vld [vmem:[%s3394 + $0x10] sm:$0xf]
    %v3400 = vld [vmem:[%s3394 + $0x14] sm:$0xf]
    %v3401 = vld [vmem:[%s3394 + $0x18] sm:$0xf]
    %v3402 = vld [vmem:[%s3394 + $0x1c] sm:$0xf]
    %v3403 = vld [vmem:[%s3394 + $0x20] sm:$0xf]
    %v3404 = vld [vmem:[%s3394 + $0x24] sm:$0xf]
    %v3405 = vld [vmem:[%s3394 + $0x28] sm:$0xf]
    %v3406 = vld [vmem:[%s3394 + $0x2c] sm:$0xf]
    %v3407 = vld [vmem:[%s3394 + $0x30] sm:$0xf]
    %v3408 = vld [vmem:[%s3394 + $0x34] sm:$0xf]
    %v3409 = vld [vmem:[%s3394 + $0x38] sm:$0xf]
    %v3410 = vld [vmem:[%s3394 + $0x3c] sm:$0xf]
    %v3411 = vld [vmem:[#allocation4 + $0x40] sm:$0x7]
    %s3412 = scalar_lea.vmem %s5, 192
    %v3413 = vld [vmem:[%s3412] sm:$0xf]
    %v3414 = vld [vmem:[%s3412 + $0x4] sm:$0xf]
    %v3415 = vld [vmem:[%s3412 + $0x8] sm:$0xf]
    %v3416 = vld [vmem:[%s3412 + $0xc] sm:$0xf]
    %v3417 = vld [vmem:[%s3412 + $0x10] sm:$0xf]
    %v3418 = vld [vmem:[%s3412 + $0x14] sm:$0xf]
    %v3419 = vld [vmem:[%s3412 + $0x18] sm:$0xf]
    %v3420 = vld [vmem:[%s3412 + $0x1c] sm:$0xf]
    %v3421 = vld [vmem:[%s3412 + $0x20] sm:$0xf]
    %v3422 = vld [vmem:[%s3412 + $0x24] sm:$0xf]
    %v3423 = vld [vmem:[%s3412 + $0x28] sm:$0xf]
    %v3424 = vld [vmem:[%s3412 + $0x2c] sm:$0xf]
    %v3425 = vld [vmem:[%s3412 + $0x30] sm:$0xf]
    %v3426 = vld [vmem:[%s3412 + $0x34] sm:$0xf]
    %v3427 = vld [vmem:[%s3412 + $0x38] sm:$0xf]
    %v3428 = vld [vmem:[%s3412 + $0x3c] sm:$0xf]
    %v3431 = vunpack.c.l.b16 %v3392
    %v3432 = vunpack.c.l.b16 %v3411
    %v3433 = vpack.c.b16 %v2993, %v3431
    %v3434 = vpack.c.b16 %v3432, %v3432
    %v3436 = vshrl.u32 %v3433, 16
    %v3438 = vrot.slane %v3436, 2
    %v3439 = vshll.u32 %v3433, 16
    %v3441 = vrot.slane %v3439, 3
    %v3442 = vor.u32 %v3438, %v3441
    %v3443 = vrot.slane %v3030, 2
    %v3444 = vrot.slane %v3026, 3
    %v3445 = vor.u32 %v3443, %v3444
    %v3446 = vsel %vm538, %v3442, %v3445
    %v3447 = vrot.slane %v3038, 2
    %v3448 = vrot.slane %v3034, 3
    %v3449 = vor.u32 %v3447, %v3448
    %v3450 = vsel %vm538, %v3445, %v3449
    %v3451 = vrot.slane %v3046, 2
    %v3452 = vrot.slane %v3042, 3
    %v3453 = vor.u32 %v3451, %v3452
    %v3454 = vsel %vm538, %v3449, %v3453
    %v3455 = vrot.slane %v3054, 2
    %v3456 = vrot.slane %v3050, 3
    %v3457 = vor.u32 %v3455, %v3456
    %v3458 = vsel %vm538, %v3453, %v3457
    %v3459 = vrot.slane %v3062, 2
    %v3460 = vrot.slane %v3058, 3
    %v3461 = vor.u32 %v3459, %v3460
    %v3462 = vsel %vm538, %v3457, %v3461
    %v3463 = vrot.slane %v3070, 2
    %v3464 = vrot.slane %v3066, 3
    %v3465 = vor.u32 %v3463, %v3464
    %v3466 = vsel %vm538, %v3461, %v3465
    %v3467 = vrot.slane %v3078, 2
    %v3468 = vrot.slane %v3074, 3
    %v3469 = vor.u32 %v3467, %v3468
    %v3470 = vsel %vm538, %v3465, %v3469
    %v3472 = vshrl.u32 %v3434, 16
    %v3474 = vrot.slane %v3472, 2
    %v3475 = vshll.u32 %v3434, 16
    %v3477 = vrot.slane %v3475, 3
    %v3478 = vor.u32 %v3474, %v3477
    %v3479 = vsel %vm538, %v3469, %v3478
    %v3504 = vunpack.c.l.b16 %v3413
    %v3505 = vunpack.c.l.b16 %v3414
    %v3506 = vunpack.c.l.b16 %v3415
    %v3507 = vunpack.c.l.b16 %v3416
    %v3508 = vunpack.c.l.b16 %v3417
    %v3509 = vunpack.c.l.b16 %v3418
    %v3510 = vunpack.c.l.b16 %v3419
    %v3511 = vunpack.c.l.b16 %v3420
    %v3512 = vunpack.c.l.b16 %v3421
    %v3513 = vunpack.c.l.b16 %v3422
    %v3514 = vunpack.c.l.b16 %v3423
    %v3515 = vunpack.c.l.b16 %v3424
    %v3516 = vunpack.c.l.b16 %v3425
    %v3517 = vunpack.c.l.b16 %v3426
    %v3518 = vunpack.c.l.b16 %v3427
    %v3519 = vunpack.c.l.b16 %v3428
    %v3520 = vpack.c.b16 %v3505, %v3504
    %v3521 = vpack.c.b16 %v3507, %v3506
    %v3522 = vpack.c.b16 %v3509, %v3508
    %v3523 = vpack.c.b16 %v3511, %v3510
    %v3524 = vpack.c.b16 %v3513, %v3512
    %v3525 = vpack.c.b16 %v3515, %v3514
    %v3526 = vpack.c.b16 %v3517, %v3516
    %v3527 = vpack.c.b16 %v3519, %v3518
    %3536 = vmatprep.subr.bf16.mxu0 0
    %3537 = vmatpush1.bf16.msra.mxu0 %v3527
    %3538 = vmatprep.subr.bf16.mxu0 0
    %3539 = vmatpush1.bf16.msra.mxu0 %v3526
    %3540 = vmatprep.subr.bf16.mxu0 0
    %3541 = vmatpush1.bf16.msra.mxu0 %v3525
    %3542 = vmatprep.subr.bf16.mxu0 0
    %3543 = vmatpush1.bf16.msra.mxu0 %v3524
    %3544 = vmatprep.subr.bf16.mxu0 0
    %3545 = vmatpush1.bf16.msra.mxu0 %v3523
    %3546 = vmatprep.subr.bf16.mxu0 0
    %3547 = vmatpush1.bf16.msra.mxu0 %v3522
    %3548 = vmatprep.subr.bf16.mxu0 0
    %3549 = vmatpush1.bf16.msra.mxu0 %v3521
    %3550 = vmatprep.subr.bf16.mxu0 0
    %3551 = vmatpush1.bf16.msra.mxu0 %v3520
    %3552 = vmatprep.subr.bf16.mxu0 0
    %3553 = vmatpush2.bf16.msra.mxu0 0
    %3554 = vmatprep.subr.bf16.mxu0 0
    %3555 = vmatpush2.bf16.msra.mxu0 0
    %3556 = vmatprep.subr.bf16.mxu0 0
    %3557 = vmatpush2.bf16.msra.mxu0 0
    %3558 = vmatprep.subr.bf16.mxu0 0
    %3559 = vmatpush2.bf16.msra.mxu0 0
    %3560 = vmatprep.subr.bf16.mxu0 0
    %3561 = vmatpush2.bf16.msra.mxu0 0
    %3562 = vmatprep.subr.bf16.mxu0 0
    %3563 = vmatpush2.bf16.msra.mxu0 0
    %3564 = vmatprep.subr.bf16.mxu0 0
    %3565 = vmatpush2.bf16.msra.mxu0 0
    %3566 = vmatprep.subr.bf16.mxu0 0
    %3567 = vmatpush2.bf16.msra.mxu0 0
    %3568 = vmatprep.mubr.bf16.mxu0 0
    %3569 = vmatmul.mubr.bf16.gmra.mxu0 %v3446
    %v3570 = vpop.f32.mrf.mxu0
    %v3571 = vadd.f32 0.0, %v3570
    %v3572 = vpop.f32.mrf.mxu0
    %v3573 = vpop.f32.mrf.mxu0
    %v3574 = vadd.f32 0.0, %v3573
    %v3575 = vpop.f32.mrf.mxu0
    %3576 = vmatprep.mubr.bf16.mxu0 0
    %3577 = vmatmul.mubr.bf16.gmra.mxu0 %v3450
    %v3578 = vpop.f32.mrf.mxu0
    %v3579 = vadd.f32 0.0, %v3578
    %v3580 = vpop.f32.mrf.mxu0
    %v3581 = vpop.f32.mrf.mxu0
    %v3582 = vadd.f32 0.0, %v3581
    %v3583 = vpop.f32.mrf.mxu0
    %3584 = vmatprep.mubr.bf16.mxu0 0
    %3585 = vmatmul.mubr.bf16.gmra.mxu0 %v3454
    %v3586 = vpop.f32.mrf.mxu0
    %v3587 = vadd.f32 0.0, %v3586
    %v3588 = vpop.f32.mrf.mxu0
    %v3589 = vpop.f32.mrf.mxu0
    %v3590 = vadd.f32 0.0, %v3589
    %v3591 = vpop.f32.mrf.mxu0
    %3592 = vmatprep.mubr.bf16.mxu0 0
    %3593 = vmatmul.mubr.bf16.gmra.mxu0 %v3458
    %v3594 = vpop.f32.mrf.mxu0
    %v3595 = vadd.f32 0.0, %v3594
    %v3596 = vpop.f32.mrf.mxu0
    %v3597 = vpop.f32.mrf.mxu0
    %v3598 = vadd.f32 0.0, %v3597
    %v3599 = vpop.f32.mrf.mxu0
    %3600 = vmatprep.mubr.bf16.mxu0 0
    %3601 = vmatmul.mubr.bf16.gmra.mxu0 %v3462
    %v3602 = vpop.f32.mrf.mxu0
    %v3603 = vadd.f32 0.0, %v3602
    %v3604 = vpop.f32.mrf.mxu0
    %v3605 = vpop.f32.mrf.mxu0
    %v3606 = vadd.f32 0.0, %v3605
    %v3607 = vpop.f32.mrf.mxu0
    %3608 = vmatprep.mubr.bf16.mxu0 0
    %3609 = vmatmul.mubr.bf16.gmra.mxu0 %v3466
    %v3610 = vpop.f32.mrf.mxu0
    %v3611 = vadd.f32 0.0, %v3610
    %v3612 = vpop.f32.mrf.mxu0
    %v3613 = vpop.f32.mrf.mxu0
    %v3614 = vadd.f32 0.0, %v3613
    %v3615 = vpop.f32.mrf.mxu0
    %3616 = vmatprep.mubr.bf16.mxu0 0
    %3617 = vmatmul.mubr.bf16.gmra.mxu0 %v3470
    %v3618 = vpop.f32.mrf.mxu0
    %v3619 = vadd.f32 0.0, %v3618
    %v3620 = vpop.f32.mrf.mxu0
    %v3621 = vpop.f32.mrf.mxu0
    %v3622 = vadd.f32 0.0, %v3621
    %v3623 = vpop.f32.mrf.mxu0
    %3624 = vmatprep.mubr.bf16.mxu0 0
    %3625 = vmatmul.mubr.bf16.gmra.mxu0 %v3479
    %v3626 = vpop.f32.mrf.mxu0
    %v3627 = vadd.f32 0.0, %v3626
    %v3628 = vpop.f32.mrf.mxu0
    %v3629 = vpop.f32.mrf.mxu0
    %v3630 = vadd.f32 0.0, %v3629
    %v3631 = vpop.f32.mrf.mxu0
    %3632 = vdwg.mxu0
    %v3634 = vunpack.c.l.b16 %v3393
    %v3635 = vpack.c.b16 %v3634, %v3634
    %v3636 = vrot.slane %v3433, 2
    %v3637 = vrot.slane %v3010, 2
    %v3638 = vsel %vm716, %v3636, %v3637
    %v3639 = vrot.slane %v3011, 2
    %v3640 = vsel %vm716, %v3637, %v3639
    %v3641 = vrot.slane %v3012, 2
    %v3642 = vsel %vm716, %v3639, %v3641
    %v3643 = vrot.slane %v3013, 2
    %v3644 = vsel %vm716, %v3641, %v3643
    %v3645 = vrot.slane %v3014, 2
    %v3646 = vsel %vm716, %v3643, %v3645
    %v3647 = vrot.slane %v3015, 2
    %v3648 = vsel %vm716, %v3645, %v3647
    %v3649 = vrot.slane %v3016, 2
    %v3650 = vsel %vm716, %v3647, %v3649
    %v3651 = vrot.slane %v3635, 2
    %v3652 = vsel %vm716, %v3649, %v3651
    %v3677 = vunpack.c.l.b16 %v3395
    %v3678 = vunpack.c.l.b16 %v3396
    %v3679 = vunpack.c.l.b16 %v3397
    %v3680 = vunpack.c.l.b16 %v3398
    %v3681 = vunpack.c.l.b16 %v3399
    %v3682 = vunpack.c.l.b16 %v3400
    %v3683 = vunpack.c.l.b16 %v3401
    %v3684 = vunpack.c.l.b16 %v3402
    %v3685 = vunpack.c.l.b16 %v3403
    %v3686 = vunpack.c.l.b16 %v3404
    %v3687 = vunpack.c.l.b16 %v3405
    %v3688 = vunpack.c.l.b16 %v3406
    %v3689 = vunpack.c.l.b16 %v3407
    %v3690 = vunpack.c.l.b16 %v3408
    %v3691 = vunpack.c.l.b16 %v3409
    %v3692 = vunpack.c.l.b16 %v3410
    %v3693 = vpack.c.b16 %v3678, %v3677
    %v3694 = vpack.c.b16 %v3680, %v3679
    %v3695 = vpack.c.b16 %v3682, %v3681
    %v3696 = vpack.c.b16 %v3684, %v3683
    %v3697 = vpack.c.b16 %v3686, %v3685
    %v3698 = vpack.c.b16 %v3688, %v3687
    %v3699 = vpack.c.b16 %v3690, %v3689
    %v3700 = vpack.c.b16 %v3692, %v3691
    %3709 = vmatprep.subr.bf16.mxu0 0
    %3710 = vmatpush1.bf16.msra.mxu0 %v3700
    %3711 = vmatprep.subr.bf16.mxu0 0
    %3712 = vmatpush1.bf16.msra.mxu0 %v3699
    %3713 = vmatprep.subr.bf16.mxu0 0
    %3714 = vmatpush1.bf16.msra.mxu0 %v3698
    %3715 = vmatprep.subr.bf16.mxu0 0
    %3716 = vmatpush1.bf16.msra.mxu0 %v3697
    %3717 = vmatprep.subr.bf16.mxu0 0
    %3718 = vmatpush1.bf16.msra.mxu0 %v3696
    %3719 = vmatprep.subr.bf16.mxu0 0
    %3720 = vmatpush1.bf16.msra.mxu0 %v3695
    %3721 = vmatprep.subr.bf16.mxu0 0
    %3722 = vmatpush1.bf16.msra.mxu0 %v3694
    %3723 = vmatprep.subr.bf16.mxu0 0
    %3724 = vmatpush1.bf16.msra.mxu0 %v3693
    %3725 = vmatprep.subr.bf16.mxu0 0
    %3726 = vmatpush2.bf16.msra.mxu0 0
    %3727 = vmatprep.subr.bf16.mxu0 0
    %3728 = vmatpush2.bf16.msra.mxu0 0
    %3729 = vmatprep.subr.bf16.mxu0 0
    %3730 = vmatpush2.bf16.msra.mxu0 0
    %3731 = vmatprep.subr.bf16.mxu0 0
    %3732 = vmatpush2.bf16.msra.mxu0 0
    %3733 = vmatprep.subr.bf16.mxu0 0
    %3734 = vmatpush2.bf16.msra.mxu0 0
    %3735 = vmatprep.subr.bf16.mxu0 0
    %3736 = vmatpush2.bf16.msra.mxu0 0
    %3737 = vmatprep.subr.bf16.mxu0 0
    %3738 = vmatpush2.bf16.msra.mxu0 0
    %3739 = vmatprep.subr.bf16.mxu0 0
    %3740 = vmatpush2.bf16.msra.mxu0 0
    %3741 = vmatprep.mubr.bf16.mxu0 0
    %3742 = vmatmul.mubr.bf16.gmra.mxu0 %v3638
    %v3743 = vpop.f32.mrf.mxu0
    %v3744 = vadd.f32 %v3571, %v3743
    %v3745 = vpop.f32.mrf.mxu0
    %v3746 = vpop.f32.mrf.mxu0
    %v3747 = vadd.f32 %v3574, %v3746
    %v3748 = vpop.f32.mrf.mxu0
    %3749 = vmatprep.mubr.bf16.mxu0 0
    %3750 = vmatmul.mubr.bf16.gmra.mxu0 %v3640
    %v3751 = vpop.f32.mrf.mxu0
    %v3752 = vadd.f32 %v3579, %v3751
    %v3753 = vpop.f32.mrf.mxu0
    %v3754 = vpop.f32.mrf.mxu0
    %v3755 = vadd.f32 %v3582, %v3754
    %v3756 = vpop.f32.mrf.mxu0
    %3757 = vmatprep.mubr.bf16.mxu0 0
    %3758 = vmatmul.mubr.bf16.gmra.mxu0 %v3642
    %v3759 = vpop.f32.mrf.mxu0
    %v3760 = vadd.f32 %v3587, %v3759
    %v3761 = vpop.f32.mrf.mxu0
    %v3762 = vpop.f32.mrf.mxu0
    %v3763 = vadd.f32 %v3590, %v3762
    %v3764 = vpop.f32.mrf.mxu0
    %3765 = vmatprep.mubr.bf16.mxu0 0
    %3766 = vmatmul.mubr.bf16.gmra.mxu0 %v3644
    %v3767 = vpop.f32.mrf.mxu0
    %v3768 = vadd.f32 %v3595, %v3767
    %v3769 = vpop.f32.mrf.mxu0
    %v3770 = vpop.f32.mrf.mxu0
    %v3771 = vadd.f32 %v3598, %v3770
    %v3772 = vpop.f32.mrf.mxu0
    %3773 = vmatprep.mubr.bf16.mxu0 0
    %3774 = vmatmul.mubr.bf16.gmra.mxu0 %v3646
    %v3775 = vpop.f32.mrf.mxu0
    %v3776 = vadd.f32 %v3603, %v3775
    %v3777 = vpop.f32.mrf.mxu0
    %v3778 = vpop.f32.mrf.mxu0
    %v3779 = vadd.f32 %v3606, %v3778
    %v3780 = vpop.f32.mrf.mxu0
    %3781 = vmatprep.mubr.bf16.mxu0 0
    %3782 = vmatmul.mubr.bf16.gmra.mxu0 %v3648
    %v3783 = vpop.f32.mrf.mxu0
    %v3784 = vadd.f32 %v3611, %v3783
    %v3785 = vpop.f32.mrf.mxu0
    %v3786 = vpop.f32.mrf.mxu0
    %v3787 = vadd.f32 %v3614, %v3786
    %v3788 = vpop.f32.mrf.mxu0
    %3789 = vmatprep.mubr.bf16.mxu0 0
    %3790 = vmatmul.mubr.bf16.gmra.mxu0 %v3650
    %v3791 = vpop.f32.mrf.mxu0
    %v3792 = vadd.f32 %v3619, %v3791
    %v3793 = vpop.f32.mrf.mxu0
    %v3794 = vpop.f32.mrf.mxu0
    %v3795 = vadd.f32 %v3622, %v3794
    %v3796 = vpop.f32.mrf.mxu0
    %3797 = vmatprep.mubr.bf16.mxu0 0
    %3798 = vmatmul.mubr.bf16.gmra.mxu0 %v3652
    %v3799 = vpop.f32.mrf.mxu0
    %v3800 = vadd.f32 %v3627, %v3799
    %v3801 = vpop.f32.mrf.mxu0
    %v3802 = vpop.f32.mrf.mxu0
    %v3803 = vadd.f32 %v3630, %v3802
    %v3804 = vpop.f32.mrf.mxu0
    %3805 = vdwg.mxu0
    %v3806 = vld [vmem:[#allocation4 + $0x40] sm:$0xf]
    %s3807 = scalar_lea.vmem %s5, 256
    %v3808 = vld [vmem:[%s3807] sm:$0xf]
    %v3809 = vld [vmem:[%s3807 + $0x4] sm:$0xf]
    %v3810 = vld [vmem:[%s3807 + $0x8] sm:$0xf]
    %v3811 = vld [vmem:[%s3807 + $0xc] sm:$0xf]
    %v3812 = vld [vmem:[%s3807 + $0x10] sm:$0xf]
    %v3813 = vld [vmem:[%s3807 + $0x14] sm:$0xf]
    %v3814 = vld [vmem:[%s3807 + $0x18] sm:$0xf]
    %v3815 = vld [vmem:[%s3807 + $0x1c] sm:$0xf]
    %v3816 = vld [vmem:[%s3807 + $0x20] sm:$0xf]
    %v3817 = vld [vmem:[%s3807 + $0x24] sm:$0xf]
    %v3818 = vld [vmem:[%s3807 + $0x28] sm:$0xf]
    %v3819 = vld [vmem:[%s3807 + $0x2c] sm:$0xf]
    %v3820 = vld [vmem:[%s3807 + $0x30] sm:$0xf]
    %v3821 = vld [vmem:[%s3807 + $0x34] sm:$0xf]
    %v3822 = vld [vmem:[%s3807 + $0x38] sm:$0xf]
    %v3823 = vld [vmem:[%s3807 + $0x3c] sm:$0xf]
    %v3824 = vld [vmem:[#allocation4 + $0x4] sm:$0xf]
    %v3825 = vld [vmem:[#allocation4 + $0x8] sm:$0xf]
    %v3826 = vld [vmem:[#allocation4 + $0xc] sm:$0xf]
    %v3827 = vld [vmem:[#allocation4 + $0x10] sm:$0xf]
    %v3828 = vld [vmem:[#allocation4 + $0x14] sm:$0xf]
    %v3829 = vld [vmem:[#allocation4 + $0x18] sm:$0xf]
    %v3830 = vld [vmem:[#allocation4 + $0x1c] sm:$0xf]
    %v3831 = vld [vmem:[#allocation4 + $0x20] sm:$0xf]
    %v3832 = vld [vmem:[#allocation4 + $0x24] sm:$0xf]
    %v3833 = vld [vmem:[#allocation4 + $0x28] sm:$0xf]
    %v3834 = vld [vmem:[#allocation4 + $0x2c] sm:$0xf]
    %v3835 = vld [vmem:[#allocation4 + $0x30] sm:$0xf]
    %v3836 = vld [vmem:[#allocation4 + $0x34] sm:$0xf]
    %v3837 = vld [vmem:[#allocation4 + $0x38] sm:$0xf]
    %v3838 = vld [vmem:[#allocation4 + $0x3c] sm:$0xf]
    %v3839 = vld [vmem:[#allocation4 + $0x40] sm:$0xf]
    %v3840 = vld [vmem:[#allocation4 + $0x44] sm:$0x1]
    %s3841 = scalar_lea.vmem %s5, 320
    %v3842 = vld [vmem:[%s3841] sm:$0xf]
    %v3843 = vld [vmem:[%s3841 + $0x4] sm:$0xf]
    %v3844 = vld [vmem:[%s3841 + $0x8] sm:$0xf]
    %v3845 = vld [vmem:[%s3841 + $0xc] sm:$0xf]
    %v3846 = vld [vmem:[%s3841 + $0x10] sm:$0xf]
    %v3847 = vld [vmem:[%s3841 + $0x14] sm:$0xf]
    %v3848 = vld [vmem:[%s3841 + $0x18] sm:$0xf]
    %v3849 = vld [vmem:[%s3841 + $0x1c] sm:$0xf]
    %v3850 = vld [vmem:[%s3841 + $0x20] sm:$0xf]
    %v3851 = vld [vmem:[%s3841 + $0x24] sm:$0xf]
    %v3852 = vld [vmem:[%s3841 + $0x28] sm:$0xf]
    %v3853 = vld [vmem:[%s3841 + $0x2c] sm:$0xf]
    %v3854 = vld [vmem:[%s3841 + $0x30] sm:$0xf]
    %v3855 = vld [vmem:[%s3841 + $0x34] sm:$0xf]
    %v3856 = vld [vmem:[%s3841 + $0x38] sm:$0xf]
    %v3857 = vld [vmem:[%s3841 + $0x3c] sm:$0xf]
    %v3875 = vunpack.c.l.b16 %v3824
    %v3876 = vunpack.c.l.b16 %v3825
    %v3877 = vunpack.c.l.b16 %v3826
    %v3878 = vunpack.c.l.b16 %v3827
    %v3879 = vunpack.c.l.b16 %v3828
    %v3880 = vunpack.c.l.b16 %v3829
    %v3881 = vunpack.c.l.b16 %v3830
    %v3882 = vunpack.c.l.b16 %v3831
    %v3883 = vunpack.c.l.b16 %v3832
    %v3884 = vunpack.c.l.b16 %v3833
    %v3885 = vunpack.c.l.b16 %v3834
    %v3886 = vunpack.c.l.b16 %v3835
    %v3887 = vunpack.c.l.b16 %v3836
    %v3888 = vunpack.c.l.b16 %v3837
    %v3889 = vunpack.c.l.b16 %v3838
    %v3890 = vunpack.c.l.b16 %v3839
    %v3891 = vunpack.c.l.b16 %v3840
    %v3892 = vpack.c.b16 %v3876, %v3875
    %v3893 = vpack.c.b16 %v3878, %v3877
    %v3894 = vpack.c.b16 %v3880, %v3879
    %v3895 = vpack.c.b16 %v3882, %v3881
    %v3896 = vpack.c.b16 %v3884, %v3883
    %v3897 = vpack.c.b16 %v3886, %v3885
    %v3898 = vpack.c.b16 %v3888, %v3887
    %v3899 = vpack.c.b16 %v3890, %v3889
    %v3900 = vpack.c.b16 %v3891, %v3891
    %v3902 = vshrl.u32 %v3892, 16
    %v3904 = vshll.u32 %v3892, 16
    %v3906 = vrot.slane %v3904, 1
    %v3907 = vor.u32 %v3902, %v3906
    %v3909 = vshll.u32 %v3893, 16
    %v3911 = vrot.slane %v3909, 1
    %v3912 = vsel %vm202, %v3907, %v3911
    %v3913 = vshrl.u32 %v3893, 16
    %v3915 = vor.u32 %v3913, %v3911
    %v3917 = vshll.u32 %v3894, 16
    %v3919 = vrot.slane %v3917, 1
    %v3920 = vsel %vm202, %v3915, %v3919
    %v3921 = vshrl.u32 %v3894, 16
    %v3923 = vor.u32 %v3921, %v3919
    %v3925 = vshll.u32 %v3895, 16
    %v3927 = vrot.slane %v3925, 1
    %v3928 = vsel %vm202, %v3923, %v3927
    %v3929 = vshrl.u32 %v3895, 16
    %v3931 = vor.u32 %v3929, %v3927
    %v3933 = vshll.u32 %v3896, 16
    %v3935 = vrot.slane %v3933, 1
    %v3936 = vsel %vm202, %v3931, %v3935
    %v3937 = vshrl.u32 %v3896, 16
    %v3939 = vor.u32 %v3937, %v3935
    %v3941 = vshll.u32 %v3897, 16
    %v3943 = vrot.slane %v3941, 1
    %v3944 = vsel %vm202, %v3939, %v3943
    %v3945 = vshrl.u32 %v3897, 16
    %v3947 = vor.u32 %v3945, %v3943
    %v3949 = vshll.u32 %v3898, 16
    %v3951 = vrot.slane %v3949, 1
    %v3952 = vsel %vm202, %v3947, %v3951
    %v3953 = vshrl.u32 %v3898, 16
    %v3955 = vor.u32 %v3953, %v3951
    %v3957 = vshll.u32 %v3899, 16
    %v3959 = vrot.slane %v3957, 1
    %v3960 = vsel %vm202, %v3955, %v3959
    %v3961 = vshrl.u32 %v3899, 16
    %v3963 = vor.u32 %v3961, %v3959
    %v3965 = vshll.u32 %v3900, 16
    %v3967 = vrot.slane %v3965, 1
    %v3968 = vsel %vm202, %v3963, %v3967
    %v3993 = vunpack.c.l.b16 %v3842
    %v3994 = vunpack.c.l.b16 %v3843
    %v3995 = vunpack.c.l.b16 %v3844
    %v3996 = vunpack.c.l.b16 %v3845
    %v3997 = vunpack.c.l.b16 %v3846
    %v3998 = vunpack.c.l.b16 %v3847
    %v3999 = vunpack.c.l.b16 %v3848
    %v4000 = vunpack.c.l.b16 %v3849
    %v4001 = vunpack.c.l.b16 %v3850
    %v4002 = vunpack.c.l.b16 %v3851
    %v4003 = vunpack.c.l.b16 %v3852
    %v4004 = vunpack.c.l.b16 %v3853
    %v4005 = vunpack.c.l.b16 %v3854
    %v4006 = vunpack.c.l.b16 %v3855
    %v4007 = vunpack.c.l.b16 %v3856
    %v4008 = vunpack.c.l.b16 %v3857
    %v4009 = vpack.c.b16 %v3994, %v3993
    %v4010 = vpack.c.b16 %v3996, %v3995
    %v4011 = vpack.c.b16 %v3998, %v3997
    %v4012 = vpack.c.b16 %v4000, %v3999
    %v4013 = vpack.c.b16 %v4002, %v4001
    %v4014 = vpack.c.b16 %v4004, %v4003
    %v4015 = vpack.c.b16 %v4006, %v4005
    %v4016 = vpack.c.b16 %v4008, %v4007
    %4025 = vmatprep.subr.bf16.mxu0 0
    %4026 = vmatpush1.bf16.msra.mxu0 %v4016
    %4027 = vmatprep.subr.bf16.mxu0 0
    %4028 = vmatpush1.bf16.msra.mxu0 %v4015
    %4029 = vmatprep.subr.bf16.mxu0 0
    %4030 = vmatpush1.bf16.msra.mxu0 %v4014
    %4031 = vmatprep.subr.bf16.mxu0 0
    %4032 = vmatpush1.bf16.msra.mxu0 %v4013
    %4033 = vmatprep.subr.bf16.mxu0 0
    %4034 = vmatpush1.bf16.msra.mxu0 %v4012
    %4035 = vmatprep.subr.bf16.mxu0 0
    %4036 = vmatpush1.bf16.msra.mxu0 %v4011
    %4037 = vmatprep.subr.bf16.mxu0 0
    %4038 = vmatpush1.bf16.msra.mxu0 %v4010
    %4039 = vmatprep.subr.bf16.mxu0 0
    %4040 = vmatpush1.bf16.msra.mxu0 %v4009
    %4041 = vmatprep.subr.bf16.mxu0 0
    %4042 = vmatpush2.bf16.msra.mxu0 0
    %4043 = vmatprep.subr.bf16.mxu0 0
    %4044 = vmatpush2.bf16.msra.mxu0 0
    %4045 = vmatprep.subr.bf16.mxu0 0
    %4046 = vmatpush2.bf16.msra.mxu0 0
    %4047 = vmatprep.subr.bf16.mxu0 0
    %4048 = vmatpush2.bf16.msra.mxu0 0
    %4049 = vmatprep.subr.bf16.mxu0 0
    %4050 = vmatpush2.bf16.msra.mxu0 0
    %4051 = vmatprep.subr.bf16.mxu0 0
    %4052 = vmatpush2.bf16.msra.mxu0 0
    %4053 = vmatprep.subr.bf16.mxu0 0
    %4054 = vmatpush2.bf16.msra.mxu0 0
    %4055 = vmatprep.subr.bf16.mxu0 0
    %4056 = vmatpush2.bf16.msra.mxu0 0
    %4057 = vmatprep.mubr.bf16.mxu0 0
    %4058 = vmatmul.mubr.bf16.gmra.mxu0 %v3912
    %v4059 = vpop.f32.mrf.mxu0
    %v4060 = vadd.f32 0.0, %v4059
    %v4061 = vpop.f32.mrf.mxu0
    %v4062 = vpop.f32.mrf.mxu0
    %v4063 = vadd.f32 0.0, %v4062
    %v4064 = vpop.f32.mrf.mxu0
    %4065 = vmatprep.mubr.bf16.mxu0 0
    %4066 = vmatmul.mubr.bf16.gmra.mxu0 %v3920
    %v4067 = vpop.f32.mrf.mxu0
    %v4068 = vadd.f32 0.0, %v4067
    %v4069 = vpop.f32.mrf.mxu0
    %v4070 = vpop.f32.mrf.mxu0
    %v4071 = vadd.f32 0.0, %v4070
    %v4072 = vpop.f32.mrf.mxu0
    %4073 = vmatprep.mubr.bf16.mxu0 0
    %4074 = vmatmul.mubr.bf16.gmra.mxu0 %v3928
    %v4075 = vpop.f32.mrf.mxu0
    %v4076 = vadd.f32 0.0, %v4075
    %v4077 = vpop.f32.mrf.mxu0
    %v4078 = vpop.f32.mrf.mxu0
    %v4079 = vadd.f32 0.0, %v4078
    %v4080 = vpop.f32.mrf.mxu0
    %4081 = vmatprep.mubr.bf16.mxu0 0
    %4082 = vmatmul.mubr.bf16.gmra.mxu0 %v3936
    %v4083 = vpop.f32.mrf.mxu0
    %v4084 = vadd.f32 0.0, %v4083
    %v4085 = vpop.f32.mrf.mxu0
    %v4086 = vpop.f32.mrf.mxu0
    %v4087 = vadd.f32 0.0, %v4086
    %v4088 = vpop.f32.mrf.mxu0
    %4089 = vmatprep.mubr.bf16.mxu0 0
    %4090 = vmatmul.mubr.bf16.gmra.mxu0 %v3944
    %v4091 = vpop.f32.mrf.mxu0
    %v4092 = vadd.f32 0.0, %v4091
    %v4093 = vpop.f32.mrf.mxu0
    %v4094 = vpop.f32.mrf.mxu0
    %v4095 = vadd.f32 0.0, %v4094
    %v4096 = vpop.f32.mrf.mxu0
    %4097 = vmatprep.mubr.bf16.mxu0 0
    %4098 = vmatmul.mubr.bf16.gmra.mxu0 %v3952
    %v4099 = vpop.f32.mrf.mxu0
    %v4100 = vadd.f32 0.0, %v4099
    %v4101 = vpop.f32.mrf.mxu0
    %v4102 = vpop.f32.mrf.mxu0
    %v4103 = vadd.f32 0.0, %v4102
    %v4104 = vpop.f32.mrf.mxu0
    %4105 = vmatprep.mubr.bf16.mxu0 0
    %4106 = vmatmul.mubr.bf16.gmra.mxu0 %v3960
    %v4107 = vpop.f32.mrf.mxu0
    %v4108 = vadd.f32 0.0, %v4107
    %v4109 = vpop.f32.mrf.mxu0
    %v4110 = vpop.f32.mrf.mxu0
    %v4111 = vadd.f32 0.0, %v4110
    %v4112 = vpop.f32.mrf.mxu0
    %4113 = vmatprep.mubr.bf16.mxu0 0
    %4114 = vmatmul.mubr.bf16.gmra.mxu0 %v3968
    %v4115 = vpop.f32.mrf.mxu0
    %v4116 = vadd.f32 0.0, %v4115
    %v4117 = vpop.f32.mrf.mxu0
    %v4118 = vpop.f32.mrf.mxu0
    %v4119 = vadd.f32 0.0, %v4118
    %v4120 = vpop.f32.mrf.mxu0
    %4121 = vdwg.mxu0
    %v4123 = vunpack.c.l.b16 %v3806
    %v4124 = vpack.c.b16 %v2994, %v2993
    %v4125 = vpack.c.b16 %v2996, %v2995
    %v4126 = vpack.c.b16 %v2998, %v2997
    %v4127 = vpack.c.b16 %v3000, %v2999
    %v4128 = vpack.c.b16 %v3002, %v3001
    %v4129 = vpack.c.b16 %v3004, %v3003
    %v4130 = vpack.c.b16 %v3006, %v3005
    %v4131 = vpack.c.b16 %v4123, %v3007
    %v4156 = vunpack.c.l.b16 %v3808
    %v4157 = vunpack.c.l.b16 %v3809
    %v4158 = vunpack.c.l.b16 %v3810
    %v4159 = vunpack.c.l.b16 %v3811
    %v4160 = vunpack.c.l.b16 %v3812
    %v4161 = vunpack.c.l.b16 %v3813
    %v4162 = vunpack.c.l.b16 %v3814
    %v4163 = vunpack.c.l.b16 %v3815
    %v4164 = vunpack.c.l.b16 %v3816
    %v4165 = vunpack.c.l.b16 %v3817
    %v4166 = vunpack.c.l.b16 %v3818
    %v4167 = vunpack.c.l.b16 %v3819
    %v4168 = vunpack.c.l.b16 %v3820
    %v4169 = vunpack.c.l.b16 %v3821
    %v4170 = vunpack.c.l.b16 %v3822
    %v4171 = vunpack.c.l.b16 %v3823
    %v4172 = vpack.c.b16 %v4157, %v4156
    %v4173 = vpack.c.b16 %v4159, %v4158
    %v4174 = vpack.c.b16 %v4161, %v4160
    %v4175 = vpack.c.b16 %v4163, %v4162
    %v4176 = vpack.c.b16 %v4165, %v4164
    %v4177 = vpack.c.b16 %v4167, %v4166
    %v4178 = vpack.c.b16 %v4169, %v4168
    %v4179 = vpack.c.b16 %v4171, %v4170
    %4188 = vmatprep.subr.bf16.mxu0 0
    %4189 = vmatpush1.bf16.msra.mxu0 %v4179
    %4190 = vmatprep.subr.bf16.mxu0 0
    %4191 = vmatpush1.bf16.msra.mxu0 %v4178
    %4192 = vmatprep.subr.bf16.mxu0 0
    %4193 = vmatpush1.bf16.msra.mxu0 %v4177
    %4194 = vmatprep.subr.bf16.mxu0 0
    %4195 = vmatpush1.bf16.msra.mxu0 %v4176
    %4196 = vmatprep.subr.bf16.mxu0 0
    %4197 = vmatpush1.bf16.msra.mxu0 %v4175
    %4198 = vmatprep.subr.bf16.mxu0 0
    %4199 = vmatpush1.bf16.msra.mxu0 %v4174
    %4200 = vmatprep.subr.bf16.mxu0 0
    %4201 = vmatpush1.bf16.msra.mxu0 %v4173
    %4202 = vmatprep.subr.bf16.mxu0 0
    %4203 = vmatpush1.bf16.msra.mxu0 %v4172
    %4204 = vmatprep.subr.bf16.mxu0 0
    %4205 = vmatpush2.bf16.msra.mxu0 0
    %4206 = vmatprep.subr.bf16.mxu0 0
    %4207 = vmatpush2.bf16.msra.mxu0 0
    %4208 = vmatprep.subr.bf16.mxu0 0
    %4209 = vmatpush2.bf16.msra.mxu0 0
    %4210 = vmatprep.subr.bf16.mxu0 0
    %4211 = vmatpush2.bf16.msra.mxu0 0
    %4212 = vmatprep.subr.bf16.mxu0 0
    %4213 = vmatpush2.bf16.msra.mxu0 0
    %4214 = vmatprep.subr.bf16.mxu0 0
    %4215 = vmatpush2.bf16.msra.mxu0 0
    %4216 = vmatprep.subr.bf16.mxu0 0
    %4217 = vmatpush2.bf16.msra.mxu0 0
    %4218 = vmatprep.subr.bf16.mxu0 0
    %4219 = vmatpush2.bf16.msra.mxu0 0
    %4220 = vmatprep.mubr.bf16.mxu0 0
    %4221 = vmatmul.mubr.bf16.gmra.mxu0 %v4124
    %v4222 = vpop.f32.mrf.mxu0
    %v4223 = vadd.f32 %v4060, %v4222
    %v4224 = vpop.f32.mrf.mxu0
    %v4225 = vpop.f32.mrf.mxu0
    %v4226 = vadd.f32 %v4063, %v4225
    %v4227 = vpop.f32.mrf.mxu0
    %4228 = vmatprep.mubr.bf16.mxu0 0
    %4229 = vmatmul.mubr.bf16.gmra.mxu0 %v4125
    %v4230 = vpop.f32.mrf.mxu0
    %v4231 = vadd.f32 %v4068, %v4230
    %v4232 = vpop.f32.mrf.mxu0
    %v4233 = vpop.f32.mrf.mxu0
    %v4234 = vadd.f32 %v4071, %v4233
    %v4235 = vpop.f32.mrf.mxu0
    %4236 = vmatprep.mubr.bf16.mxu0 0
    %4237 = vmatmul.mubr.bf16.gmra.mxu0 %v4126
    %v4238 = vpop.f32.mrf.mxu0
    %v4239 = vadd.f32 %v4076, %v4238
    %v4240 = vpop.f32.mrf.mxu0
    %v4241 = vpop.f32.mrf.mxu0
    %v4242 = vadd.f32 %v4079, %v4241
    %v4243 = vpop.f32.mrf.mxu0
    %4244 = vmatprep.mubr.bf16.mxu0 0
    %4245 = vmatmul.mubr.bf16.gmra.mxu0 %v4127
    %v4246 = vpop.f32.mrf.mxu0
    %v4247 = vadd.f32 %v4084, %v4246
    %v4248 = vpop.f32.mrf.mxu0
    %v4249 = vpop.f32.mrf.mxu0
    %v4250 = vadd.f32 %v4087, %v4249
    %v4251 = vpop.f32.mrf.mxu0
    %4252 = vmatprep.mubr.bf16.mxu0 0
    %4253 = vmatmul.mubr.bf16.gmra.mxu0 %v4128
    %v4254 = vpop.f32.mrf.mxu0
    %v4255 = vadd.f32 %v4092, %v4254
    %v4256 = vpop.f32.mrf.mxu0
    %v4257 = vpop.f32.mrf.mxu0
    %v4258 = vadd.f32 %v4095, %v4257
    %v4259 = vpop.f32.mrf.mxu0
    %4260 = vmatprep.mubr.bf16.mxu0 0
    %4261 = vmatmul.mubr.bf16.gmra.mxu0 %v4129
    %v4262 = vpop.f32.mrf.mxu0
    %v4263 = vadd.f32 %v4100, %v4262
    %v4264 = vpop.f32.mrf.mxu0
    %v4265 = vpop.f32.mrf.mxu0
    %v4266 = vadd.f32 %v4103, %v4265
    %v4267 = vpop.f32.mrf.mxu0
    %4268 = vmatprep.mubr.bf16.mxu0 0
    %4269 = vmatmul.mubr.bf16.gmra.mxu0 %v4130
    %v4270 = vpop.f32.mrf.mxu0
    %v4271 = vadd.f32 %v4108, %v4270
    %v4272 = vpop.f32.mrf.mxu0
    %v4273 = vpop.f32.mrf.mxu0
    %v4274 = vadd.f32 %v4111, %v4273
    %v4275 = vpop.f32.mrf.mxu0
    %4276 = vmatprep.mubr.bf16.mxu0 0
    %4277 = vmatmul.mubr.bf16.gmra.mxu0 %v4131
    %v4278 = vpop.f32.mrf.mxu0
    %v4279 = vadd.f32 %v4116, %v4278
    %v4280 = vpop.f32.mrf.mxu0
    %v4281 = vpop.f32.mrf.mxu0
    %v4282 = vadd.f32 %v4119, %v4281
    %v4283 = vpop.f32.mrf.mxu0
    %4284 = vdwg.mxu0
    %v4285 = vadd.f32 %v3744, %v4223
    %v4286 = vadd.f32 %v3747, %v4226
    %v4287 = vadd.f32 %v3752, %v4231
    %v4288 = vadd.f32 %v3755, %v4234
    %v4289 = vadd.f32 %v3760, %v4239
    %v4290 = vadd.f32 %v3763, %v4242
    %v4291 = vadd.f32 %v3768, %v4247
    %v4292 = vadd.f32 %v3771, %v4250
    %v4293 = vadd.f32 %v3776, %v4255
    %v4294 = vadd.f32 %v3779, %v4258
    %v4295 = vadd.f32 %v3784, %v4263
    %v4296 = vadd.f32 %v3787, %v4266
    %v4297 = vadd.f32 %v3792, %v4271
    %v4298 = vadd.f32 %v3795, %v4274
    %v4299 = vadd.f32 %v3800, %v4279
    %v4300 = vadd.f32 %v3803, %v4282
    %v4301 = vadd.f32 %v3330, %v4285
    %v4302 = vadd.f32 %v3333, %v4286
    %v4303 = vadd.f32 %v3338, %v4287
    %v4304 = vadd.f32 %v3341, %v4288
    %v4305 = vadd.f32 %v3346, %v4289
    %v4306 = vadd.f32 %v3349, %v4290
    %v4307 = vadd.f32 %v3354, %v4291
    %v4308 = vadd.f32 %v3357, %v4292
    %v4309 = vadd.f32 %v3362, %v4293
    %v4310 = vadd.f32 %v3365, %v4294
    %v4311 = vadd.f32 %v3370, %v4295
    %v4312 = vadd.f32 %v3373, %v4296
    %v4313 = vadd.f32 %v3378, %v4297
    %v4314 = vadd.f32 %v3381, %v4298
    %v4315 = vadd.f32 %v3386, %v4299
    %v4316 = vadd.f32 %v3389, %v4300
    %v4317 = vld [vmem:[%s6] sm:$0x1]
    %v4319 = vlaneseq
    %v4320 = vshrl.u32 %v4319, 7
    %v4321 = vsub.s32 0, %v4320
    %v4322 = vrot.slane %v4317, %v4321
    %v4324 = vadd.f32 %v4301, %v4322
    %v4325 = vadd.f32 %v4302, %v4322
    %v4326 = vadd.f32 %v4303, %v4322
    %v4327 = vadd.f32 %v4304, %v4322
    %v4328 = vadd.f32 %v4305, %v4322
    %v4329 = vadd.f32 %v4306, %v4322
    %v4330 = vadd.f32 %v4307, %v4322
    %v4331 = vadd.f32 %v4308, %v4322
    %v4332 = vadd.f32 %v4309, %v4322
    %v4333 = vadd.f32 %v4310, %v4322
    %v4334 = vadd.f32 %v4311, %v4322
    %v4335 = vadd.f32 %v4312, %v4322
    %v4336 = vadd.f32 %v4313, %v4322
    %v4337 = vadd.f32 %v4314, %v4322
    %v4338 = vadd.f32 %v4315, %v4322
    %v4339 = vadd.f32 %v4316, %v4322
    %v4340 = vmax.f32 %v4324, 0.0
    %v4341 = vmax.f32 %v4325, 0.0
    %v4342 = vmax.f32 %v4326, 0.0
    %v4343 = vmax.f32 %v4327, 0.0
    %v4344 = vmax.f32 %v4328, 0.0
    %v4345 = vmax.f32 %v4329, 0.0
    %v4346 = vmax.f32 %v4330, 0.0
    %v4347 = vmax.f32 %v4331, 0.0
    %v4348 = vmax.f32 %v4332, 0.0
    %v4349 = vmax.f32 %v4333, 0.0
    %v4350 = vmax.f32 %v4334, 0.0
    %v4351 = vmax.f32 %v4335, 0.0
    %v4352 = vmax.f32 %v4336, 0.0
    %v4353 = vmax.f32 %v4337, 0.0
    %v4354 = vmax.f32 %v4338, 0.0
    %v4355 = vmax.f32 %v4339, 0.0
    %v4356 = vpack.c.bf16 %v4341, %v4340
    %v4357 = vpack.c.bf16 %v4343, %v4342
    %v4358 = vpack.c.bf16 %v4345, %v4344
    %v4359 = vpack.c.bf16 %v4347, %v4346
    %v4360 = vpack.c.bf16 %v4349, %v4348
    %v4361 = vpack.c.bf16 %v4351, %v4350
    %v4362 = vpack.c.bf16 %v4353, %v4352
    %v4363 = vpack.c.bf16 %v4355, %v4354
    %v4372 = vunpack.c.l.b16 %v4356
    %v4373 = vunpack.c.h.b16 %v4356
    %v4374 = vunpack.c.l.b16 %v4357
    %v4375 = vunpack.c.h.b16 %v4357
    %v4376 = vunpack.c.l.b16 %v4358
    %v4377 = vunpack.c.h.b16 %v4358
    %v4378 = vunpack.c.l.b16 %v4359
    %v4379 = vunpack.c.h.b16 %v4359
    %v4380 = vunpack.c.l.b16 %v4360
    %v4381 = vunpack.c.h.b16 %v4360
    %v4382 = vunpack.c.l.b16 %v4361
    %v4383 = vunpack.c.h.b16 %v4361
    %v4384 = vunpack.c.l.b16 %v4362
    %v4385 = vunpack.c.h.b16 %v4362
    %v4386 = vunpack.c.l.b16 %v4363
    %v4387 = vunpack.c.h.b16 %v4363
    %v4388 = vpack.c.b16 %v4372, %v4372
    %v4389 = vpack.c.b16 %v4373, %v4373
    %v4390 = vpack.c.b16 %v4374, %v4374
    %v4391 = vpack.c.b16 %v4375, %v4375
    %v4392 = vpack.c.b16 %v4376, %v4376
    %v4393 = vpack.c.b16 %v4377, %v4377
    %v4394 = vpack.c.b16 %v4378, %v4378
    %v4395 = vpack.c.b16 %v4379, %v4379
    %v4396 = vpack.c.b16 %v4380, %v4380
    %v4397 = vpack.c.b16 %v4381, %v4381
    %v4398 = vpack.c.b16 %v4382, %v4382
    %v4399 = vpack.c.b16 %v4383, %v4383
    %v4400 = vpack.c.b16 %v4384, %v4384
    %v4401 = vpack.c.b16 %v4385, %v4385
    %v4402 = vpack.c.b16 %v4386, %v4386
    %v4403 = vpack.c.b16 %v4387, %v4387
    %4420 = vst [vmem:[#allocation3] sm:$0xf] %v4388
    %4421 = vst [vmem:[#allocation3 + $0x4] sm:$0xf] %v4389
    %4422 = vst [vmem:[#allocation3 + $0x8] sm:$0xf] %v4390
    %4423 = vst [vmem:[#allocation3 + $0xc] sm:$0xf] %v4391
    %4424 = vst [vmem:[#allocation3 + $0x10] sm:$0xf] %v4392
    %4425 = vst [vmem:[#allocation3 + $0x14] sm:$0xf] %v4393
    %4426 = vst [vmem:[#allocation3 + $0x18] sm:$0xf] %v4394
    %4427 = vst [vmem:[#allocation3 + $0x1c] sm:$0xf] %v4395
    %4428 = vst [vmem:[#allocation3 + $0x20] sm:$0xf] %v4396
    %4429 = vst [vmem:[#allocation3 + $0x24] sm:$0xf] %v4397
    %4430 = vst [vmem:[#allocation3 + $0x28] sm:$0xf] %v4398
    %4431 = vst [vmem:[#allocation3 + $0x2c] sm:$0xf] %v4399
    %4432 = vst [vmem:[#allocation3 + $0x30] sm:$0xf] %v4400
    %4433 = vst [vmem:[#allocation3 + $0x34] sm:$0xf] %v4401
    %4434 = vst [vmem:[#allocation3 + $0x38] sm:$0xf] %v4402
    %4435 = vst [vmem:[#allocation3 + $0x3c] sm:$0xf] %v4403
    %v4436 = vld [vmem:[#allocation3] sm:$0xf]
    %v4437 = vld [vmem:[#allocation3 + $0x4] sm:$0xf]
    %v4438 = vld [vmem:[#allocation3 + $0x8] sm:$0xf]
    %v4439 = vld [vmem:[#allocation3 + $0xc] sm:$0xf]
    %v4440 = vld [vmem:[#allocation3 + $0x10] sm:$0xf]
    %v4441 = vld [vmem:[#allocation3 + $0x20] sm:$0xf]
    %v4442 = vld [vmem:[#allocation3 + $0x24] sm:$0xf]
    %v4443 = vld [vmem:[#allocation3 + $0x28] sm:$0xf]
    %v4444 = vld [vmem:[#allocation3 + $0x2c] sm:$0xf]
    %v4445 = vld [vmem:[#allocation3 + $0x30] sm:$0xf]
    %v4446 = vld [vmem:[#allocation3] sm:$0xc]
    %v4447 = vld [vmem:[#allocation3 + $0x14] sm:$0xf]
    %v4448 = vld [vmem:[#allocation3 + $0x34] sm:$0xf]
    %vm4461 = vcmask 1041408
    %vm4462 = vcmask 1045508
    %vm4463 = vmor %vm4461, %vm4462
    %v4464 = vrot.slane %v4446, 6
    %v4465 = vrot.slane %v4464, 4
    %v4466 = vrot.slane %v4437, 6
    %v4467 = vsel %vm4463, %v4465, %v4466
    %v4468 = vrot.slane %v4466, 4
    %v4469 = vrot.slane %v4438, 6
    %v4470 = vsel %vm4463, %v4468, %v4469
    %v4471 = vrot.slane %v4469, 4
    %v4472 = vrot.slane %v4439, 6
    %v4473 = vsel %vm4463, %v4471, %v4472
    %v4474 = vrot.slane %v4472, 4
    %v4475 = vrot.slane %v4440, 6
    %v4476 = vsel %vm4463, %v4474, %v4475
    %v4477 = vrot.slane %v4475, 4
    %v4478 = vrot.slane %v4447, 6
    %v4479 = vsel %vm4463, %v4477, %v4478
    %v4480 = vrot.slane %v4441, 6
    %v4481 = vrot.slane %v4480, 4
    %v4482 = vrot.slane %v4442, 6
    %v4483 = vsel %vm4463, %v4481, %v4482
    %v4484 = vrot.slane %v4482, 4
    %v4485 = vrot.slane %v4443, 6
    %v4486 = vsel %vm4463, %v4484, %v4485
    %v4487 = vrot.slane %v4485, 4
    %v4488 = vrot.slane %v4444, 6
    %v4489 = vsel %vm4463, %v4487, %v4488
    %v4490 = vrot.slane %v4488, 4
    %v4491 = vrot.slane %v4445, 6
    %v4492 = vsel %vm4463, %v4490, %v4491
    %v4493 = vrot.slane %v4491, 4
    %v4494 = vrot.slane %v4448, 6
    %v4495 = vsel %vm4463, %v4493, %v4494
    %v4506 = vmax.bf16 %v4436, %v4467
    %v4507 = vmax.bf16 %v4437, %v4470
    %v4508 = vmax.bf16 %v4438, %v4473
    %v4509 = vmax.bf16 %v4439, %v4476
    %v4510 = vmax.bf16 %v4440, %v4479
    %v4511 = vmax.bf16 %v4441, %v4483
    %v4512 = vmax.bf16 %v4442, %v4486
    %v4513 = vmax.bf16 %v4443, %v4489
    %v4514 = vmax.bf16 %v4444, %v4492
    %v4515 = vmax.bf16 %v4445, %v4495
    %4526 = vrot.lane.b32.xlu0 %v4506, 96
    %v4527 = vpop.permute.xlu0 %4526
    %4528 = vrot.lane.b32.xlu0 %v4507, 96
    %v4529 = vpop.permute.xlu0 %4528
    %4530 = vrot.lane.b32.xlu0 %v4508, 96
    %v4531 = vpop.permute.xlu0 %4530
    %4532 = vrot.lane.b32.xlu0 %v4509, 96
    %v4533 = vpop.permute.xlu0 %4532
    %4534 = vrot.lane.b32.xlu0 %v4510, 96
    %v4535 = vpop.permute.xlu0 %4534
    %4536 = vrot.lane.b32.xlu0 %v4511, 96
    %v4537 = vpop.permute.xlu0 %4536
    %4538 = vrot.lane.b32.xlu0 %v4512, 96
    %v4539 = vpop.permute.xlu0 %4538
    %4540 = vrot.lane.b32.xlu0 %v4513, 96
    %v4541 = vpop.permute.xlu0 %4540
    %4542 = vrot.lane.b32.xlu0 %v4514, 96
    %v4543 = vpop.permute.xlu0 %4542
    %4544 = vrot.lane.b32.xlu0 %v4515, 96
    %v4545 = vpop.permute.xlu0 %4544
    %v4556 = vmax.bf16 %v4506, %v4527
    %v4557 = vmax.bf16 %v4507, %v4529
    %v4558 = vmax.bf16 %v4508, %v4531
    %v4559 = vmax.bf16 %v4509, %v4533
    %v4560 = vmax.bf16 %v4510, %v4535
    %v4561 = vmax.bf16 %v4511, %v4537
    %v4562 = vmax.bf16 %v4512, %v4539
    %v4563 = vmax.bf16 %v4513, %v4541
    %v4564 = vmax.bf16 %v4514, %v4543
    %v4565 = vmax.bf16 %v4515, %v4545
    %v4566 = vunpack.c.l.bf16 %v4556
    %v4567 = vunpack.c.l.bf16 %v4557
    %v4568 = vunpack.c.l.bf16 %v4558
    %v4569 = vunpack.c.l.bf16 %v4559
    %v4570 = vunpack.c.l.bf16 %v4560
    %v4571 = vunpack.c.l.bf16 %v4561
    %v4572 = vunpack.c.l.bf16 %v4562
    %v4573 = vunpack.c.l.bf16 %v4563
    %v4574 = vunpack.c.l.bf16 %v4564
    %v4575 = vunpack.c.l.bf16 %v4565
    %v4576 = vld [vmem:[%s7] sm:$0xff]
    %v4577 = vld [vmem:[%s7 + $0x8] sm:$0xff]
    %v4578 = vld [vmem:[%s7 + $0x10] sm:$0xff]
    %v4579 = vld [vmem:[%s7 + $0x18] sm:$0xff]
    %v4580 = vld [vmem:[%s7 + $0x20] sm:$0xff]
    %s4581 = scalar_lea.vmem %s7, 40
    %v4582 = vld [vmem:[%s4581] sm:$0xff]
    %v4583 = vld [vmem:[%s4581 + $0x8] sm:$0xff]
    %v4584 = vld [vmem:[%s4581 + $0x10] sm:$0xff]
    %v4585 = vld [vmem:[%s4581 + $0x18] sm:$0xff]
    %v4586 = vld [vmem:[%s4581 + $0x20] sm:$0xff]
    %v4587 = vmul.f32 %v4566, %v4576
    %v4588 = vmul.f32 %v4567, %v4577
    %v4589 = vmul.f32 %v4568, %v4578
    %v4590 = vmul.f32 %v4569, %v4579
    %v4591 = vmul.f32 %v4570, %v4580
    %vm4592 = vcmask 785408
    %v4593 = vsel %vm4592, %v4587, 0.0
    %4594 = vadd.xlane.f32.xlu0 %v4593
    %v4595 = vpop.xlane.xlu0 %4594
    %v4596 = vsel %vm4592, %v4588, 0.0
    %4597 = vadd.xlane.f32.xlu0 %v4596
    %v4598 = vpop.xlane.xlu0 %4597
    %v4599 = vsel %vm4592, %v4589, 0.0
    %4600 = vadd.xlane.f32.xlu0 %v4599
    %v4601 = vpop.xlane.xlu0 %4600
    %v4602 = vsel %vm4592, %v4590, 0.0
    %4603 = vadd.xlane.f32.xlu0 %v4602
    %v4604 = vpop.xlane.xlu0 %4603
    %v4605 = vsel %vm4592, %v4591, 0.0
    %4606 = vadd.xlane.f32.xlu0 %v4605
    %v4607 = vpop.xlane.xlu0 %4606
    %v4608 = vadd.f32 %v4595, %v4598
    %v4609 = vadd.f32 %v4608, %v4601
    %v4610 = vadd.f32 %v4609, %v4604
    %v4611 = vadd.f32 %v4610, %v4607
    %v4612 = vrot.slane %v4611, 4
    %v4613 = vadd.f32 %v4611, %v4612
    %v4614 = vrot.slane %v4613, 2
    %v4615 = vadd.f32 %v4613, %v4614
    %v4616 = vrot.slane %v4615, 1
    %v4617 = vadd.f32 %v4615, %v4616
    %v4618 = vmul.f32 %v4566, %v4582
    %v4619 = vmul.f32 %v4567, %v4583
    %v4620 = vmul.f32 %v4568, %v4584
    %v4621 = vmul.f32 %v4569, %v4585
    %v4622 = vmul.f32 %v4570, %v4586
    %v4623 = vsel %vm4592, %v4618, 0.0
    %4624 = vadd.xlane.f32.xlu0 %v4623
    %v4625 = vpop.xlane.xlu0 %4624
    %v4626 = vsel %vm4592, %v4619, 0.0
    %4627 = vadd.xlane.f32.xlu0 %v4626
    %v4628 = vpop.xlane.xlu0 %4627
    %v4629 = vsel %vm4592, %v4620, 0.0
    %4630 = vadd.xlane.f32.xlu0 %v4629
    %v4631 = vpop.xlane.xlu0 %4630
    %v4632 = vsel %vm4592, %v4621, 0.0
    %4633 = vadd.xlane.f32.xlu0 %v4632
    %v4634 = vpop.xlane.xlu0 %4633
    %v4635 = vsel %vm4592, %v4622, 0.0
    %4636 = vadd.xlane.f32.xlu0 %v4635
    %v4637 = vpop.xlane.xlu0 %4636
    %v4638 = vadd.f32 %v4625, %v4628
    %v4639 = vadd.f32 %v4638, %v4631
    %v4640 = vadd.f32 %v4639, %v4634
    %v4641 = vadd.f32 %v4640, %v4637
    %v4642 = vrot.slane %v4641, 4
    %v4643 = vadd.f32 %v4641, %v4642
    %v4644 = vrot.slane %v4643, 2
    %v4645 = vadd.f32 %v4643, %v4644
    %v4646 = vrot.slane %v4645, 1
    %v4647 = vadd.f32 %v4645, %v4646
    %vm4648 = vcmask 7168
    %v4649 = vsel %vm4648, %v4617, %v4647
    %v4650 = vmul.f32 %v4571, %v4576
    %v4651 = vmul.f32 %v4572, %v4577
    %v4652 = vmul.f32 %v4573, %v4578
    %v4653 = vmul.f32 %v4574, %v4579
    %v4654 = vmul.f32 %v4575, %v4580
    %v4655 = vsel %vm4592, %v4650, 0.0
    %4656 = vadd.xlane.f32.xlu0 %v4655
    %v4657 = vpop.xlane.xlu0 %4656
    %v4658 = vsel %vm4592, %v4651, 0.0
    %4659 = vadd.xlane.f32.xlu0 %v4658
    %v4660 = vpop.xlane.xlu0 %4659
    %v4661 = vsel %vm4592, %v4652, 0.0
    %4662 = vadd.xlane.f32.xlu0 %v4661
    %v4663 = vpop.xlane.xlu0 %4662
    %v4664 = vsel %vm4592, %v4653, 0.0
    %4665 = vadd.xlane.f32.xlu0 %v4664
    %v4666 = vpop.xlane.xlu0 %4665
    %v4667 = vsel %vm4592, %v4654, 0.0
    %4668 = vadd.xlane.f32.xlu0 %v4667
    %v4669 = vpop.xlane.xlu0 %4668
    %v4670 = vadd.f32 %v4657, %v4660
    %v4671 = vadd.f32 %v4670, %v4663
    %v4672 = vadd.f32 %v4671, %v4666
    %v4673 = vadd.f32 %v4672, %v4669
    %v4674 = vrot.slane %v4673, 4
    %v4675 = vadd.f32 %v4673, %v4674
    %v4676 = vrot.slane %v4675, 2
    %v4677 = vadd.f32 %v4675, %v4676
    %v4678 = vrot.slane %v4677, 1
    %v4679 = vadd.f32 %v4677, %v4678
    %v4680 = vmul.f32 %v4571, %v4582
    %v4681 = vmul.f32 %v4572, %v4583
    %v4682 = vmul.f32 %v4573, %v4584
    %v4683 = vmul.f32 %v4574, %v4585
    %v4684 = vmul.f32 %v4575, %v4586
    %v4685 = vsel %vm4592, %v4680, 0.0
    %4686 = vadd.xlane.f32.xlu0 %v4685
    %v4687 = vpop.xlane.xlu0 %4686
    %v4688 = vsel %vm4592, %v4681, 0.0
    %4689 = vadd.xlane.f32.xlu0 %v4688
    %v4690 = vpop.xlane.xlu0 %4689
    %v4691 = vsel %vm4592, %v4682, 0.0
    %4692 = vadd.xlane.f32.xlu0 %v4691
    %v4693 = vpop.xlane.xlu0 %4692
    %v4694 = vsel %vm4592, %v4683, 0.0
    %4695 = vadd.xlane.f32.xlu0 %v4694
    %v4696 = vpop.xlane.xlu0 %4695
    %v4697 = vsel %vm4592, %v4684, 0.0
    %4698 = vadd.xlane.f32.xlu0 %v4697
    %v4699 = vpop.xlane.xlu0 %4698
    %v4700 = vadd.f32 %v4687, %v4690
    %v4701 = vadd.f32 %v4700, %v4693
    %v4702 = vadd.f32 %v4701, %v4696
    %v4703 = vadd.f32 %v4702, %v4699
    %v4704 = vrot.slane %v4703, 4
    %v4705 = vadd.f32 %v4703, %v4704
    %v4706 = vrot.slane %v4705, 2
    %v4707 = vadd.f32 %v4705, %v4706
    %v4708 = vrot.slane %v4707, 1
    %v4709 = vadd.f32 %v4707, %v4708
    %v4710 = vsel %vm4648, %v4679, %v4709
    %v4712 = vrot.slane %v4710, 7
    %vm4714 = vcmask 1040384
    %v4715 = vsel %vm4714, %v4649, %v4712
    %v4716 = vld [vmem:[%s8] sm:$0x1]
    %v4718 = vlaneseq
    %v4719 = vshrl.u32 %v4718, 7
    %v4720 = vsub.s32 0, %v4719
    %v4721 = vrot.slane %v4716, %v4720
    %v4723 = vadd.f32 %v4715, %v4721
    %v4724 = vsub.f32 0.0, %v4723
    %v4725 = vmul.f32 %v4724, 1.442695
    %v4726 = vpow.pop %v4725
    %v4727 = vadd.f32 %v4726, 1.0
    %v4728 = vrcp.pop %v4727
    %v4729 = vmul.f32 1.0, %v4728
    %vm4730 = vcmask 9216
    %4731 = vst.msk [vmem:[#allocation5] sm:$0x3] %vm4730, %v4729
    // Predicated region
    $region38: #{cancer_model_forward.1} parent=1 // pred_check
      _
    $region39: #{cancer_model_forward.1} parent=1 // pred_check_branch
      %4733 = sbr.rel (0) target = $region41
    $region40: #{cancer_model_forward.1} parent=1 // pred_region
      %s4735 = ssub.s32 32, 32
      %4736 = vsyncadd [#allocation6], %s4735
      %s4738 = sshll.u32 [#allocation5], 4
      %s4739 = int_to_ptr.vmem [resolvable:$true] %s4738
      %4741 = dma.vmem_to_hbm [thread:$0]  %s4739, 32, %s9, [#allocation6]
    $region41: #{cancer_model_forward.1} parent=1 // pred_fallthru
      _
    // Predicated region
    $region42: #{cancer_model_forward.1} parent=1 // pred_check
      _
    $region43: #{cancer_model_forward.1} parent=1 // pred_check_branch
      %4743 = sbr.rel (0) target = $region45
    $region44: #{cancer_model_forward.1} parent=1 // pred_region
      %4744 = dma.done [#allocation6], 32
    $region45: #{cancer_model_forward.1} parent=1 // pred_fallthru
      _
    %4745 = vsyncpa [#allocation6], 1

</llo_original>
